<compile_context>
chip_gen: v6e
topology: v6e:2x2x1
jax: 0.10.0
libtpu: 0.0.40
codegen_flags: <defaults>
</compile_context>

<pallas_src>
import math
import jax
import jax.numpy as jnp
from jax import lax
from jax.experimental import pallas as pl
from jax.experimental.pallas import tpu as pltpu


def _gelu_exact(x):
    # nn.GELU() default is the exact erf formulation (done in f32).
    return 0.5 * x * (1.0 + lax.erf(x * (1.0 / math.sqrt(2.0))))


def mlp_kernel(x_ref, w1_ref, b1_ref, w2_ref, b2_ref, o_ref):
    x = x_ref[...]                                               # (tm, D) bf16
    # fc1 on the MXU (bf16 in, f32 accumulate), bias + GELU in f32.
    h = jnp.dot(x, w1_ref[...], preferred_element_type=jnp.float32)
    h = h + b1_ref[...]                                          # (tm, H) + (1, H)
    h = _gelu_exact(h)
    # Dropout p=0.0 is identity (eval semantics); nothing to do.
    # fc2 on the MXU (cast hidden back to compute dtype), f32 accumulate.
    y = jnp.dot(h.astype(w2_ref.dtype), w2_ref[...],
                preferred_element_type=jnp.float32)
    y = y + b2_ref[...]                                          # (tm, Do) + (1, Do)
    o_ref[...] = y.astype(o_ref.dtype)


def _build_mlp_call(Tp, D, H, Do, out_dtype, compute_dtype, tm,
                    single_buffer_weights, vmem_limit_bytes):
    nt = Tp // tm

    def const_spec(shape):
        # Weights/biases are grid-invariant (index_map always (0,0)); a second
        # pipeline buffer is pure VMEM waste, so request single buffering.
        if single_buffer_weights:
            return pl.BlockSpec(shape, lambda i: (0, 0),
                                pipeline_mode=pl.Buffered(1))
        return pl.BlockSpec(shape, lambda i: (0, 0))

    cbytes = jnp.dtype(compute_dtype).itemsize
    obytes = jnp.dtype(out_dtype).itemsize
    cost = pl.CostEstimate(
        flops=2 * Tp * D * H + 2 * Tp * H * Do,
        transcendentals=Tp * H,                       # erf in the GELU
        bytes_accessed=int((Tp * D + D * H + H * Do) * cbytes
                           + (H + Do) * 4
                           + Tp * Do * obytes),
    )

    return pl.pallas_call(
        mlp_kernel,
        out_shape=jax.ShapeDtypeStruct((Tp, Do), out_dtype),
        grid_spec=pltpu.PrefetchScalarGridSpec(
            num_scalar_prefetch=0,
            grid=(nt,),
            in_specs=[
                pl.BlockSpec((tm, D), lambda i: (i, 0)),   # x tile (pipelined)
                const_spec((D, H)),                        # W1 (resident)
                const_spec((1, H)),                        # b1
                const_spec((H, Do)),                       # W2 (resident)
                const_spec((1, Do)),                       # b2
            ],
            out_specs=pl.BlockSpec((tm, Do), lambda i: (i, 0)),
        ),
        compiler_params=pltpu.CompilerParams(
            dimension_semantics=("parallel",),            # megacore-shardable
            vmem_limit_bytes=vmem_limit_bytes),
        cost_estimate=cost,
    )


def mlp_forward(x, w1, b1, w2, b2, *, tm=256, compute_dtype=jnp.bfloat16,
                single_buffer_weights=True, vmem_limit_bytes=64 * 1024 * 1024):
    """x: (B, N, D); w1: (D, H); b1: (H,); w2: (H, Do); b2: (Do,).

    Weights are stored transposed relative to PyTorch nn.Linear so the kernel
    does plain x @ W. tm is the token tile (sweepable; 128-256 recommended).
    """
    B, N, D = x.shape
    H = w1.shape[1]
    Do = w2.shape[1]
    T = B * N
    nt = pl.cdiv(T, tm)
    Tp = nt * tm

    x2 = x.reshape(T, D)
    if Tp != T:                                   # pad tokens (e.g. N = 197)
        x2 = jnp.pad(x2, ((0, Tp - T), (0, 0)))

    # bf16 for the MXU hot path; f32 biases (added post-accumulation).
    x2c = x2.astype(compute_dtype)
    w1c = w1.astype(compute_dtype)
    w2c = w2.astype(compute_dtype)
    b1_2 = b1.reshape(1, H).astype(jnp.float32)
    b2_2 = b2.reshape(1, Do).astype(jnp.float32)

    call = _build_mlp_call(Tp, D, H, Do, x.dtype, compute_dtype, tm,
                           single_buffer_weights, vmem_limit_bytes)
    out2 = call(x2c, w1c, b1_2, w2c, b2_2)
    return out2[:T].reshape(B, N, Do)


def reference_mlp(x, w1, b1, w2, b2):
    h = jnp.einsum("bnd,dh->bnh", x, w1) + b1
    h = 0.5 * h * (1.0 + lax.erf(h / jnp.sqrt(2.0)))
    y = jnp.einsum("bnh,ho->bno", h, w2) + b2
    return y


if __name__ == "__main__":
    # Small but ViT-realistic shapes: 197 tokens (class token + 14x14 patches),
    # so T = 394 is NOT a multiple of the token tile and padding is exercised.
    B, N = 2, 197
    in_features = 128
    hidden_features = 512          # mlp_ratio = 4
    out_features = in_features

    key = jax.random.PRNGKey(0)
    kx, k1, k2, k3, k4 = jax.random.split(key, 5)

    x = jax.random.normal(kx, (B, N, in_features), dtype=jnp.float32)

    # Deterministic parameter init (synthetic; mimics nn.Linear uniform bounds).
    lim1 = 1.0 / math.sqrt(in_features)
    lim2 = 1.0 / math.sqrt(hidden_features)
    w1 = jax.random.uniform(k1, (in_features, hidden_features),
                            minval=-lim1, maxval=lim1, dtype=jnp.float32)
    b1 = jax.random.uniform(k2, (hidden_features,),
                            minval=-lim1, maxval=lim1, dtype=jnp.float32)
    w2 = jax.random.uniform(k3, (hidden_features, out_features),
                            minval=-lim2, maxval=lim2, dtype=jnp.float32)
    b2 = jax.random.uniform(k4, (out_features,),
                            minval=-lim2, maxval=lim2, dtype=jnp.float32)

    def run(single_buffer):
        y = mlp_forward(x, w1, b1, w2, b2, tm=256,
                        single_buffer_weights=single_buffer)
        return jax.block_until_ready(y)

    try:
        y = run(True)          # preferred: single-buffered resident weights
    except Exception:
        y = run(False)         # fallback: default (double) buffering

    y_ref = reference_mlp(x, w1, b1, w2, b2)
    assert y.shape == (B, N, out_features)
    # bf16 MXU inputs with f32 accumulation -> loosened tolerance (intentional).
    assert jnp.allclose(y, y_ref, atol=3e-2, rtol=3e-2), "mismatch vs reference"

    print("KERNEL_OK")
</pallas_src>

<mosaic_0001>
module attributes {stable_mosaic.version = 11 : i64} {
  func.func @mlp_kernel(%arg0: i32, %arg1: memref<256x128xbf16, #tpu.memory_space<vmem>>, %arg2: memref<128x512xbf16, #tpu.memory_space<vmem>>, %arg3: memref<1x512xf32, #tpu.memory_space<vmem>>, %arg4: memref<512x128xbf16, #tpu.memory_space<vmem>>, %arg5: memref<1x128xf32, #tpu.memory_space<vmem>>, %arg6: memref<256x128xf32, #tpu.memory_space<vmem>>) attributes {dimension_semantics = [#tpu.dimension_semantics<parallel>], iteration_bounds = array<i64: 2>, scalar_prefetch = 0 : i64, scratch_operands = 0 : i64, tpu.core_type = #tpu.core_type<tc>, window_params = [{transform_indices = @transform_0, window_bounds = array<i64: 256, 128>}, {pipeline_mode = #tpu.pipeline_mode<synchronous>, transform_indices = @transform_1, window_bounds = array<i64: 128, 512>}, {pipeline_mode = #tpu.pipeline_mode<synchronous>, transform_indices = @transform_2, window_bounds = array<i64: 1, 512>}, {pipeline_mode = #tpu.pipeline_mode<synchronous>, transform_indices = @transform_3, window_bounds = array<i64: 512, 128>}, {pipeline_mode = #tpu.pipeline_mode<synchronous>, transform_indices = @transform_4, window_bounds = array<i64: 1, 128>}, {transform_indices = @transform_5, window_bounds = array<i64: 256, 128>}]} {
    %c0 = arith.constant 0 : index
    %c0_0 = arith.constant 0 : index
    %0 = vector.load %arg1[%c0, %c0_0] : memref<256x128xbf16, #tpu.memory_space<vmem>>, vector<256x128xbf16>
    %c0_1 = arith.constant 0 : index
    %c0_2 = arith.constant 0 : index
    %1 = vector.load %arg2[%c0_1, %c0_2] : memref<128x512xbf16, #tpu.memory_space<vmem>>, vector<128x512xbf16>
    %cst = arith.constant dense<0.000000e+00> : vector<256x512xf32>
    %2 = tpu.matmul %0, %1, %cst {dimension_numbers = #tpu.dot_dimension_numbers<[1], [0], [0], [1], [0, 0, 1, 1], [], []>} : vector<256x128xbf16>, vector<128x512xbf16>, vector<256x512xf32> -> vector<256x512xf32>
    %c0_3 = arith.constant 0 : index
    %c0_4 = arith.constant 0 : index
    %3 = vector.load %arg3[%c0_3, %c0_4] : memref<1x512xf32, #tpu.memory_space<vmem>>, vector<1x512xf32>
    %4 = vector.broadcast %3 : vector<1x512xf32> to vector<256x512xf32>
    %5 = arith.addf %2, %4 : vector<256x512xf32>
    %cst_5 = arith.constant 5.000000e-01 : f32
    %6 = vector.broadcast %cst_5 : f32 to vector<256x512xf32>
    %7 = arith.mulf %6, %5 : vector<256x512xf32>
    %cst_6 = arith.constant 0.707106769 : f32
    %8 = vector.broadcast %cst_6 : f32 to vector<256x512xf32>
    %9 = arith.mulf %5, %8 : vector<256x512xf32>
    %10 = math.erf %9 : vector<256x512xf32>
    %cst_7 = arith.constant 1.000000e+00 : f32
    %11 = vector.broadcast %cst_7 : f32 to vector<256x512xf32>
    %12 = arith.addf %11, %10 : vector<256x512xf32>
    %13 = arith.mulf %7, %12 : vector<256x512xf32>
    %14 = arith.truncf %13 : vector<256x512xf32> to vector<256x512xbf16>
    %c0_8 = arith.constant 0 : index
    %c0_9 = arith.constant 0 : index
    %15 = vector.load %arg4[%c0_8, %c0_9] : memref<512x128xbf16, #tpu.memory_space<vmem>>, vector<512x128xbf16>
    %cst_10 = arith.constant dense<0.000000e+00> : vector<256x128xf32>
    %16 = tpu.matmul %14, %15, %cst_10 {dimension_numbers = #tpu.dot_dimension_numbers<[1], [0], [0], [1], [0, 0, 1, 1], [], []>} : vector<256x512xbf16>, vector<512x128xbf16>, vector<256x128xf32> -> vector<256x128xf32>
    %c0_11 = arith.constant 0 : index
    %c0_12 = arith.constant 0 : index
    %17 = vector.load %arg5[%c0_11, %c0_12] : memref<1x128xf32, #tpu.memory_space<vmem>>, vector<1x128xf32>
    %18 = vector.broadcast %17 : vector<1x128xf32> to vector<256x128xf32>
    %19 = arith.addf %16, %18 : vector<256x128xf32>
    %c0_13 = arith.constant 0 : index
    %c0_14 = arith.constant 0 : index
    %20 = vector.load %arg6[%c0_13, %c0_14] : memref<256x128xf32, #tpu.memory_space<vmem>>, vector<256x128xf32>
    tpu.vector_store %arg6[%c0_13, %c0_14], %19 {strides = array<i32>} : memref<256x128xf32, #tpu.memory_space<vmem>>, vector<256x128xf32>,
    return
  }
  func.func @transform_0(%arg0: i32) -> (i32, i32) {
    %c0_i32 = arith.constant 0 : i32
    %c0_i32_0 = arith.constant 0 : i32
    return %arg0, %c0_i32 : i32, i32
  }
  func.func @transform_1(%arg0: i32) -> (i32, i32) {
    %c0_i32 = arith.constant 0 : i32
    %c0_i32_0 = arith.constant 0 : i32
    %c0_i32_1 = arith.constant 0 : i32
    return %c0_i32, %c0_i32_0 : i32, i32
  }
  func.func @transform_2(%arg0: i32) -> (i32, i32) {
    %c0_i32 = arith.constant 0 : i32
    %c0_i32_0 = arith.constant 0 : i32
    %c0_i32_1 = arith.constant 0 : i32
    return %c0_i32, %c0_i32_0 : i32, i32
  }
  func.func @transform_3(%arg0: i32) -> (i32, i32) {
    %c0_i32 = arith.constant 0 : i32
    %c0_i32_0 = arith.constant 0 : i32
    %c0_i32_1 = arith.constant 0 : i32
    return %c0_i32, %c0_i32_0 : i32, i32
  }
  func.func @transform_4(%arg0: i32) -> (i32, i32) {
    %c0_i32 = arith.constant 0 : i32
    %c0_i32_0 = arith.constant 0 : i32
    %c0_i32_1 = arith.constant 0 : i32
    return %c0_i32, %c0_i32_0 : i32, i32
  }
  func.func @transform_5(%arg0: i32) -> (i32, i32) {
    %c0_i32 = arith.constant 0 : i32
    %c0_i32_0 = arith.constant 0 : i32
    return %arg0, %c0_i32 : i32, i32
  }
}

module attributes {stable_mosaic.version = 11 : i64} {
  func.func @mlp_kernel(%arg0: i32, %arg1: memref<256x128xbf16, #tpu.memory_space<vmem>>, %arg2: memref<128x512xbf16, #tpu.memory_space<vmem>>, %arg3: memref<1x512xf32, #tpu.memory_space<vmem>>, %arg4: memref<512x128xbf16, #tpu.memory_space<vmem>>, %arg5: memref<1x128xf32, #tpu.memory_space<vmem>>, %arg6: memref<256x128xf32, #tpu.memory_space<vmem>>) attributes {dimension_semantics = [#tpu.dimension_semantics<parallel>], iteration_bounds = array<i64: 2>, scalar_prefetch = 0 : i64, scratch_operands = 0 : i64, tpu.core_type = #tpu.core_type<tc>, window_params = [{transform_indices = @transform_0, window_bounds = array<i64: 256, 128>}, {pipeline_mode = #tpu.pipeline_mode<synchronous>, transform_indices = @transform_1, window_bounds = array<i64: 128, 512>}, {pipeline_mode = #tpu.pipeline_mode<synchronous>, transform_indices = @transform_2, window_bounds = array<i64: 1, 512>}, {pipeline_mode = #tpu.pipeline_mode<synchronous>, transform_indices = @transform_3, window_bounds = array<i64: 512, 128>}, {pipeline_mode = #tpu.pipeline_mode<synchronous>, transform_indices = @transform_4, window_bounds = array<i64: 1, 128>}, {transform_indices = @transform_5, window_bounds = array<i64: 256, 128>}]} {
    %c0 = arith.constant 0 : index
    %c0_0 = arith.constant 0 : index
    %0 = vector.load %arg1[%c0, %c0_0] : memref<256x128xbf16, #tpu.memory_space<vmem>>, vector<256x128xbf16>
    %c0_1 = arith.constant 0 : index
    %c0_2 = arith.constant 0 : index
    %1 = vector.load %arg2[%c0_1, %c0_2] : memref<128x512xbf16, #tpu.memory_space<vmem>>, vector<128x512xbf16>
    %cst = arith.constant dense<0.000000e+00> : vector<256x512xf32>
    %2 = tpu.matmul %0, %1, %cst {dimension_numbers = #tpu.dot_dimension_numbers<[1], [0], [0], [1], [0, 0, 1, 1], [], []>} : vector<256x128xbf16>, vector<128x512xbf16>, vector<256x512xf32> -> vector<256x512xf32>
    %c0_3 = arith.constant 0 : index
    %c0_4 = arith.constant 0 : index
    %3 = vector.load %arg3[%c0_3, %c0_4] : memref<1x512xf32, #tpu.memory_space<vmem>>, vector<1x512xf32>
    %4 = vector.broadcast %3 : vector<1x512xf32> to vector<256x512xf32>
    %5 = arith.addf %2, %4 : vector<256x512xf32>
    %cst_5 = arith.constant 5.000000e-01 : f32
    %6 = vector.broadcast %cst_5 : f32 to vector<256x512xf32>
    %7 = arith.mulf %6, %5 : vector<256x512xf32>
    %cst_6 = arith.constant 0.707106769 : f32
    %8 = vector.broadcast %cst_6 : f32 to vector<256x512xf32>
    %9 = arith.mulf %5, %8 : vector<256x512xf32>
    %10 = math.erf %9 : vector<256x512xf32>
    %cst_7 = arith.constant 1.000000e+00 : f32
    %11 = vector.broadcast %cst_7 : f32 to vector<256x512xf32>
    %12 = arith.addf %11, %10 : vector<256x512xf32>
    %13 = arith.mulf %7, %12 : vector<256x512xf32>
    %14 = arith.truncf %13 : vector<256x512xf32> to vector<256x512xbf16>
    %c0_8 = arith.constant 0 : index
    %c0_9 = arith.constant 0 : index
    %15 = vector.load %arg4[%c0_8, %c0_9] : memref<512x128xbf16, #tpu.memory_space<vmem>>, vector<512x128xbf16>
    %cst_10 = arith.constant dense<0.000000e+00> : vector<256x128xf32>
    %16 = tpu.matmul %14, %15, %cst_10 {dimension_numbers = #tpu.dot_dimension_numbers<[1], [0], [0], [1], [0, 0, 1, 1], [], []>} : vector<256x512xbf16>, vector<512x128xbf16>, vector<256x128xf32> -> vector<256x128xf32>
    %c0_11 = arith.constant 0 : index
    %c0_12 = arith.constant 0 : index
    %17 = vector.load %arg5[%c0_11, %c0_12] : memref<1x128xf32, #tpu.memory_space<vmem>>, vector<1x128xf32>
    %18 = vector.broadcast %17 : vector<1x128xf32> to vector<256x128xf32>
    %19 = arith.addf %16, %18 : vector<256x128xf32>
    %c0_13 = arith.constant 0 : index
    %c0_14 = arith.constant 0 : index
    %20 = vector.load %arg6[%c0_13, %c0_14] : memref<256x128xf32, #tpu.memory_space<vmem>>, vector<256x128xf32>
    tpu.vector_store %arg6[%c0_13, %c0_14], %19 {strides = array<i32>} : memref<256x128xf32, #tpu.memory_space<vmem>>, vector<256x128xf32>,
    return
  }
  func.func @transform_0(%arg0: i32) -> (i32, i32) {
    %c0_i32 = arith.constant 0 : i32
    %c0_i32_0 = arith.constant 0 : i32
    return %arg0, %c0_i32 : i32, i32
  }
  func.func @transform_1(%arg0: i32) -> (i32, i32) {
    %c0_i32 = arith.constant 0 : i32
    %c0_i32_0 = arith.constant 0 : i32
    %c0_i32_1 = arith.constant 0 : i32
    return %c0_i32, %c0_i32_0 : i32, i32
  }
  func.func @transform_2(%arg0: i32) -> (i32, i32) {
    %c0_i32 = arith.constant 0 : i32
    %c0_i32_0 = arith.constant 0 : i32
    %c0_i32_1 = arith.constant 0 : i32
    return %c0_i32, %c0_i32_0 : i32, i32
  }
  func.func @transform_3(%arg0: i32) -> (i32, i32) {
    %c0_i32 = arith.constant 0 : i32
    %c0_i32_0 = arith.constant 0 : i32
    %c0_i32_1 = arith.constant 0 : i32
    return %c0_i32, %c0_i32_0 : i32, i32
  }
  func.func @transform_4(%arg0: i32) -> (i32, i32) {
    %c0_i32 = arith.constant 0 : i32
    %c0_i32_0 = arith.constant 0 : i32
    %c0_i32_1 = arith.constant 0 : i32
    return %c0_i32, %c0_i32_0 : i32, i32
  }
  func.func @transform_5(%arg0: i32) -> (i32, i32) {
    %c0_i32 = arith.constant 0 : i32
    %c0_i32_0 = arith.constant 0 : i32
    return %arg0, %c0_i32 : i32, i32
  }
}

</mosaic_0001>

<llo_original>
// kernel: tpu_custom_call.1
$region0: #{tpu_custom_call.1}
  #allocation0 [shape = 'u32[]', space=smem, size = 0x4, offset = 0x4, fixed_abs, tag = 'smem constant byte address 0x4 - core index']
  #allocation1 [shape = 'u32[144,128]{1,0:T(1,128)}', space=vmem, size = 0x12000, scoped, tag = 'internal scratch']
  %s0 = inlined_call_operand.hbm [shape: bf16[512,128], index: 0, kind: input, shape index: {}]
  %s1 = inlined_call_operand.hbm [shape: bf16[128,512], index: 1, kind: input, shape index: {}]
  %s2 = inlined_call_operand.hbm [shape: f32[1,512], index: 2, kind: input, shape index: {}]
  %s3 = inlined_call_operand.hbm [shape: bf16[512,128], index: 3, kind: input, shape index: {}]
  %s4 = inlined_call_operand.vmem [shape: f32[1,128], index: 4, kind: input, shape index: {}]
  %s5 = inlined_call_operand.hbm [shape: f32[512,128], index: 5, kind: output, shape index: {}]
  %s6 = sld [smem:[#allocation0]]
  $region69: #{tpu_custom_call.1} parent=0
    _
  %s8 = ssub.s32 1, %s6
  %s9 = scalar_select 0, %s8, %s6
  $region1: #{tpu_custom_call.1} parent=0
    #allocation2 [shape = 'u8[131072]{0}', space=vmem, size = 0x20000, scoped, tag = 'input window, operand 0']
    #allocation3 [shape = 's32[2]{0}', space=sflag, size = 0x8, scoped, tag = 'scoped memory for tpu_custom_call.1']
    #allocation4 [shape = 's32[2]{0}', space=sflag, size = 0x8, scoped, tag = 'scoped memory for tpu_custom_call.1']
    #allocation5 [shape = 'u8[131072]{0}', space=vmem, size = 0x20000, scoped, tag = 'input window, operand 1, single buffered']
    #allocation6 [shape = 's32[1]{0}', space=sflag, size = 0x4, scoped, tag = 'scoped memory for tpu_custom_call.1']
    #allocation7 [shape = 'u8[2048]{0}', space=vmem, size = 0x800, scoped, tag = 'input window, operand 2, single buffered']
    #allocation8 [shape = 'u8[131072]{0}', space=vmem, size = 0x20000, scoped, tag = 'input window, operand 3, single buffered']
    #allocation9 [shape = 's32[1]{0}', space=sflag, size = 0x4, scoped, tag = 'scoped memory for tpu_custom_call.1']
    #allocation10 [shape = 'u8[262144]{0}', space=vmem, size = 0x40000, scoped, tag = 'output window, operand 0']
    %10 = vsyncpa [#allocation3], 0
    %s11 = scalar_lea.sflag [#allocation3], 1
    %12 = vsyncpa %s11, 0
    %13 = vsyncpa [#allocation6], 0
    %14 = vsyncpa [#allocation9], 0
    %15 = vsyncpa [#allocation4], 0
    %s16 = scalar_lea.sflag [#allocation4], 1
    %17 = vsyncpa %s16, 0
    loop: start=0, step=1, limit=4
    $region2: #{tpu_custom_call.1} parent=1 // loop_pre_header
      _
    $region3: #{tpu_custom_call.1} parent=1 // loop_header
      %s19 = sphi 0, %s23
      %p20 = scmp.ge.s32.totalorder %s19, 4
      %s29 = sphi 0, %s31
      %s32 = sphi 0, %s29
      %s33 = sphi 0, %s32
      %s49 = sphi 0, %s33
      %s53 = sphi 0, %s53
      %s55 = sphi 0, %s53
      %s56 = sphi 0, %s55
      %s70 = sphi 0, %s56
      %s74 = sphi 0, %s74
      %s76 = sphi 0, %s74
      %s77 = sphi 0, %s76
      %s91 = sphi 0, %s77
      %s95 = sphi 0, %s95
      %s97 = sphi 0, %s95
      %s98 = sphi 0, %s97
      %s112 = sphi 0, %s98
      %s116 = sphi 0, %s116
      %s118 = sphi 0, %s116
      %s119 = sphi 0, %s118
      %s133 = sphi 0, %s119
      %s139 = sphi 0, %s141
      %s142 = sphi 0, %s139
      %s143 = sphi 0, %s142
      %s159 = sphi 0, %s143
    $region4: #{tpu_custom_call.1} parent=1 // loop_header_branch
      %22 = sbr.rel (%p20) target = $region8
    $region5: #{tpu_custom_call.1} parent=1 // loop_body
      %s24 = ssub.s32 %s19, 1
      %s25 = ssub.s32 %s19, 2
      %s26 = sadd.s32 %s19, 1
      %s27 = ssub.s32 %s19, %s26
      %p28 = scmp.eq.s32.totalorder %s27, 0
      %s30 = sadd.s32 %s29, 1
      %s31 = scalar_select %p28, %s29, %s30
      %p34 = pneg %p28
      %p35 = scmp.eq.s32.totalorder %s19, 1
      %p36 = por %p34, %p35
      %p37 = scmp.ne.s32.totalorder %s29, %s32
      %p38 = scmp.eq.s32.totalorder %s19, 0
      %p39 = por %p37, %p38
      %p40 = scmp.ne.s32.totalorder %s29, %s32
      %p41 = scmp.eq.s32.totalorder %s24, 1
      %p42 = por %p40, %p41
      %p43 = scmp.ne.s32.totalorder %s32, %s33
      %p44 = scmp.eq.s32.totalorder %s24, 0
      %p45 = por %p43, %p44
      %p46 = scmp.ne.s32.totalorder %s32, %s33
      %p47 = scmp.eq.s32.totalorder %s25, 1
      %p48 = por %p46, %p47
      %p50 = scmp.ne.s32.totalorder %s33, %s49
      %p51 = scmp.eq.s32.totalorder %s25, 0
      %p52 = por %p50, %p51
      %s54 = sadd.s32 %s53, 1
      %p57 = scmp.eq.s32.totalorder %s19, 1
      %p58 = scmp.ne.s32.totalorder %s53, %s55
      %p59 = scmp.eq.s32.totalorder %s19, 0
      %p60 = por %p58, %p59
      %p61 = scmp.ne.s32.totalorder %s53, %s55
      %p62 = scmp.eq.s32.totalorder %s24, 1
      %p63 = por %p61, %p62
      %p64 = scmp.ne.s32.totalorder %s55, %s56
      %p65 = scmp.eq.s32.totalorder %s24, 0
      %p66 = por %p64, %p65
      %p67 = scmp.ne.s32.totalorder %s55, %s56
      %p68 = scmp.eq.s32.totalorder %s25, 1
      %p69 = por %p67, %p68
      %p71 = scmp.ne.s32.totalorder %s56, %s70
      %p72 = scmp.eq.s32.totalorder %s25, 0
      %p73 = por %p71, %p72
      %s75 = sadd.s32 %s74, 1
      %p78 = scmp.eq.s32.totalorder %s19, 1
      %p79 = scmp.ne.s32.totalorder %s74, %s76
      %p80 = scmp.eq.s32.totalorder %s19, 0
      %p81 = por %p79, %p80
      %p82 = scmp.ne.s32.totalorder %s74, %s76
      %p83 = scmp.eq.s32.totalorder %s24, 1
      %p84 = por %p82, %p83
      %p85 = scmp.ne.s32.totalorder %s76, %s77
      %p86 = scmp.eq.s32.totalorder %s24, 0
      %p87 = por %p85, %p86
      %p88 = scmp.ne.s32.totalorder %s76, %s77
      %p89 = scmp.eq.s32.totalorder %s25, 1
      %p90 = por %p88, %p89
      %p92 = scmp.ne.s32.totalorder %s77, %s91
      %p93 = scmp.eq.s32.totalorder %s25, 0
      %p94 = por %p92, %p93
      %s96 = sadd.s32 %s95, 1
      %p99 = scmp.eq.s32.totalorder %s19, 1
      %p100 = scmp.ne.s32.totalorder %s95, %s97
      %p101 = scmp.eq.s32.totalorder %s19, 0
      %p102 = por %p100, %p101
      %p103 = scmp.ne.s32.totalorder %s95, %s97
      %p104 = scmp.eq.s32.totalorder %s24, 1
      %p105 = por %p103, %p104
      %p106 = scmp.ne.s32.totalorder %s97, %s98
      %p107 = scmp.eq.s32.totalorder %s24, 0
      %p108 = por %p106, %p107
      %p109 = scmp.ne.s32.totalorder %s97, %s98
      %p110 = scmp.eq.s32.totalorder %s25, 1
      %p111 = por %p109, %p110
      %p113 = scmp.ne.s32.totalorder %s98, %s112
      %p114 = scmp.eq.s32.totalorder %s25, 0
      %p115 = por %p113, %p114
      %s117 = sadd.s32 %s116, 1
      %p120 = scmp.eq.s32.totalorder %s19, 1
      %p121 = scmp.ne.s32.totalorder %s116, %s118
      %p122 = scmp.eq.s32.totalorder %s19, 0
      %p123 = por %p121, %p122
      %p124 = scmp.ne.s32.totalorder %s116, %s118
      %p125 = scmp.eq.s32.totalorder %s24, 1
      %p126 = por %p124, %p125
      %p127 = scmp.ne.s32.totalorder %s118, %s119
      %p128 = scmp.eq.s32.totalorder %s24, 0
      %p129 = por %p127, %p128
      %p130 = scmp.ne.s32.totalorder %s118, %s119
      %p131 = scmp.eq.s32.totalorder %s25, 1
      %p132 = por %p130, %p131
      %p134 = scmp.ne.s32.totalorder %s119, %s133
      %p135 = scmp.eq.s32.totalorder %s25, 0
      %p136 = por %p134, %p135
      %s137 = ssub.s32 %s19, %s26
      %p138 = scmp.eq.s32.totalorder %s137, 0
      %s140 = sadd.s32 %s139, 1
      %s141 = scalar_select %p138, %s139, %s140
      %p144 = pneg %p138
      %p145 = scmp.eq.s32.totalorder %s19, 1
      %p146 = por %p144, %p145
      %p147 = scmp.ne.s32.totalorder %s139, %s142
      %p148 = scmp.eq.s32.totalorder %s19, 0
      %p149 = por %p147, %p148
      %p150 = scmp.ne.s32.totalorder %s139, %s142
      %p151 = scmp.eq.s32.totalorder %s24, 1
      %p152 = por %p150, %p151
      %p153 = scmp.ne.s32.totalorder %s142, %s143
      %p154 = scmp.eq.s32.totalorder %s24, 0
      %p155 = por %p153, %p154
      %p156 = scmp.ne.s32.totalorder %s142, %s143
      %p157 = scmp.eq.s32.totalorder %s25, 1
      %p158 = por %p156, %p157
      %p160 = scmp.ne.s32.totalorder %s143, %s159
      %p161 = scmp.eq.s32.totalorder %s25, 0
      %p162 = por %p160, %p161
      %p163 = scmp.le.s32.totalorder 1, %s19
      %p164 = scmp.lt.s32.totalorder %s19, 3
      %p165 = pnand %p163, %p164
      %p166 = pneg %p165
      // Predicated region
      $region9: #{tpu_custom_call.1} parent=5 // pred_check
        _
      $region10: #{tpu_custom_call.1} parent=5 // pred_check_branch
        %168 = sbr.rel (%p165) target = $region12
      $region11: #{tpu_custom_call.1} parent=5 // pred_region
        %s169 = ssub.s32 %s19, 1
        // Predicated region
        $region13: #{tpu_custom_call.1} parent=11 // pred_check
          %p170 = pneg %p66
        $region14: #{tpu_custom_call.1} parent=11 // pred_check_branch
          %172 = sbr.rel (%p170) target = $region16
        $region15: #{tpu_custom_call.1} parent=11 // pred_region
          %s174 = ssub.s32 4096, 4096
          %175 = vsyncadd [#allocation6], %s174
          %s176 = sshll.u32 [#allocation5], 4
          %s177 = int_to_ptr.vmem [resolvable:$true] %s176
          %182 = dma.hbm_to_vmem [thread:$0]  %s1, 4096, %s177, [#allocation6], 256, 256, 16
        $region16: #{tpu_custom_call.1} parent=11 // pred_fallthru
          _
        // Predicated region
        $region17: #{tpu_custom_call.1} parent=11 // pred_check
          %p183 = pneg %p87
        $region18: #{tpu_custom_call.1} parent=11 // pred_check_branch
          %185 = sbr.rel (%p183) target = $region20
        $region19: #{tpu_custom_call.1} parent=11 // pred_region
          %s187 = ssub.s32 64, 64
          %188 = vsyncadd [#allocation6], %s187
          %s190 = sshll.u32 [#allocation7], 4
          %s191 = int_to_ptr.vmem [resolvable:$true] %s190
          %193 = dma.hbm_to_vmem [thread:$0]  %s2, 64, %s191, [#allocation6]
        $region20: #{tpu_custom_call.1} parent=11 // pred_fallthru
          _
        // Predicated region
        $region21: #{tpu_custom_call.1} parent=11 // pred_check
          %p194 = pneg %p108
        $region22: #{tpu_custom_call.1} parent=11 // pred_check_branch
          %196 = sbr.rel (%p194) target = $region24
        $region23: #{tpu_custom_call.1} parent=11 // pred_region
          %s198 = ssub.s32 4096, 4096
          %199 = vsyncadd [#allocation9], %s198
          %s200 = sshll.u32 [#allocation8], 4
          %s201 = int_to_ptr.vmem [resolvable:$true] %s200
          %206 = dma.hbm_to_vmem [thread:$0]  %s3, 4096, %s201, [#allocation9], 64, 64, 4
        $region24: #{tpu_custom_call.1} parent=11 // pred_fallthru
          _
        // Predicated region
        $region25: #{tpu_custom_call.1} parent=11 // pred_check
          %p207 = pneg %p129
        $region26: #{tpu_custom_call.1} parent=11 // pred_check_branch
          %209 = sbr.rel (%p207) target = $region28
        $region27: #{tpu_custom_call.1} parent=11 // pred_region
          _
        $region28: #{tpu_custom_call.1} parent=11 // pred_fallthru
          _
      $region12: #{tpu_custom_call.1} parent=5 // pred_fallthru
        _
      %p210 = scmp.lt.s32.totalorder %s19, 2
      // Predicated region
      $region29: #{tpu_custom_call.1} parent=5 // pred_check
        %p211 = pneg %p210
      $region30: #{tpu_custom_call.1} parent=5 // pred_check_branch
        %213 = sbr.rel (%p211) target = $region32
      $region31: #{tpu_custom_call.1} parent=5 // pred_region
        // Predicated region
        $region33: #{tpu_custom_call.1} parent=31 // pred_check
          %p214 = pneg %p39
        $region34: #{tpu_custom_call.1} parent=31 // pred_check_branch
          %216 = sbr.rel (%p214) target = $region36
        $region35: #{tpu_custom_call.1} parent=31 // pred_region
          %s217 = sand.u32 %s29, 1
          %s218 = scalar_lea.sflag [#allocation3], %s217
          %s219 = sand.u32 %s29, 1
          %s220 = smul.addr %s219, 128
          %s221 = scalar_lea.vmem [#allocation2], %s220
          %s222 = smul.u32 32, %s19
          %s224 = ssub.s32 2048, 2048
          %225 = vsyncadd %s218, %s224
          %s226 = smul.addr %s222, 64
          %s227 = scalar_lea.hbm %s0, %s226
          %s228 = sshll.u32 %s221, 4
          %s229 = int_to_ptr.vmem [resolvable:$true] %s228
          %234 = dma.hbm_to_vmem [thread:$0]  %s227, 2048, %s229, %s218, 64, 64, 4
        $region36: #{tpu_custom_call.1} parent=31 // pred_fallthru
          _
      $region32: #{tpu_custom_call.1} parent=5 // pred_fallthru
        _
      %p235 = scmp.le.s32.totalorder 1, %s19
      %p236 = scmp.lt.s32.totalorder %s19, 3
      %p237 = pnand %p235, %p236
      %p238 = pneg %p237
      // Predicated region
      $region37: #{tpu_custom_call.1} parent=5 // pred_check
        _
      $region38: #{tpu_custom_call.1} parent=5 // pred_check_branch
        %240 = sbr.rel (%p237) target = $region40
      $region39: #{tpu_custom_call.1} parent=5 // pred_region
        %s241 = ssub.s32 %s19, 1
        %s242 = sand.u32 %s32, 1
        %s243 = scalar_lea.sflag [#allocation3], %s242
        %s244 = sand.u32 %s32, 1
        %s245 = smul.addr %s244, 128
        %s246 = scalar_lea.vmem [#allocation2], %s245
        // Predicated region
        $region41: #{tpu_custom_call.1} parent=39 // pred_check
          %p247 = pneg %p45
        $region42: #{tpu_custom_call.1} parent=39 // pred_check_branch
          %249 = sbr.rel (%p247) target = $region44
        $region43: #{tpu_custom_call.1} parent=39 // pred_region
          %250 = dma.done %s243, 2048
        $region44: #{tpu_custom_call.1} parent=39 // pred_fallthru
          _
        // Predicated region
        $region45: #{tpu_custom_call.1} parent=39 // pred_check
          %p251 = pneg %p66
        $region46: #{tpu_custom_call.1} parent=39 // pred_check_branch
          %253 = sbr.rel (%p251) target = $region48
        $region47: #{tpu_custom_call.1} parent=39 // pred_region
          %254 = dma.done [#allocation6], 4096
        $region48: #{tpu_custom_call.1} parent=39 // pred_fallthru
          _
        // Predicated region
        $region49: #{tpu_custom_call.1} parent=39 // pred_check
          %p255 = pneg %p87
        $region50: #{tpu_custom_call.1} parent=39 // pred_check_branch
          %257 = sbr.rel (%p255) target = $region52
        $region51: #{tpu_custom_call.1} parent=39 // pred_region
          %258 = dma.done [#allocation6], 64
        $region52: #{tpu_custom_call.1} parent=39 // pred_fallthru
          _
        // Predicated region
        $region53: #{tpu_custom_call.1} parent=39 // pred_check
          %p259 = pneg %p108
        $region54: #{tpu_custom_call.1} parent=39 // pred_check_branch
          %261 = sbr.rel (%p259) target = $region56
        $region55: #{tpu_custom_call.1} parent=39 // pred_region
          %262 = dma.done [#allocation9], 4096
        $region56: #{tpu_custom_call.1} parent=39 // pred_fallthru
          _
        %s263 = sand.u32 %s32, 1
        %s264 = scalar_lea.sflag [#allocation3], %s263
        %s265 = sand.u32 %s32, 1
        %s266 = smul.addr %s265, 128
        %s267 = scalar_lea.vmem [#allocation2], %s266
        %p268 = pneg %p45
        %p269 = pneg %p42
        %p270 = pneg %p66
        %p271 = pneg %p63
        %p272 = pneg %p87
        %p273 = pneg %p84
        %p274 = pneg %p108
        %p275 = pneg %p105
        %p276 = pneg %p129
        %p277 = pneg %p126
        %p278 = pneg %p155
        %p279 = pneg %p152
        %s280 = sand.u32 %s142, 1
        %s281 = scalar_lea.sflag [#allocation4], %s280
        %s282 = sand.u32 %s142, 1
        %s283 = smul.addr %s282, 256
        %s284 = scalar_lea.vmem [#allocation10], %s283
        %s285 = smul.u32 32, %s24
        %s286 = smul.u32 32, %s24
        %v288 = vld [vmem:[%s246] sm:$0xf]
        %v289 = vld [vmem:[%s246 + $0x4] sm:$0xf]
        %v290 = vld [vmem:[%s246 + $0x8] sm:$0xf]
        %v291 = vld [vmem:[%s246 + $0xc] sm:$0xf]
        %v292 = vld [vmem:[%s246 + $0x10] sm:$0xf]
        %v293 = vld [vmem:[%s246 + $0x14] sm:$0xf]
        %v294 = vld [vmem:[%s246 + $0x18] sm:$0xf]
        %v295 = vld [vmem:[%s246 + $0x1c] sm:$0xf]
        %v296 = vld [vmem:[%s246 + $0x20] sm:$0xf]
        %v297 = vld [vmem:[%s246 + $0x24] sm:$0xf]
        %v298 = vld [vmem:[%s246 + $0x28] sm:$0xf]
        %v299 = vld [vmem:[%s246 + $0x2c] sm:$0xf]
        %v300 = vld [vmem:[%s246 + $0x30] sm:$0xf]
        %v301 = vld [vmem:[%s246 + $0x34] sm:$0xf]
        %v302 = vld [vmem:[%s246 + $0x38] sm:$0xf]
        %v303 = vld [vmem:[%s246 + $0x3c] sm:$0xf]
        %v304 = vld [vmem:[%s246 + $0x40] sm:$0xf]
        %v305 = vld [vmem:[%s246 + $0x44] sm:$0xf]
        %v306 = vld [vmem:[%s246 + $0x48] sm:$0xf]
        %v307 = vld [vmem:[%s246 + $0x4c] sm:$0xf]
        %v308 = vld [vmem:[%s246 + $0x50] sm:$0xf]
        %v309 = vld [vmem:[%s246 + $0x54] sm:$0xf]
        %v310 = vld [vmem:[%s246 + $0x58] sm:$0xf]
        %v311 = vld [vmem:[%s246 + $0x5c] sm:$0xf]
        %v312 = vld [vmem:[%s246 + $0x60] sm:$0xf]
        %v313 = vld [vmem:[%s246 + $0x64] sm:$0xf]
        %v314 = vld [vmem:[%s246 + $0x68] sm:$0xf]
        %v315 = vld [vmem:[%s246 + $0x6c] sm:$0xf]
        %v316 = vld [vmem:[%s246 + $0x70] sm:$0xf]
        %v317 = vld [vmem:[%s246 + $0x74] sm:$0xf]
        %v318 = vld [vmem:[%s246 + $0x78] sm:$0xf]
        %v319 = vld [vmem:[%s246 + $0x7c] sm:$0xf]
        %v320 = vld [vmem:[#allocation5] sm:$0xff]
        %v321 = vld [vmem:[#allocation5 + $0x8] sm:$0xff]
        %v322 = vld [vmem:[#allocation5 + $0x10] sm:$0xff]
        %v323 = vld [vmem:[#allocation5 + $0x18] sm:$0xff]
        %v324 = vld [vmem:[#allocation5 + $0x20] sm:$0xff]
        %v325 = vld [vmem:[#allocation5 + $0x28] sm:$0xff]
        %v326 = vld [vmem:[#allocation5 + $0x30] sm:$0xff]
        %v327 = vld [vmem:[#allocation5 + $0x38] sm:$0xff]
        %v328 = vld [vmem:[#allocation5 + $0x40] sm:$0xff]
        %v329 = vld [vmem:[#allocation5 + $0x48] sm:$0xff]
        %v330 = vld [vmem:[#allocation5 + $0x50] sm:$0xff]
        %v331 = vld [vmem:[#allocation5 + $0x58] sm:$0xff]
        %v332 = vld [vmem:[#allocation5 + $0x60] sm:$0xff]
        %v333 = vld [vmem:[#allocation5 + $0x68] sm:$0xff]
        %v334 = vld [vmem:[#allocation5 + $0x70] sm:$0xff]
        %v335 = vld [vmem:[#allocation5 + $0x78] sm:$0xff]
        %v336 = vld [vmem:[#allocation5 + $0x80] sm:$0xff]
        %v337 = vld [vmem:[#allocation5 + $0x88] sm:$0xff]
        %v338 = vld [vmem:[#allocation5 + $0x90] sm:$0xff]
        %v339 = vld [vmem:[#allocation5 + $0x98] sm:$0xff]
        %v340 = vld [vmem:[#allocation5 + $0xa0] sm:$0xff]
        %v341 = vld [vmem:[#allocation5 + $0xa8] sm:$0xff]
        %v342 = vld [vmem:[#allocation5 + $0xb0] sm:$0xff]
        %v343 = vld [vmem:[#allocation5 + $0xb8] sm:$0xff]
        %v344 = vld [vmem:[#allocation5 + $0xc0] sm:$0xff]
        %v345 = vld [vmem:[#allocation5 + $0xc8] sm:$0xff]
        %v346 = vld [vmem:[#allocation5 + $0xd0] sm:$0xff]
        %v347 = vld [vmem:[#allocation5 + $0xd8] sm:$0xff]
        %v348 = vld [vmem:[#allocation5 + $0xe0] sm:$0xff]
        %v349 = vld [vmem:[#allocation5 + $0xe8] sm:$0xff]
        %v350 = vld [vmem:[#allocation5 + $0xf0] sm:$0xff]
        %v351 = vld [vmem:[#allocation5 + $0xf8] sm:$0xff]
        %v352 = vld [vmem:[#allocation7] sm:$0xf]
        %v354 = vlaneseq
        %v355 = vshrl.u32 %v354, 7
        %v356 = vsub.s32 0, %v355
        %v357 = vrot.slane %v352, %v356
        %v358 = vlaneseq
        %v359 = vshrl.u32 %v358, 7
        %v360 = vsub.s32 1, %v359
        %v361 = vrot.slane %v352, %v360
        %v362 = vlaneseq
        %v363 = vshrl.u32 %v362, 7
        %v364 = vsub.s32 2, %v363
        %v365 = vrot.slane %v352, %v364
        %v366 = vlaneseq
        %v367 = vshrl.u32 %v366, 7
        %v368 = vsub.s32 3, %v367
        %v369 = vrot.slane %v352, %v368
        %v406 = vunpack.c.l.b16 %v288
        %v407 = vunpack.c.l.b16 %v289
        %v408 = vunpack.c.l.b16 %v290
        %v409 = vunpack.c.l.b16 %v291
        %v410 = vunpack.c.l.b16 %v292
        %v411 = vunpack.c.l.b16 %v293
        %v412 = vunpack.c.l.b16 %v294
        %v413 = vunpack.c.l.b16 %v295
        %v414 = vunpack.c.l.b16 %v296
        %v415 = vunpack.c.l.b16 %v297
        %v416 = vunpack.c.l.b16 %v298
        %v417 = vunpack.c.l.b16 %v299
        %v418 = vunpack.c.l.b16 %v300
        %v419 = vunpack.c.l.b16 %v301
        %v420 = vunpack.c.l.b16 %v302
        %v421 = vunpack.c.l.b16 %v303
        %v422 = vunpack.c.l.b16 %v304
        %v423 = vunpack.c.l.b16 %v305
        %v424 = vunpack.c.l.b16 %v306
        %v425 = vunpack.c.l.b16 %v307
        %v426 = vunpack.c.l.b16 %v308
        %v427 = vunpack.c.l.b16 %v309
        %v428 = vunpack.c.l.b16 %v310
        %v429 = vunpack.c.l.b16 %v311
        %v430 = vunpack.c.l.b16 %v312
        %v431 = vunpack.c.l.b16 %v313
        %v432 = vunpack.c.l.b16 %v314
        %v433 = vunpack.c.l.b16 %v315
        %v434 = vunpack.c.l.b16 %v316
        %v435 = vunpack.c.l.b16 %v317
        %v436 = vunpack.c.l.b16 %v318
        %v437 = vunpack.c.l.b16 %v319
        %v438 = vpack.c.b16 %v407, %v406
        %v439 = vpack.c.b16 %v409, %v408
        %v440 = vpack.c.b16 %v411, %v410
        %v441 = vpack.c.b16 %v413, %v412
        %v442 = vpack.c.b16 %v415, %v414
        %v443 = vpack.c.b16 %v417, %v416
        %v444 = vpack.c.b16 %v419, %v418
        %v445 = vpack.c.b16 %v421, %v420
        %v446 = vpack.c.b16 %v423, %v422
        %v447 = vpack.c.b16 %v425, %v424
        %v448 = vpack.c.b16 %v427, %v426
        %v449 = vpack.c.b16 %v429, %v428
        %v450 = vpack.c.b16 %v431, %v430
        %v451 = vpack.c.b16 %v433, %v432
        %v452 = vpack.c.b16 %v435, %v434
        %v453 = vpack.c.b16 %v437, %v436
        %v502 = vunpack.c.l.b16 %v320
        %v503 = vunpack.c.h.b16 %v320
        %v504 = vunpack.c.l.b16 %v321
        %v505 = vunpack.c.h.b16 %v321
        %v506 = vunpack.c.l.b16 %v322
        %v507 = vunpack.c.h.b16 %v322
        %v508 = vunpack.c.l.b16 %v323
        %v509 = vunpack.c.h.b16 %v323
        %v510 = vunpack.c.l.b16 %v324
        %v511 = vunpack.c.h.b16 %v324
        %v512 = vunpack.c.l.b16 %v325
        %v513 = vunpack.c.h.b16 %v325
        %v514 = vunpack.c.l.b16 %v326
        %v515 = vunpack.c.h.b16 %v326
        %v516 = vunpack.c.l.b16 %v327
        %v517 = vunpack.c.h.b16 %v327
        %v518 = vunpack.c.l.b16 %v328
        %v519 = vunpack.c.h.b16 %v328
        %v520 = vunpack.c.l.b16 %v329
        %v521 = vunpack.c.h.b16 %v329
        %v522 = vunpack.c.l.b16 %v330
        %v523 = vunpack.c.h.b16 %v330
        %v524 = vunpack.c.l.b16 %v331
        %v525 = vunpack.c.h.b16 %v331
        %v526 = vunpack.c.l.b16 %v332
        %v527 = vunpack.c.h.b16 %v332
        %v528 = vunpack.c.l.b16 %v333
        %v529 = vunpack.c.h.b16 %v333
        %v530 = vunpack.c.l.b16 %v334
        %v531 = vunpack.c.h.b16 %v334
        %v532 = vunpack.c.l.b16 %v335
        %v533 = vunpack.c.h.b16 %v335
        %v534 = vunpack.c.l.b16 %v336
        %v535 = vunpack.c.h.b16 %v336
        %v536 = vunpack.c.l.b16 %v337
        %v537 = vunpack.c.h.b16 %v337
        %v538 = vunpack.c.l.b16 %v338
        %v539 = vunpack.c.h.b16 %v338
        %v540 = vunpack.c.l.b16 %v339
        %v541 = vunpack.c.h.b16 %v339
        %v542 = vunpack.c.l.b16 %v340
        %v543 = vunpack.c.h.b16 %v340
        %v544 = vunpack.c.l.b16 %v341
        %v545 = vunpack.c.h.b16 %v341
        %v546 = vunpack.c.l.b16 %v342
        %v547 = vunpack.c.h.b16 %v342
        %v548 = vunpack.c.l.b16 %v343
        %v549 = vunpack.c.h.b16 %v343
        %v550 = vunpack.c.l.b16 %v344
        %v551 = vunpack.c.h.b16 %v344
        %v552 = vunpack.c.l.b16 %v345
        %v553 = vunpack.c.h.b16 %v345
        %v554 = vunpack.c.l.b16 %v346
        %v555 = vunpack.c.h.b16 %v346
        %v556 = vunpack.c.l.b16 %v347
        %v557 = vunpack.c.h.b16 %v347
        %v558 = vunpack.c.l.b16 %v348
        %v559 = vunpack.c.h.b16 %v348
        %v560 = vunpack.c.l.b16 %v349
        %v561 = vunpack.c.h.b16 %v349
        %v562 = vunpack.c.l.b16 %v350
        %v563 = vunpack.c.h.b16 %v350
        %v564 = vunpack.c.l.b16 %v351
        %v565 = vunpack.c.h.b16 %v351
        %v566 = vpack.c.b16 %v506, %v502
        %v567 = vpack.c.b16 %v507, %v503
        %v568 = vpack.c.b16 %v508, %v504
        %v569 = vpack.c.b16 %v509, %v505
        %v570 = vpack.c.b16 %v514, %v510
        %v571 = vpack.c.b16 %v515, %v511
        %v572 = vpack.c.b16 %v516, %v512
        %v573 = vpack.c.b16 %v517, %v513
        %v574 = vpack.c.b16 %v522, %v518
        %v575 = vpack.c.b16 %v523, %v519
        %v576 = vpack.c.b16 %v524, %v520
        %v577 = vpack.c.b16 %v525, %v521
        %v578 = vpack.c.b16 %v530, %v526
        %v579 = vpack.c.b16 %v531, %v527
        %v580 = vpack.c.b16 %v532, %v528
        %v581 = vpack.c.b16 %v533, %v529
        %v582 = vpack.c.b16 %v538, %v534
        %v583 = vpack.c.b16 %v539, %v535
        %v584 = vpack.c.b16 %v540, %v536
        %v585 = vpack.c.b16 %v541, %v537
        %v586 = vpack.c.b16 %v546, %v542
        %v587 = vpack.c.b16 %v547, %v543
        %v588 = vpack.c.b16 %v548, %v544
        %v589 = vpack.c.b16 %v549, %v545
        %v590 = vpack.c.b16 %v554, %v550
        %v591 = vpack.c.b16 %v555, %v551
        %v592 = vpack.c.b16 %v556, %v552
        %v593 = vpack.c.b16 %v557, %v553
        %v594 = vpack.c.b16 %v562, %v558
        %v595 = vpack.c.b16 %v563, %v559
        %v596 = vpack.c.b16 %v564, %v560
        %v597 = vpack.c.b16 %v565, %v561
        %630 = vmatprep.subr.bf16.mxu0 %v595
        %631 = vmatpush1.bf16.msra.mxu0 %v594
        %632 = vmatprep.subr.bf16.mxu0 %v591
        %633 = vmatpush1.bf16.msra.mxu0 %v590
        %634 = vmatprep.subr.bf16.mxu0 %v587
        %635 = vmatpush1.bf16.msra.mxu0 %v586
        %636 = vmatprep.subr.bf16.mxu0 %v583
        %637 = vmatpush1.bf16.msra.mxu0 %v582
        %638 = vmatprep.subr.bf16.mxu0 %v579
        %639 = vmatpush1.bf16.msra.mxu0 %v578
        %640 = vmatprep.subr.bf16.mxu0 %v575
        %641 = vmatpush1.bf16.msra.mxu0 %v574
        %642 = vmatprep.subr.bf16.mxu0 %v571
        %643 = vmatpush1.bf16.msra.mxu0 %v570
        %644 = vmatprep.subr.bf16.mxu0 %v567
        %645 = vmatpush1.bf16.msra.mxu0 %v566
        %646 = vmatprep.subr.bf16.mxu0 0
        %647 = vmatpush2.bf16.msra.mxu0 0
        %648 = vmatprep.subr.bf16.mxu0 0
        %649 = vmatpush2.bf16.msra.mxu0 0
        %650 = vmatprep.subr.bf16.mxu0 0
        %651 = vmatpush2.bf16.msra.mxu0 0
        %652 = vmatprep.subr.bf16.mxu0 0
        %653 = vmatpush2.bf16.msra.mxu0 0
        %654 = vmatprep.subr.bf16.mxu0 0
        %655 = vmatpush2.bf16.msra.mxu0 0
        %656 = vmatprep.subr.bf16.mxu0 0
        %657 = vmatpush2.bf16.msra.mxu0 0
        %658 = vmatprep.subr.bf16.mxu0 0
        %659 = vmatpush2.bf16.msra.mxu0 0
        %660 = vmatprep.subr.bf16.mxu0 0
        %661 = vmatpush2.bf16.msra.mxu0 0
        %662 = vmatprep.mubr.bf16.mxu0 0
        %663 = vmatmul.mubr.bf16.gmra.mxu0 %v438
        %v664 = vpop.f32.mrf.mxu0
        %v665 = vadd.f32 %v357, %v664
        %v666 = vpop.f32.mrf.mxu0
        %v667 = vadd.f32 %v361, %v666
        %v668 = vpop.f32.mrf.mxu0
        %v669 = vadd.f32 %v357, %v668
        %v670 = vpop.f32.mrf.mxu0
        %v671 = vadd.f32 %v361, %v670
        %672 = vmatprep.mubr.bf16.mxu0 0
        %673 = vmatmul.mubr.bf16.gmra.mxu0 %v439
        %v674 = vpop.f32.mrf.mxu0
        %v675 = vadd.f32 %v357, %v674
        %v676 = vpop.f32.mrf.mxu0
        %v677 = vadd.f32 %v361, %v676
        %v678 = vpop.f32.mrf.mxu0
        %v679 = vadd.f32 %v357, %v678
        %v680 = vpop.f32.mrf.mxu0
        %v681 = vadd.f32 %v361, %v680
        %682 = vmatprep.mubr.bf16.mxu0 0
        %683 = vmatmul.mubr.bf16.gmra.mxu0 %v440
        %v684 = vpop.f32.mrf.mxu0
        %v685 = vadd.f32 %v357, %v684
        %v686 = vpop.f32.mrf.mxu0
        %v687 = vadd.f32 %v361, %v686
        %v688 = vpop.f32.mrf.mxu0
        %v689 = vadd.f32 %v357, %v688
        %v690 = vpop.f32.mrf.mxu0
        %v691 = vadd.f32 %v361, %v690
        %692 = vmatprep.mubr.bf16.mxu0 0
        %693 = vmatmul.mubr.bf16.gmra.mxu0 %v441
        %v694 = vpop.f32.mrf.mxu0
        %v695 = vadd.f32 %v357, %v694
        %v696 = vpop.f32.mrf.mxu0
        %v697 = vadd.f32 %v361, %v696
        %v698 = vpop.f32.mrf.mxu0
        %v699 = vadd.f32 %v357, %v698
        %v700 = vpop.f32.mrf.mxu0
        %v701 = vadd.f32 %v361, %v700
        %702 = vmatprep.mubr.bf16.mxu0 0
        %703 = vmatmul.mubr.bf16.gmra.mxu0 %v442
        %v704 = vpop.f32.mrf.mxu0
        %v705 = vadd.f32 %v357, %v704
        %v706 = vpop.f32.mrf.mxu0
        %v707 = vadd.f32 %v361, %v706
        %v708 = vpop.f32.mrf.mxu0
        %v709 = vadd.f32 %v357, %v708
        %v710 = vpop.f32.mrf.mxu0
        %v711 = vadd.f32 %v361, %v710
        %712 = vmatprep.mubr.bf16.mxu0 0
        %713 = vmatmul.mubr.bf16.gmra.mxu0 %v443
        %v714 = vpop.f32.mrf.mxu0
        %v715 = vadd.f32 %v357, %v714
        %v716 = vpop.f32.mrf.mxu0
        %v717 = vadd.f32 %v361, %v716
        %v718 = vpop.f32.mrf.mxu0
        %v719 = vadd.f32 %v357, %v718
        %v720 = vpop.f32.mrf.mxu0
        %v721 = vadd.f32 %v361, %v720
        %722 = vmatprep.mubr.bf16.mxu0 0
        %723 = vmatmul.mubr.bf16.gmra.mxu0 %v444
        %v724 = vpop.f32.mrf.mxu0
        %v725 = vadd.f32 %v357, %v724
        %v726 = vpop.f32.mrf.mxu0
        %v727 = vadd.f32 %v361, %v726
        %v728 = vpop.f32.mrf.mxu0
        %v729 = vadd.f32 %v357, %v728
        %v730 = vpop.f32.mrf.mxu0
        %v731 = vadd.f32 %v361, %v730
        %732 = vmatprep.mubr.bf16.mxu0 0
        %733 = vmatmul.mubr.bf16.gmra.mxu0 %v445
        %v734 = vpop.f32.mrf.mxu0
        %v735 = vadd.f32 %v357, %v734
        %v736 = vpop.f32.mrf.mxu0
        %v737 = vadd.f32 %v361, %v736
        %v738 = vpop.f32.mrf.mxu0
        %v739 = vadd.f32 %v357, %v738
        %v740 = vpop.f32.mrf.mxu0
        %v741 = vadd.f32 %v361, %v740
        %742 = vmatprep.mubr.bf16.mxu0 0
        %743 = vmatmul.mubr.bf16.gmra.mxu0 %v446
        %v744 = vpop.f32.mrf.mxu0
        %v745 = vadd.f32 %v357, %v744
        %v746 = vpop.f32.mrf.mxu0
        %v747 = vadd.f32 %v361, %v746
        %v748 = vpop.f32.mrf.mxu0
        %v749 = vadd.f32 %v357, %v748
        %v750 = vpop.f32.mrf.mxu0
        %v751 = vadd.f32 %v361, %v750
        %752 = vmatprep.mubr.bf16.mxu0 0
        %753 = vmatmul.mubr.bf16.gmra.mxu0 %v447
        %v754 = vpop.f32.mrf.mxu0
        %v755 = vadd.f32 %v357, %v754
        %v756 = vpop.f32.mrf.mxu0
        %v757 = vadd.f32 %v361, %v756
        %v758 = vpop.f32.mrf.mxu0
        %v759 = vadd.f32 %v357, %v758
        %v760 = vpop.f32.mrf.mxu0
        %v761 = vadd.f32 %v361, %v760
        %762 = vmatprep.mubr.bf16.mxu0 0
        %763 = vmatmul.mubr.bf16.gmra.mxu0 %v448
        %v764 = vpop.f32.mrf.mxu0
        %v765 = vadd.f32 %v357, %v764
        %v766 = vpop.f32.mrf.mxu0
        %v767 = vadd.f32 %v361, %v766
        %v768 = vpop.f32.mrf.mxu0
        %v769 = vadd.f32 %v357, %v768
        %v770 = vpop.f32.mrf.mxu0
        %v771 = vadd.f32 %v361, %v770
        %772 = vmatprep.mubr.bf16.mxu0 0
        %773 = vmatmul.mubr.bf16.gmra.mxu0 %v449
        %v774 = vpop.f32.mrf.mxu0
        %v775 = vadd.f32 %v357, %v774
        %v776 = vpop.f32.mrf.mxu0
        %v777 = vadd.f32 %v361, %v776
        %v778 = vpop.f32.mrf.mxu0
        %v779 = vadd.f32 %v357, %v778
        %v780 = vpop.f32.mrf.mxu0
        %v781 = vadd.f32 %v361, %v780
        %782 = vmatprep.mubr.bf16.mxu0 0
        %783 = vmatmul.mubr.bf16.gmra.mxu0 %v450
        %v784 = vpop.f32.mrf.mxu0
        %v785 = vadd.f32 %v357, %v784
        %v786 = vpop.f32.mrf.mxu0
        %v787 = vadd.f32 %v361, %v786
        %v788 = vpop.f32.mrf.mxu0
        %v789 = vadd.f32 %v357, %v788
        %v790 = vpop.f32.mrf.mxu0
        %v791 = vadd.f32 %v361, %v790
        %792 = vmatprep.mubr.bf16.mxu0 0
        %793 = vmatmul.mubr.bf16.gmra.mxu0 %v451
        %v794 = vpop.f32.mrf.mxu0
        %v795 = vadd.f32 %v357, %v794
        %v796 = vpop.f32.mrf.mxu0
        %v797 = vadd.f32 %v361, %v796
        %v798 = vpop.f32.mrf.mxu0
        %v799 = vadd.f32 %v357, %v798
        %v800 = vpop.f32.mrf.mxu0
        %v801 = vadd.f32 %v361, %v800
        %802 = vmatprep.mubr.bf16.mxu0 0
        %803 = vmatmul.mubr.bf16.gmra.mxu0 %v452
        %v804 = vpop.f32.mrf.mxu0
        %v805 = vadd.f32 %v357, %v804
        %v806 = vpop.f32.mrf.mxu0
        %v807 = vadd.f32 %v361, %v806
        %v808 = vpop.f32.mrf.mxu0
        %v809 = vadd.f32 %v357, %v808
        %v810 = vpop.f32.mrf.mxu0
        %v811 = vadd.f32 %v361, %v810
        %812 = vmatprep.mubr.bf16.mxu0 0
        %813 = vmatmul.mubr.bf16.gmra.mxu0 %v453
        %v814 = vpop.f32.mrf.mxu0
        %v815 = vadd.f32 %v357, %v814
        %v816 = vpop.f32.mrf.mxu0
        %v817 = vadd.f32 %v361, %v816
        %v818 = vpop.f32.mrf.mxu0
        %v819 = vadd.f32 %v357, %v818
        %v820 = vpop.f32.mrf.mxu0
        %v821 = vadd.f32 %v361, %v820
        %822 = vdwg.mxu0
        %823 = vmatprep.subr.bf16.mxu0 %v597
        %824 = vmatpush1.bf16.msra.mxu0 %v596
        %825 = vmatprep.subr.bf16.mxu0 %v593
        %826 = vmatpush1.bf16.msra.mxu0 %v592
        %827 = vmatprep.subr.bf16.mxu0 %v589
        %828 = vmatpush1.bf16.msra.mxu0 %v588
        %829 = vmatprep.subr.bf16.mxu0 %v585
        %830 = vmatpush1.bf16.msra.mxu0 %v584
        %831 = vmatprep.subr.bf16.mxu0 %v581
        %832 = vmatpush1.bf16.msra.mxu0 %v580
        %833 = vmatprep.subr.bf16.mxu0 %v577
        %834 = vmatpush1.bf16.msra.mxu0 %v576
        %835 = vmatprep.subr.bf16.mxu0 %v573
        %836 = vmatpush1.bf16.msra.mxu0 %v572
        %837 = vmatprep.subr.bf16.mxu0 %v569
        %838 = vmatpush1.bf16.msra.mxu0 %v568
        %839 = vmatprep.subr.bf16.mxu0 0
        %840 = vmatpush2.bf16.msra.mxu0 0
        %841 = vmatprep.subr.bf16.mxu0 0
        %842 = vmatpush2.bf16.msra.mxu0 0
        %843 = vmatprep.subr.bf16.mxu0 0
        %844 = vmatpush2.bf16.msra.mxu0 0
        %845 = vmatprep.subr.bf16.mxu0 0
        %846 = vmatpush2.bf16.msra.mxu0 0
        %847 = vmatprep.subr.bf16.mxu0 0
        %848 = vmatpush2.bf16.msra.mxu0 0
        %849 = vmatprep.subr.bf16.mxu0 0
        %850 = vmatpush2.bf16.msra.mxu0 0
        %851 = vmatprep.subr.bf16.mxu0 0
        %852 = vmatpush2.bf16.msra.mxu0 0
        %853 = vmatprep.subr.bf16.mxu0 0
        %854 = vmatpush2.bf16.msra.mxu0 0
        %855 = vmatprep.mubr.bf16.mxu0 0
        %856 = vmatmul.mubr.bf16.gmra.mxu0 %v438
        %v857 = vpop.f32.mrf.mxu0
        %v858 = vadd.f32 %v365, %v857
        %v859 = vpop.f32.mrf.mxu0
        %v860 = vadd.f32 %v369, %v859
        %v861 = vpop.f32.mrf.mxu0
        %v862 = vadd.f32 %v365, %v861
        %v863 = vpop.f32.mrf.mxu0
        %v864 = vadd.f32 %v369, %v863
        %865 = vmatprep.mubr.bf16.mxu0 0
        %866 = vmatmul.mubr.bf16.gmra.mxu0 %v439
        %v867 = vpop.f32.mrf.mxu0
        %v868 = vadd.f32 %v365, %v867
        %v869 = vpop.f32.mrf.mxu0
        %v870 = vadd.f32 %v369, %v869
        %v871 = vpop.f32.mrf.mxu0
        %v872 = vadd.f32 %v365, %v871
        %v873 = vpop.f32.mrf.mxu0
        %v874 = vadd.f32 %v369, %v873
        %875 = vmatprep.mubr.bf16.mxu0 0
        %876 = vmatmul.mubr.bf16.gmra.mxu0 %v440
        %v877 = vpop.f32.mrf.mxu0
        %v878 = vadd.f32 %v365, %v877
        %v879 = vpop.f32.mrf.mxu0
        %v880 = vadd.f32 %v369, %v879
        %v881 = vpop.f32.mrf.mxu0
        %v882 = vadd.f32 %v365, %v881
        %v883 = vpop.f32.mrf.mxu0
        %v884 = vadd.f32 %v369, %v883
        %885 = vmatprep.mubr.bf16.mxu0 0
        %886 = vmatmul.mubr.bf16.gmra.mxu0 %v441
        %v887 = vpop.f32.mrf.mxu0
        %v888 = vadd.f32 %v365, %v887
        %v889 = vpop.f32.mrf.mxu0
        %v890 = vadd.f32 %v369, %v889
        %v891 = vpop.f32.mrf.mxu0
        %v892 = vadd.f32 %v365, %v891
        %v893 = vpop.f32.mrf.mxu0
        %v894 = vadd.f32 %v369, %v893
        %895 = vmatprep.mubr.bf16.mxu0 0
        %896 = vmatmul.mubr.bf16.gmra.mxu0 %v442
        %v897 = vpop.f32.mrf.mxu0
        %v898 = vadd.f32 %v365, %v897
        %v899 = vpop.f32.mrf.mxu0
        %v900 = vadd.f32 %v369, %v899
        %v901 = vpop.f32.mrf.mxu0
        %v902 = vadd.f32 %v365, %v901
        %v903 = vpop.f32.mrf.mxu0
        %v904 = vadd.f32 %v369, %v903
        %905 = vmatprep.mubr.bf16.mxu0 0
        %906 = vmatmul.mubr.bf16.gmra.mxu0 %v443
        %v907 = vpop.f32.mrf.mxu0
        %v908 = vadd.f32 %v365, %v907
        %v909 = vpop.f32.mrf.mxu0
        %v910 = vadd.f32 %v369, %v909
        %v911 = vpop.f32.mrf.mxu0
        %v912 = vadd.f32 %v365, %v911
        %v913 = vpop.f32.mrf.mxu0
        %v914 = vadd.f32 %v369, %v913
        %915 = vmatprep.mubr.bf16.mxu0 0
        %916 = vmatmul.mubr.bf16.gmra.mxu0 %v444
        %v917 = vpop.f32.mrf.mxu0
        %v918 = vadd.f32 %v365, %v917
        %v919 = vpop.f32.mrf.mxu0
        %v920 = vadd.f32 %v369, %v919
        %v921 = vpop.f32.mrf.mxu0
        %v922 = vadd.f32 %v365, %v921
        %v923 = vpop.f32.mrf.mxu0
        %v924 = vadd.f32 %v369, %v923
        %925 = vmatprep.mubr.bf16.mxu0 0
        %926 = vmatmul.mubr.bf16.gmra.mxu0 %v445
        %v927 = vpop.f32.mrf.mxu0
        %v928 = vadd.f32 %v365, %v927
        %v929 = vpop.f32.mrf.mxu0
        %v930 = vadd.f32 %v369, %v929
        %v931 = vpop.f32.mrf.mxu0
        %v932 = vadd.f32 %v365, %v931
        %v933 = vpop.f32.mrf.mxu0
        %v934 = vadd.f32 %v369, %v933
        %935 = vmatprep.mubr.bf16.mxu0 0
        %936 = vmatmul.mubr.bf16.gmra.mxu0 %v446
        %v937 = vpop.f32.mrf.mxu0
        %v938 = vadd.f32 %v365, %v937
        %v939 = vpop.f32.mrf.mxu0
        %v940 = vadd.f32 %v369, %v939
        %v941 = vpop.f32.mrf.mxu0
        %v942 = vadd.f32 %v365, %v941
        %v943 = vpop.f32.mrf.mxu0
        %v944 = vadd.f32 %v369, %v943
        %945 = vmatprep.mubr.bf16.mxu0 0
        %946 = vmatmul.mubr.bf16.gmra.mxu0 %v447
        %v947 = vpop.f32.mrf.mxu0
        %v948 = vadd.f32 %v365, %v947
        %v949 = vpop.f32.mrf.mxu0
        %v950 = vadd.f32 %v369, %v949
        %v951 = vpop.f32.mrf.mxu0
        %v952 = vadd.f32 %v365, %v951
        %v953 = vpop.f32.mrf.mxu0
        %v954 = vadd.f32 %v369, %v953
        %955 = vmatprep.mubr.bf16.mxu0 0
        %956 = vmatmul.mubr.bf16.gmra.mxu0 %v448
        %v957 = vpop.f32.mrf.mxu0
        %v958 = vadd.f32 %v365, %v957
        %v959 = vpop.f32.mrf.mxu0
        %v960 = vadd.f32 %v369, %v959
        %v961 = vpop.f32.mrf.mxu0
        %v962 = vadd.f32 %v365, %v961
        %v963 = vpop.f32.mrf.mxu0
        %v964 = vadd.f32 %v369, %v963
        %965 = vmatprep.mubr.bf16.mxu0 0
        %966 = vmatmul.mubr.bf16.gmra.mxu0 %v449
        %v967 = vpop.f32.mrf.mxu0
        %v968 = vadd.f32 %v365, %v967
        %v969 = vpop.f32.mrf.mxu0
        %v970 = vadd.f32 %v369, %v969
        %v971 = vpop.f32.mrf.mxu0
        %v972 = vadd.f32 %v365, %v971
        %v973 = vpop.f32.mrf.mxu0
        %v974 = vadd.f32 %v369, %v973
        %975 = vmatprep.mubr.bf16.mxu0 0
        %976 = vmatmul.mubr.bf16.gmra.mxu0 %v450
        %v977 = vpop.f32.mrf.mxu0
        %v978 = vadd.f32 %v365, %v977
        %v979 = vpop.f32.mrf.mxu0
        %v980 = vadd.f32 %v369, %v979
        %v981 = vpop.f32.mrf.mxu0
        %v982 = vadd.f32 %v365, %v981
        %v983 = vpop.f32.mrf.mxu0
        %v984 = vadd.f32 %v369, %v983
        %985 = vmatprep.mubr.bf16.mxu0 0
        %986 = vmatmul.mubr.bf16.gmra.mxu0 %v451
        %v987 = vpop.f32.mrf.mxu0
        %v988 = vadd.f32 %v365, %v987
        %v989 = vpop.f32.mrf.mxu0
        %v990 = vadd.f32 %v369, %v989
        %v991 = vpop.f32.mrf.mxu0
        %v992 = vadd.f32 %v365, %v991
        %v993 = vpop.f32.mrf.mxu0
        %v994 = vadd.f32 %v369, %v993
        %995 = vmatprep.mubr.bf16.mxu0 0
        %996 = vmatmul.mubr.bf16.gmra.mxu0 %v452
        %v997 = vpop.f32.mrf.mxu0
        %v998 = vadd.f32 %v365, %v997
        %v999 = vpop.f32.mrf.mxu0
        %v1000 = vadd.f32 %v369, %v999
        %v1001 = vpop.f32.mrf.mxu0
        %v1002 = vadd.f32 %v365, %v1001
        %v1003 = vpop.f32.mrf.mxu0
        %v1004 = vadd.f32 %v369, %v1003
        %1005 = vmatprep.mubr.bf16.mxu0 0
        %1006 = vmatmul.mubr.bf16.gmra.mxu0 %v453
        %v1007 = vpop.f32.mrf.mxu0
        %v1008 = vadd.f32 %v365, %v1007
        %v1009 = vpop.f32.mrf.mxu0
        %v1010 = vadd.f32 %v369, %v1009
        %v1011 = vpop.f32.mrf.mxu0
        %v1012 = vadd.f32 %v365, %v1011
        %v1013 = vpop.f32.mrf.mxu0
        %v1014 = vadd.f32 %v369, %v1013
        %1015 = vdwg.mxu0
        %v1016 = vmul.f32 %v665, 0.5
        %v1017 = vmul.f32 %v667, 0.5
        %v1018 = vmul.f32 %v858, 0.5
        %v1019 = vmul.f32 %v860, 0.5
        %v1020 = vmul.f32 %v669, 0.5
        %v1021 = vmul.f32 %v671, 0.5
        %v1022 = vmul.f32 %v862, 0.5
        %v1023 = vmul.f32 %v864, 0.5
        %v1024 = vmul.f32 %v675, 0.5
        %v1025 = vmul.f32 %v677, 0.5
        %v1026 = vmul.f32 %v868, 0.5
        %v1027 = vmul.f32 %v870, 0.5
        %v1028 = vmul.f32 %v679, 0.5
        %v1029 = vmul.f32 %v681, 0.5
        %v1030 = vmul.f32 %v872, 0.5
        %v1031 = vmul.f32 %v874, 0.5
        %v1032 = vmul.f32 %v685, 0.5
        %v1033 = vmul.f32 %v687, 0.5
        %v1034 = vmul.f32 %v878, 0.5
        %v1035 = vmul.f32 %v880, 0.5
        %v1036 = vmul.f32 %v689, 0.5
        %v1037 = vmul.f32 %v691, 0.5
        %v1038 = vmul.f32 %v882, 0.5
        %v1039 = vmul.f32 %v884, 0.5
        %v1040 = vmul.f32 %v695, 0.5
        %v1041 = vmul.f32 %v697, 0.5
        %v1042 = vmul.f32 %v888, 0.5
        %v1043 = vmul.f32 %v890, 0.5
        %v1044 = vmul.f32 %v699, 0.5
        %v1045 = vmul.f32 %v701, 0.5
        %v1046 = vmul.f32 %v892, 0.5
        %v1047 = vmul.f32 %v894, 0.5
        %v1048 = vmul.f32 %v705, 0.5
        %v1049 = vmul.f32 %v707, 0.5
        %v1050 = vmul.f32 %v898, 0.5
        %v1051 = vmul.f32 %v900, 0.5
        %v1052 = vmul.f32 %v709, 0.5
        %v1053 = vmul.f32 %v711, 0.5
        %v1054 = vmul.f32 %v902, 0.5
        %v1055 = vmul.f32 %v904, 0.5
        %v1056 = vmul.f32 %v715, 0.5
        %v1057 = vmul.f32 %v717, 0.5
        %v1058 = vmul.f32 %v908, 0.5
        %v1059 = vmul.f32 %v910, 0.5
        %v1060 = vmul.f32 %v719, 0.5
        %v1061 = vmul.f32 %v721, 0.5
        %v1062 = vmul.f32 %v912, 0.5
        %v1063 = vmul.f32 %v914, 0.5
        %v1064 = vmul.f32 %v725, 0.5
        %v1065 = vmul.f32 %v727, 0.5
        %v1066 = vmul.f32 %v918, 0.5
        %v1067 = vmul.f32 %v920, 0.5
        %v1068 = vmul.f32 %v729, 0.5
        %v1069 = vmul.f32 %v731, 0.5
        %v1070 = vmul.f32 %v922, 0.5
        %v1071 = vmul.f32 %v924, 0.5
        %v1072 = vmul.f32 %v735, 0.5
        %v1073 = vmul.f32 %v737, 0.5
        %v1074 = vmul.f32 %v928, 0.5
        %v1075 = vmul.f32 %v930, 0.5
        %v1076 = vmul.f32 %v739, 0.5
        %v1077 = vmul.f32 %v741, 0.5
        %v1078 = vmul.f32 %v932, 0.5
        %v1079 = vmul.f32 %v934, 0.5
        %v1080 = vmul.f32 %v745, 0.5
        %v1081 = vmul.f32 %v747, 0.5
        %v1082 = vmul.f32 %v938, 0.5
        %v1083 = vmul.f32 %v940, 0.5
        %v1084 = vmul.f32 %v749, 0.5
        %v1085 = vmul.f32 %v751, 0.5
        %v1086 = vmul.f32 %v942, 0.5
        %v1087 = vmul.f32 %v944, 0.5
        %v1088 = vmul.f32 %v755, 0.5
        %v1089 = vmul.f32 %v757, 0.5
        %v1090 = vmul.f32 %v948, 0.5
        %v1091 = vmul.f32 %v950, 0.5
        %v1092 = vmul.f32 %v759, 0.5
        %v1093 = vmul.f32 %v761, 0.5
        %v1094 = vmul.f32 %v952, 0.5
        %v1095 = vmul.f32 %v954, 0.5
        %v1096 = vmul.f32 %v765, 0.5
        %v1097 = vmul.f32 %v767, 0.5
        %v1098 = vmul.f32 %v958, 0.5
        %v1099 = vmul.f32 %v960, 0.5
        %v1100 = vmul.f32 %v769, 0.5
        %v1101 = vmul.f32 %v771, 0.5
        %v1102 = vmul.f32 %v962, 0.5
        %v1103 = vmul.f32 %v964, 0.5
        %v1104 = vmul.f32 %v775, 0.5
        %v1105 = vmul.f32 %v777, 0.5
        %v1106 = vmul.f32 %v968, 0.5
        %v1107 = vmul.f32 %v970, 0.5
        %v1108 = vmul.f32 %v779, 0.5
        %v1109 = vmul.f32 %v781, 0.5
        %v1110 = vmul.f32 %v972, 0.5
        %v1111 = vmul.f32 %v974, 0.5
        %v1112 = vmul.f32 %v785, 0.5
        %v1113 = vmul.f32 %v787, 0.5
        %v1114 = vmul.f32 %v978, 0.5
        %v1115 = vmul.f32 %v980, 0.5
        %v1116 = vmul.f32 %v789, 0.5
        %v1117 = vmul.f32 %v791, 0.5
        %v1118 = vmul.f32 %v982, 0.5
        %v1119 = vmul.f32 %v984, 0.5
        %v1120 = vmul.f32 %v795, 0.5
        %v1121 = vmul.f32 %v797, 0.5
        %v1122 = vmul.f32 %v988, 0.5
        %v1123 = vmul.f32 %v990, 0.5
        %v1124 = vmul.f32 %v799, 0.5
        %v1125 = vmul.f32 %v801, 0.5
        %v1126 = vmul.f32 %v992, 0.5
        %v1127 = vmul.f32 %v994, 0.5
        %v1128 = vmul.f32 %v805, 0.5
        %v1129 = vmul.f32 %v807, 0.5
        %v1130 = vmul.f32 %v998, 0.5
        %v1131 = vmul.f32 %v1000, 0.5
        %v1132 = vmul.f32 %v809, 0.5
        %v1133 = vmul.f32 %v811, 0.5
        %v1134 = vmul.f32 %v1002, 0.5
        %v1135 = vmul.f32 %v1004, 0.5
        %v1136 = vmul.f32 %v815, 0.5
        %v1137 = vmul.f32 %v817, 0.5
        %v1138 = vmul.f32 %v1008, 0.5
        %v1139 = vmul.f32 %v1010, 0.5
        %v1140 = vmul.f32 %v819, 0.5
        %v1141 = vmul.f32 %v821, 0.5
        %v1142 = vmul.f32 %v1012, 0.5
        %v1143 = vmul.f32 %v1014, 0.5
        %v1144 = vmul.f32 %v665, 0.70710677
        %v1145 = vmul.f32 %v667, 0.70710677
        %v1146 = vmul.f32 %v858, 0.70710677
        %v1147 = vmul.f32 %v860, 0.70710677
        %v1148 = vmul.f32 %v669, 0.70710677
        %v1149 = vmul.f32 %v671, 0.70710677
        %v1150 = vmul.f32 %v862, 0.70710677
        %v1151 = vmul.f32 %v864, 0.70710677
        %v1152 = vmul.f32 %v675, 0.70710677
        %v1153 = vmul.f32 %v677, 0.70710677
        %v1154 = vmul.f32 %v868, 0.70710677
        %v1155 = vmul.f32 %v870, 0.70710677
        %v1156 = vmul.f32 %v679, 0.70710677
        %v1157 = vmul.f32 %v681, 0.70710677
        %v1158 = vmul.f32 %v872, 0.70710677
        %v1159 = vmul.f32 %v874, 0.70710677
        %v1160 = vmul.f32 %v685, 0.70710677
        %v1161 = vmul.f32 %v687, 0.70710677
        %v1162 = vmul.f32 %v878, 0.70710677
        %v1163 = vmul.f32 %v880, 0.70710677
        %v1164 = vmul.f32 %v689, 0.70710677
        %v1165 = vmul.f32 %v691, 0.70710677
        %v1166 = vmul.f32 %v882, 0.70710677
        %v1167 = vmul.f32 %v884, 0.70710677
        %v1168 = vmul.f32 %v695, 0.70710677
        %v1169 = vmul.f32 %v697, 0.70710677
        %v1170 = vmul.f32 %v888, 0.70710677
        %v1171 = vmul.f32 %v890, 0.70710677
        %v1172 = vmul.f32 %v699, 0.70710677
        %v1173 = vmul.f32 %v701, 0.70710677
        %v1174 = vmul.f32 %v892, 0.70710677
        %v1175 = vmul.f32 %v894, 0.70710677
        %v1176 = vmul.f32 %v705, 0.70710677
        %v1177 = vmul.f32 %v707, 0.70710677
        %v1178 = vmul.f32 %v898, 0.70710677
        %v1179 = vmul.f32 %v900, 0.70710677
        %v1180 = vmul.f32 %v709, 0.70710677
        %v1181 = vmul.f32 %v711, 0.70710677
        %v1182 = vmul.f32 %v902, 0.70710677
        %v1183 = vmul.f32 %v904, 0.70710677
        %v1184 = vmul.f32 %v715, 0.70710677
        %v1185 = vmul.f32 %v717, 0.70710677
        %v1186 = vmul.f32 %v908, 0.70710677
        %v1187 = vmul.f32 %v910, 0.70710677
        %v1188 = vmul.f32 %v719, 0.70710677
        %v1189 = vmul.f32 %v721, 0.70710677
        %v1190 = vmul.f32 %v912, 0.70710677
        %v1191 = vmul.f32 %v914, 0.70710677
        %v1192 = vmul.f32 %v725, 0.70710677
        %v1193 = vmul.f32 %v727, 0.70710677
        %v1194 = vmul.f32 %v918, 0.70710677
        %v1195 = vmul.f32 %v920, 0.70710677
        %v1196 = vmul.f32 %v729, 0.70710677
        %v1197 = vmul.f32 %v731, 0.70710677
        %v1198 = vmul.f32 %v922, 0.70710677
        %v1199 = vmul.f32 %v924, 0.70710677
        %v1200 = vmul.f32 %v735, 0.70710677
        %v1201 = vmul.f32 %v737, 0.70710677
        %v1202 = vmul.f32 %v928, 0.70710677
        %v1203 = vmul.f32 %v930, 0.70710677
        %v1204 = vmul.f32 %v739, 0.70710677
        %v1205 = vmul.f32 %v741, 0.70710677
        %v1206 = vmul.f32 %v932, 0.70710677
        %v1207 = vmul.f32 %v934, 0.70710677
        %v1208 = vmul.f32 %v745, 0.70710677
        %v1209 = vmul.f32 %v747, 0.70710677
        %v1210 = vmul.f32 %v938, 0.70710677
        %v1211 = vmul.f32 %v940, 0.70710677
        %v1212 = vmul.f32 %v749, 0.70710677
        %v1213 = vmul.f32 %v751, 0.70710677
        %v1214 = vmul.f32 %v942, 0.70710677
        %v1215 = vmul.f32 %v944, 0.70710677
        %v1216 = vmul.f32 %v755, 0.70710677
        %v1217 = vmul.f32 %v757, 0.70710677
        %v1218 = vmul.f32 %v948, 0.70710677
        %v1219 = vmul.f32 %v950, 0.70710677
        %v1220 = vmul.f32 %v759, 0.70710677
        %v1221 = vmul.f32 %v761, 0.70710677
        %v1222 = vmul.f32 %v952, 0.70710677
        %v1223 = vmul.f32 %v954, 0.70710677
        %v1224 = vmul.f32 %v765, 0.70710677
        %v1225 = vmul.f32 %v767, 0.70710677
        %v1226 = vmul.f32 %v958, 0.70710677
        %v1227 = vmul.f32 %v960, 0.70710677
        %v1228 = vmul.f32 %v769, 0.70710677
        %v1229 = vmul.f32 %v771, 0.70710677
        %v1230 = vmul.f32 %v962, 0.70710677
        %v1231 = vmul.f32 %v964, 0.70710677
        %v1232 = vmul.f32 %v775, 0.70710677
        %v1233 = vmul.f32 %v777, 0.70710677
        %v1234 = vmul.f32 %v968, 0.70710677
        %v1235 = vmul.f32 %v970, 0.70710677
        %v1236 = vmul.f32 %v779, 0.70710677
        %v1237 = vmul.f32 %v781, 0.70710677
        %v1238 = vmul.f32 %v972, 0.70710677
        %v1239 = vmul.f32 %v974, 0.70710677
        %v1240 = vmul.f32 %v785, 0.70710677
        %v1241 = vmul.f32 %v787, 0.70710677
        %v1242 = vmul.f32 %v978, 0.70710677
        %v1243 = vmul.f32 %v980, 0.70710677
        %v1244 = vmul.f32 %v789, 0.70710677
        %v1245 = vmul.f32 %v791, 0.70710677
        %v1246 = vmul.f32 %v982, 0.70710677
        %v1247 = vmul.f32 %v984, 0.70710677
        %v1248 = vmul.f32 %v795, 0.70710677
        %v1249 = vmul.f32 %v797, 0.70710677
        %v1250 = vmul.f32 %v988, 0.70710677
        %v1251 = vmul.f32 %v990, 0.70710677
        %v1252 = vmul.f32 %v799, 0.70710677
        %v1253 = vmul.f32 %v801, 0.70710677
        %v1254 = vmul.f32 %v992, 0.70710677
        %v1255 = vmul.f32 %v994, 0.70710677
        %v1256 = vmul.f32 %v805, 0.70710677
        %v1257 = vmul.f32 %v807, 0.70710677
        %v1258 = vmul.f32 %v998, 0.70710677
        %v1259 = vmul.f32 %v1000, 0.70710677
        %v1260 = vmul.f32 %v809, 0.70710677
        %v1261 = vmul.f32 %v811, 0.70710677
        %v1262 = vmul.f32 %v1002, 0.70710677
        %v1263 = vmul.f32 %v1004, 0.70710677
        %v1264 = vmul.f32 %v815, 0.70710677
        %v1265 = vmul.f32 %v817, 0.70710677
        %v1266 = vmul.f32 %v1008, 0.70710677
        %v1267 = vmul.f32 %v1010, 0.70710677
        %v1268 = vmul.f32 %v819, 0.70710677
        %v1269 = vmul.f32 %v821, 0.70710677
        %v1270 = vmul.f32 %v1012, 0.70710677
        %v1271 = vmul.f32 %v1014, 0.70710677
        %v1272 = verf.f32.pop %v1144
        %v1273 = verf.f32.pop %v1145
        %v1274 = verf.f32.pop %v1146
        %v1275 = verf.f32.pop %v1147
        %v1276 = verf.f32.pop %v1148
        %v1277 = verf.f32.pop %v1149
        %v1278 = verf.f32.pop %v1150
        %v1279 = verf.f32.pop %v1151
        %v1280 = verf.f32.pop %v1152
        %v1281 = verf.f32.pop %v1153
        %v1282 = verf.f32.pop %v1154
        %v1283 = verf.f32.pop %v1155
        %v1284 = verf.f32.pop %v1156
        %v1285 = verf.f32.pop %v1157
        %v1286 = verf.f32.pop %v1158
        %v1287 = verf.f32.pop %v1159
        %v1288 = verf.f32.pop %v1160
        %v1289 = verf.f32.pop %v1161
        %v1290 = verf.f32.pop %v1162
        %v1291 = verf.f32.pop %v1163
        %v1292 = verf.f32.pop %v1164
        %v1293 = verf.f32.pop %v1165
        %v1294 = verf.f32.pop %v1166
        %v1295 = verf.f32.pop %v1167
        %v1296 = verf.f32.pop %v1168
        %v1297 = verf.f32.pop %v1169
        %v1298 = verf.f32.pop %v1170
        %v1299 = verf.f32.pop %v1171
        %v1300 = verf.f32.pop %v1172
        %v1301 = verf.f32.pop %v1173
        %v1302 = verf.f32.pop %v1174
        %v1303 = verf.f32.pop %v1175
        %v1304 = verf.f32.pop %v1176
        %v1305 = verf.f32.pop %v1177
        %v1306 = verf.f32.pop %v1178
        %v1307 = verf.f32.pop %v1179
        %v1308 = verf.f32.pop %v1180
        %v1309 = verf.f32.pop %v1181
        %v1310 = verf.f32.pop %v1182
        %v1311 = verf.f32.pop %v1183
        %v1312 = verf.f32.pop %v1184
        %v1313 = verf.f32.pop %v1185
        %v1314 = verf.f32.pop %v1186
        %v1315 = verf.f32.pop %v1187
        %v1316 = verf.f32.pop %v1188
        %v1317 = verf.f32.pop %v1189
        %v1318 = verf.f32.pop %v1190
        %v1319 = verf.f32.pop %v1191
        %v1320 = verf.f32.pop %v1192
        %v1321 = verf.f32.pop %v1193
        %v1322 = verf.f32.pop %v1194
        %v1323 = verf.f32.pop %v1195
        %v1324 = verf.f32.pop %v1196
        %v1325 = verf.f32.pop %v1197
        %v1326 = verf.f32.pop %v1198
        %v1327 = verf.f32.pop %v1199
        %v1328 = verf.f32.pop %v1200
        %v1329 = verf.f32.pop %v1201
        %v1330 = verf.f32.pop %v1202
        %v1331 = verf.f32.pop %v1203
        %v1332 = verf.f32.pop %v1204
        %v1333 = verf.f32.pop %v1205
        %v1334 = verf.f32.pop %v1206
        %v1335 = verf.f32.pop %v1207
        %v1336 = verf.f32.pop %v1208
        %v1337 = verf.f32.pop %v1209
        %v1338 = verf.f32.pop %v1210
        %v1339 = verf.f32.pop %v1211
        %v1340 = verf.f32.pop %v1212
        %v1341 = verf.f32.pop %v1213
        %v1342 = verf.f32.pop %v1214
        %v1343 = verf.f32.pop %v1215
        %v1344 = verf.f32.pop %v1216
        %v1345 = verf.f32.pop %v1217
        %v1346 = verf.f32.pop %v1218
        %v1347 = verf.f32.pop %v1219
        %v1348 = verf.f32.pop %v1220
        %v1349 = verf.f32.pop %v1221
        %v1350 = verf.f32.pop %v1222
        %v1351 = verf.f32.pop %v1223
        %v1352 = verf.f32.pop %v1224
        %v1353 = verf.f32.pop %v1225
        %v1354 = verf.f32.pop %v1226
        %v1355 = verf.f32.pop %v1227
        %v1356 = verf.f32.pop %v1228
        %v1357 = verf.f32.pop %v1229
        %v1358 = verf.f32.pop %v1230
        %v1359 = verf.f32.pop %v1231
        %v1360 = verf.f32.pop %v1232
        %v1361 = verf.f32.pop %v1233
        %v1362 = verf.f32.pop %v1234
        %v1363 = verf.f32.pop %v1235
        %v1364 = verf.f32.pop %v1236
        %v1365 = verf.f32.pop %v1237
        %v1366 = verf.f32.pop %v1238
        %v1367 = verf.f32.pop %v1239
        %v1368 = verf.f32.pop %v1240
        %v1369 = verf.f32.pop %v1241
        %v1370 = verf.f32.pop %v1242
        %v1371 = verf.f32.pop %v1243
        %v1372 = verf.f32.pop %v1244
        %v1373 = verf.f32.pop %v1245
        %v1374 = verf.f32.pop %v1246
        %v1375 = verf.f32.pop %v1247
        %v1376 = verf.f32.pop %v1248
        %v1377 = verf.f32.pop %v1249
        %v1378 = verf.f32.pop %v1250
        %v1379 = verf.f32.pop %v1251
        %v1380 = verf.f32.pop %v1252
        %v1381 = verf.f32.pop %v1253
        %v1382 = verf.f32.pop %v1254
        %v1383 = verf.f32.pop %v1255
        %v1384 = verf.f32.pop %v1256
        %v1385 = verf.f32.pop %v1257
        %v1386 = verf.f32.pop %v1258
        %v1387 = verf.f32.pop %v1259
        %v1388 = verf.f32.pop %v1260
        %v1389 = verf.f32.pop %v1261
        %v1390 = verf.f32.pop %v1262
        %v1391 = verf.f32.pop %v1263
        %v1392 = verf.f32.pop %v1264
        %v1393 = verf.f32.pop %v1265
        %v1394 = verf.f32.pop %v1266
        %v1395 = verf.f32.pop %v1267
        %v1396 = verf.f32.pop %v1268
        %v1397 = verf.f32.pop %v1269
        %v1398 = verf.f32.pop %v1270
        %v1399 = verf.f32.pop %v1271
        %v1400 = vadd.f32 %v1272, 1.0
        %v1401 = vadd.f32 %v1273, 1.0
        %v1402 = vadd.f32 %v1274, 1.0
        %v1403 = vadd.f32 %v1275, 1.0
        %v1404 = vadd.f32 %v1276, 1.0
        %v1405 = vadd.f32 %v1277, 1.0
        %v1406 = vadd.f32 %v1278, 1.0
        %v1407 = vadd.f32 %v1279, 1.0
        %v1408 = vadd.f32 %v1280, 1.0
        %v1409 = vadd.f32 %v1281, 1.0
        %v1410 = vadd.f32 %v1282, 1.0
        %v1411 = vadd.f32 %v1283, 1.0
        %v1412 = vadd.f32 %v1284, 1.0
        %v1413 = vadd.f32 %v1285, 1.0
        %v1414 = vadd.f32 %v1286, 1.0
        %v1415 = vadd.f32 %v1287, 1.0
        %v1416 = vadd.f32 %v1288, 1.0
        %v1417 = vadd.f32 %v1289, 1.0
        %v1418 = vadd.f32 %v1290, 1.0
        %v1419 = vadd.f32 %v1291, 1.0
        %v1420 = vadd.f32 %v1292, 1.0
        %v1421 = vadd.f32 %v1293, 1.0
        %v1422 = vadd.f32 %v1294, 1.0
        %v1423 = vadd.f32 %v1295, 1.0
        %v1424 = vadd.f32 %v1296, 1.0
        %v1425 = vadd.f32 %v1297, 1.0
        %v1426 = vadd.f32 %v1298, 1.0
        %v1427 = vadd.f32 %v1299, 1.0
        %v1428 = vadd.f32 %v1300, 1.0
        %v1429 = vadd.f32 %v1301, 1.0
        %v1430 = vadd.f32 %v1302, 1.0
        %v1431 = vadd.f32 %v1303, 1.0
        %v1432 = vadd.f32 %v1304, 1.0
        %v1433 = vadd.f32 %v1305, 1.0
        %v1434 = vadd.f32 %v1306, 1.0
        %v1435 = vadd.f32 %v1307, 1.0
        %v1436 = vadd.f32 %v1308, 1.0
        %v1437 = vadd.f32 %v1309, 1.0
        %v1438 = vadd.f32 %v1310, 1.0
        %v1439 = vadd.f32 %v1311, 1.0
        %v1440 = vadd.f32 %v1312, 1.0
        %v1441 = vadd.f32 %v1313, 1.0
        %v1442 = vadd.f32 %v1314, 1.0
        %v1443 = vadd.f32 %v1315, 1.0
        %v1444 = vadd.f32 %v1316, 1.0
        %v1445 = vadd.f32 %v1317, 1.0
        %v1446 = vadd.f32 %v1318, 1.0
        %v1447 = vadd.f32 %v1319, 1.0
        %v1448 = vadd.f32 %v1320, 1.0
        %v1449 = vadd.f32 %v1321, 1.0
        %v1450 = vadd.f32 %v1322, 1.0
        %v1451 = vadd.f32 %v1323, 1.0
        %v1452 = vadd.f32 %v1324, 1.0
        %v1453 = vadd.f32 %v1325, 1.0
        %v1454 = vadd.f32 %v1326, 1.0
        %v1455 = vadd.f32 %v1327, 1.0
        %v1456 = vadd.f32 %v1328, 1.0
        %v1457 = vadd.f32 %v1329, 1.0
        %v1458 = vadd.f32 %v1330, 1.0
        %v1459 = vadd.f32 %v1331, 1.0
        %v1460 = vadd.f32 %v1332, 1.0
        %v1461 = vadd.f32 %v1333, 1.0
        %v1462 = vadd.f32 %v1334, 1.0
        %v1463 = vadd.f32 %v1335, 1.0
        %v1464 = vadd.f32 %v1336, 1.0
        %v1465 = vadd.f32 %v1337, 1.0
        %v1466 = vadd.f32 %v1338, 1.0
        %v1467 = vadd.f32 %v1339, 1.0
        %v1468 = vadd.f32 %v1340, 1.0
        %v1469 = vadd.f32 %v1341, 1.0
        %v1470 = vadd.f32 %v1342, 1.0
        %v1471 = vadd.f32 %v1343, 1.0
        %v1472 = vadd.f32 %v1344, 1.0
        %v1473 = vadd.f32 %v1345, 1.0
        %v1474 = vadd.f32 %v1346, 1.0
        %v1475 = vadd.f32 %v1347, 1.0
        %v1476 = vadd.f32 %v1348, 1.0
        %v1477 = vadd.f32 %v1349, 1.0
        %v1478 = vadd.f32 %v1350, 1.0
        %v1479 = vadd.f32 %v1351, 1.0
        %v1480 = vadd.f32 %v1352, 1.0
        %v1481 = vadd.f32 %v1353, 1.0
        %v1482 = vadd.f32 %v1354, 1.0
        %v1483 = vadd.f32 %v1355, 1.0
        %v1484 = vadd.f32 %v1356, 1.0
        %v1485 = vadd.f32 %v1357, 1.0
        %v1486 = vadd.f32 %v1358, 1.0
        %v1487 = vadd.f32 %v1359, 1.0
        %v1488 = vadd.f32 %v1360, 1.0
        %v1489 = vadd.f32 %v1361, 1.0
        %v1490 = vadd.f32 %v1362, 1.0
        %v1491 = vadd.f32 %v1363, 1.0
        %v1492 = vadd.f32 %v1364, 1.0
        %v1493 = vadd.f32 %v1365, 1.0
        %v1494 = vadd.f32 %v1366, 1.0
        %v1495 = vadd.f32 %v1367, 1.0
        %v1496 = vadd.f32 %v1368, 1.0
        %v1497 = vadd.f32 %v1369, 1.0
        %v1498 = vadd.f32 %v1370, 1.0
        %v1499 = vadd.f32 %v1371, 1.0
        %v1500 = vadd.f32 %v1372, 1.0
        %v1501 = vadd.f32 %v1373, 1.0
        %v1502 = vadd.f32 %v1374, 1.0
        %v1503 = vadd.f32 %v1375, 1.0
        %v1504 = vadd.f32 %v1376, 1.0
        %v1505 = vadd.f32 %v1377, 1.0
        %v1506 = vadd.f32 %v1378, 1.0
        %v1507 = vadd.f32 %v1379, 1.0
        %v1508 = vadd.f32 %v1380, 1.0
        %v1509 = vadd.f32 %v1381, 1.0
        %v1510 = vadd.f32 %v1382, 1.0
        %v1511 = vadd.f32 %v1383, 1.0
        %v1512 = vadd.f32 %v1384, 1.0
        %v1513 = vadd.f32 %v1385, 1.0
        %v1514 = vadd.f32 %v1386, 1.0
        %v1515 = vadd.f32 %v1387, 1.0
        %v1516 = vadd.f32 %v1388, 1.0
        %v1517 = vadd.f32 %v1389, 1.0
        %v1518 = vadd.f32 %v1390, 1.0
        %v1519 = vadd.f32 %v1391, 1.0
        %v1520 = vadd.f32 %v1392, 1.0
        %v1521 = vadd.f32 %v1393, 1.0
        %v1522 = vadd.f32 %v1394, 1.0
        %v1523 = vadd.f32 %v1395, 1.0
        %v1524 = vadd.f32 %v1396, 1.0
        %v1525 = vadd.f32 %v1397, 1.0
        %v1526 = vadd.f32 %v1398, 1.0
        %v1527 = vadd.f32 %v1399, 1.0
        %v1528 = vmul.f32 %v1016, %v1400
        %v1529 = vmul.f32 %v1017, %v1401
        %v1530 = vmul.f32 %v1018, %v1402
        %v1531 = vmul.f32 %v1019, %v1403
        %v1532 = vmul.f32 %v1020, %v1404
        %v1533 = vmul.f32 %v1021, %v1405
        %v1534 = vmul.f32 %v1022, %v1406
        %v1535 = vmul.f32 %v1023, %v1407
        %v1536 = vmul.f32 %v1024, %v1408
        %v1537 = vmul.f32 %v1025, %v1409
        %v1538 = vmul.f32 %v1026, %v1410
        %v1539 = vmul.f32 %v1027, %v1411
        %v1540 = vmul.f32 %v1028, %v1412
        %v1541 = vmul.f32 %v1029, %v1413
        %v1542 = vmul.f32 %v1030, %v1414
        %v1543 = vmul.f32 %v1031, %v1415
        %v1544 = vmul.f32 %v1032, %v1416
        %v1545 = vmul.f32 %v1033, %v1417
        %v1546 = vmul.f32 %v1034, %v1418
        %v1547 = vmul.f32 %v1035, %v1419
        %v1548 = vmul.f32 %v1036, %v1420
        %v1549 = vmul.f32 %v1037, %v1421
        %v1550 = vmul.f32 %v1038, %v1422
        %v1551 = vmul.f32 %v1039, %v1423
        %v1552 = vmul.f32 %v1040, %v1424
        %v1553 = vmul.f32 %v1041, %v1425
        %v1554 = vmul.f32 %v1042, %v1426
        %v1555 = vmul.f32 %v1043, %v1427
        %v1556 = vmul.f32 %v1044, %v1428
        %v1557 = vmul.f32 %v1045, %v1429
        %v1558 = vmul.f32 %v1046, %v1430
        %v1559 = vmul.f32 %v1047, %v1431
        %v1560 = vmul.f32 %v1048, %v1432
        %v1561 = vmul.f32 %v1049, %v1433
        %v1562 = vmul.f32 %v1050, %v1434
        %v1563 = vmul.f32 %v1051, %v1435
        %v1564 = vmul.f32 %v1052, %v1436
        %v1565 = vmul.f32 %v1053, %v1437
        %v1566 = vmul.f32 %v1054, %v1438
        %v1567 = vmul.f32 %v1055, %v1439
        %v1568 = vmul.f32 %v1056, %v1440
        %v1569 = vmul.f32 %v1057, %v1441
        %v1570 = vmul.f32 %v1058, %v1442
        %v1571 = vmul.f32 %v1059, %v1443
        %v1572 = vmul.f32 %v1060, %v1444
        %v1573 = vmul.f32 %v1061, %v1445
        %v1574 = vmul.f32 %v1062, %v1446
        %v1575 = vmul.f32 %v1063, %v1447
        %v1576 = vmul.f32 %v1064, %v1448
        %v1577 = vmul.f32 %v1065, %v1449
        %v1578 = vmul.f32 %v1066, %v1450
        %v1579 = vmul.f32 %v1067, %v1451
        %v1580 = vmul.f32 %v1068, %v1452
        %v1581 = vmul.f32 %v1069, %v1453
        %v1582 = vmul.f32 %v1070, %v1454
        %v1583 = vmul.f32 %v1071, %v1455
        %v1584 = vmul.f32 %v1072, %v1456
        %v1585 = vmul.f32 %v1073, %v1457
        %v1586 = vmul.f32 %v1074, %v1458
        %v1587 = vmul.f32 %v1075, %v1459
        %v1588 = vmul.f32 %v1076, %v1460
        %v1589 = vmul.f32 %v1077, %v1461
        %v1590 = vmul.f32 %v1078, %v1462
        %v1591 = vmul.f32 %v1079, %v1463
        %v1592 = vmul.f32 %v1080, %v1464
        %v1593 = vmul.f32 %v1081, %v1465
        %v1594 = vmul.f32 %v1082, %v1466
        %v1595 = vmul.f32 %v1083, %v1467
        %v1596 = vmul.f32 %v1084, %v1468
        %v1597 = vmul.f32 %v1085, %v1469
        %v1598 = vmul.f32 %v1086, %v1470
        %v1599 = vmul.f32 %v1087, %v1471
        %v1600 = vmul.f32 %v1088, %v1472
        %v1601 = vmul.f32 %v1089, %v1473
        %v1602 = vmul.f32 %v1090, %v1474
        %v1603 = vmul.f32 %v1091, %v1475
        %v1604 = vmul.f32 %v1092, %v1476
        %v1605 = vmul.f32 %v1093, %v1477
        %v1606 = vmul.f32 %v1094, %v1478
        %v1607 = vmul.f32 %v1095, %v1479
        %v1608 = vmul.f32 %v1096, %v1480
        %v1609 = vmul.f32 %v1097, %v1481
        %v1610 = vmul.f32 %v1098, %v1482
        %v1611 = vmul.f32 %v1099, %v1483
        %v1612 = vmul.f32 %v1100, %v1484
        %v1613 = vmul.f32 %v1101, %v1485
        %v1614 = vmul.f32 %v1102, %v1486
        %v1615 = vmul.f32 %v1103, %v1487
        %v1616 = vmul.f32 %v1104, %v1488
        %v1617 = vmul.f32 %v1105, %v1489
        %v1618 = vmul.f32 %v1106, %v1490
        %v1619 = vmul.f32 %v1107, %v1491
        %v1620 = vmul.f32 %v1108, %v1492
        %v1621 = vmul.f32 %v1109, %v1493
        %v1622 = vmul.f32 %v1110, %v1494
        %v1623 = vmul.f32 %v1111, %v1495
        %v1624 = vmul.f32 %v1112, %v1496
        %v1625 = vmul.f32 %v1113, %v1497
        %v1626 = vmul.f32 %v1114, %v1498
        %v1627 = vmul.f32 %v1115, %v1499
        %v1628 = vmul.f32 %v1116, %v1500
        %v1629 = vmul.f32 %v1117, %v1501
        %v1630 = vmul.f32 %v1118, %v1502
        %v1631 = vmul.f32 %v1119, %v1503
        %v1632 = vmul.f32 %v1120, %v1504
        %v1633 = vmul.f32 %v1121, %v1505
        %v1634 = vmul.f32 %v1122, %v1506
        %v1635 = vmul.f32 %v1123, %v1507
        %v1636 = vmul.f32 %v1124, %v1508
        %v1637 = vmul.f32 %v1125, %v1509
        %v1638 = vmul.f32 %v1126, %v1510
        %v1639 = vmul.f32 %v1127, %v1511
        %v1640 = vmul.f32 %v1128, %v1512
        %v1641 = vmul.f32 %v1129, %v1513
        %v1642 = vmul.f32 %v1130, %v1514
        %v1643 = vmul.f32 %v1131, %v1515
        %v1644 = vmul.f32 %v1132, %v1516
        %v1645 = vmul.f32 %v1133, %v1517
        %v1646 = vmul.f32 %v1134, %v1518
        %v1647 = vmul.f32 %v1135, %v1519
        %v1648 = vmul.f32 %v1136, %v1520
        %v1649 = vmul.f32 %v1137, %v1521
        %v1650 = vmul.f32 %v1138, %v1522
        %v1651 = vmul.f32 %v1139, %v1523
        %v1652 = vmul.f32 %v1140, %v1524
        %v1653 = vmul.f32 %v1141, %v1525
        %v1654 = vmul.f32 %v1142, %v1526
        %v1655 = vmul.f32 %v1143, %v1527
        %v1656 = vpack.c.bf16 %v1532, %v1528
        %v1657 = vpack.c.bf16 %v1533, %v1529
        %v1658 = vpack.c.bf16 %v1534, %v1530
        %v1659 = vpack.c.bf16 %v1535, %v1531
        %v1660 = vpack.c.bf16 %v1540, %v1536
        %v1661 = vpack.c.bf16 %v1541, %v1537
        %v1662 = vpack.c.bf16 %v1542, %v1538
        %v1663 = vpack.c.bf16 %v1543, %v1539
        %v1664 = vpack.c.bf16 %v1548, %v1544
        %v1665 = vpack.c.bf16 %v1549, %v1545
        %v1666 = vpack.c.bf16 %v1550, %v1546
        %v1667 = vpack.c.bf16 %v1551, %v1547
        %v1668 = vpack.c.bf16 %v1556, %v1552
        %v1669 = vpack.c.bf16 %v1557, %v1553
        %v1670 = vpack.c.bf16 %v1558, %v1554
        %v1671 = vpack.c.bf16 %v1559, %v1555
        %v1672 = vpack.c.bf16 %v1564, %v1560
        %v1673 = vpack.c.bf16 %v1565, %v1561
        %v1674 = vpack.c.bf16 %v1566, %v1562
        %v1675 = vpack.c.bf16 %v1567, %v1563
        %v1676 = vpack.c.bf16 %v1572, %v1568
        %v1677 = vpack.c.bf16 %v1573, %v1569
        %v1678 = vpack.c.bf16 %v1574, %v1570
        %v1679 = vpack.c.bf16 %v1575, %v1571
        %v1680 = vpack.c.bf16 %v1580, %v1576
        %v1681 = vpack.c.bf16 %v1581, %v1577
        %v1682 = vpack.c.bf16 %v1582, %v1578
        %v1683 = vpack.c.bf16 %v1583, %v1579
        %v1684 = vpack.c.bf16 %v1588, %v1584
        %v1685 = vpack.c.bf16 %v1589, %v1585
        %v1686 = vpack.c.bf16 %v1590, %v1586
        %v1687 = vpack.c.bf16 %v1591, %v1587
        %v1688 = vpack.c.bf16 %v1596, %v1592
        %v1689 = vpack.c.bf16 %v1597, %v1593
        %v1690 = vpack.c.bf16 %v1598, %v1594
        %v1691 = vpack.c.bf16 %v1599, %v1595
        %v1692 = vpack.c.bf16 %v1604, %v1600
        %v1693 = vpack.c.bf16 %v1605, %v1601
        %v1694 = vpack.c.bf16 %v1606, %v1602
        %v1695 = vpack.c.bf16 %v1607, %v1603
        %v1696 = vpack.c.bf16 %v1612, %v1608
        %v1697 = vpack.c.bf16 %v1613, %v1609
        %v1698 = vpack.c.bf16 %v1614, %v1610
        %v1699 = vpack.c.bf16 %v1615, %v1611
        %v1700 = vpack.c.bf16 %v1620, %v1616
        %v1701 = vpack.c.bf16 %v1621, %v1617
        %v1702 = vpack.c.bf16 %v1622, %v1618
        %v1703 = vpack.c.bf16 %v1623, %v1619
        %v1704 = vpack.c.bf16 %v1628, %v1624
        %v1705 = vpack.c.bf16 %v1629, %v1625
        %v1706 = vpack.c.bf16 %v1630, %v1626
        %v1707 = vpack.c.bf16 %v1631, %v1627
        %v1708 = vpack.c.bf16 %v1636, %v1632
        %v1709 = vpack.c.bf16 %v1637, %v1633
        %v1710 = vpack.c.bf16 %v1638, %v1634
        %v1711 = vpack.c.bf16 %v1639, %v1635
        %v1712 = vpack.c.bf16 %v1644, %v1640
        %v1713 = vpack.c.bf16 %v1645, %v1641
        %v1714 = vpack.c.bf16 %v1646, %v1642
        %v1715 = vpack.c.bf16 %v1647, %v1643
        %v1716 = vpack.c.bf16 %v1652, %v1648
        %v1717 = vpack.c.bf16 %v1653, %v1649
        %v1718 = vpack.c.bf16 %v1654, %v1650
        %v1719 = vpack.c.bf16 %v1655, %v1651
        %v1720 = vld [vmem:[#allocation8] sm:$0xf]
        %v1721 = vld [vmem:[#allocation8 + $0x4] sm:$0xf]
        %v1722 = vld [vmem:[#allocation8 + $0x8] sm:$0xf]
        %v1723 = vld [vmem:[#allocation8 + $0xc] sm:$0xf]
        %v1724 = vld [vmem:[#allocation8 + $0x10] sm:$0xf]
        %v1725 = vld [vmem:[#allocation8 + $0x14] sm:$0xf]
        %v1726 = vld [vmem:[#allocation8 + $0x18] sm:$0xf]
        %v1727 = vld [vmem:[#allocation8 + $0x1c] sm:$0xf]
        %v1728 = vld [vmem:[#allocation8 + $0x20] sm:$0xf]
        %v1729 = vld [vmem:[#allocation8 + $0x24] sm:$0xf]
        %v1730 = vld [vmem:[#allocation8 + $0x28] sm:$0xf]
        %v1731 = vld [vmem:[#allocation8 + $0x2c] sm:$0xf]
        %v1732 = vld [vmem:[#allocation8 + $0x30] sm:$0xf]
        %v1733 = vld [vmem:[#allocation8 + $0x34] sm:$0xf]
        %v1734 = vld [vmem:[#allocation8 + $0x38] sm:$0xf]
        %v1735 = vld [vmem:[#allocation8 + $0x3c] sm:$0xf]
        %v1736 = vld [vmem:[#allocation8 + $0x40] sm:$0xf]
        %v1737 = vld [vmem:[#allocation8 + $0x44] sm:$0xf]
        %v1738 = vld [vmem:[#allocation8 + $0x48] sm:$0xf]
        %v1739 = vld [vmem:[#allocation8 + $0x4c] sm:$0xf]
        %v1740 = vld [vmem:[#allocation8 + $0x50] sm:$0xf]
        %v1741 = vld [vmem:[#allocation8 + $0x54] sm:$0xf]
        %v1742 = vld [vmem:[#allocation8 + $0x58] sm:$0xf]
        %v1743 = vld [vmem:[#allocation8 + $0x5c] sm:$0xf]
        %v1744 = vld [vmem:[#allocation8 + $0x60] sm:$0xf]
        %v1745 = vld [vmem:[#allocation8 + $0x64] sm:$0xf]
        %v1746 = vld [vmem:[#allocation8 + $0x68] sm:$0xf]
        %v1747 = vld [vmem:[#allocation8 + $0x6c] sm:$0xf]
        %v1748 = vld [vmem:[#allocation8 + $0x70] sm:$0xf]
        %v1749 = vld [vmem:[#allocation8 + $0x74] sm:$0xf]
        %v1750 = vld [vmem:[#allocation8 + $0x78] sm:$0xf]
        %v1751 = vld [vmem:[#allocation8 + $0x7c] sm:$0xf]
        %v1752 = vld [vmem:[#allocation8 + $0x80] sm:$0xf]
        %v1753 = vld [vmem:[#allocation8 + $0x84] sm:$0xf]
        %v1754 = vld [vmem:[#allocation8 + $0x88] sm:$0xf]
        %v1755 = vld [vmem:[#allocation8 + $0x8c] sm:$0xf]
        %v1756 = vld [vmem:[#allocation8 + $0x90] sm:$0xf]
        %v1757 = vld [vmem:[#allocation8 + $0x94] sm:$0xf]
        %v1758 = vld [vmem:[#allocation8 + $0x98] sm:$0xf]
        %v1759 = vld [vmem:[#allocation8 + $0x9c] sm:$0xf]
        %v1760 = vld [vmem:[#allocation8 + $0xa0] sm:$0xf]
        %v1761 = vld [vmem:[#allocation8 + $0xa4] sm:$0xf]
        %v1762 = vld [vmem:[#allocation8 + $0xa8] sm:$0xf]
        %v1763 = vld [vmem:[#allocation8 + $0xac] sm:$0xf]
        %v1764 = vld [vmem:[#allocation8 + $0xb0] sm:$0xf]
        %v1765 = vld [vmem:[#allocation8 + $0xb4] sm:$0xf]
        %v1766 = vld [vmem:[#allocation8 + $0xb8] sm:$0xf]
        %v1767 = vld [vmem:[#allocation8 + $0xbc] sm:$0xf]
        %v1768 = vld [vmem:[#allocation8 + $0xc0] sm:$0xf]
        %v1769 = vld [vmem:[#allocation8 + $0xc4] sm:$0xf]
        %v1770 = vld [vmem:[#allocation8 + $0xc8] sm:$0xf]
        %v1771 = vld [vmem:[#allocation8 + $0xcc] sm:$0xf]
        %v1772 = vld [vmem:[#allocation8 + $0xd0] sm:$0xf]
        %v1773 = vld [vmem:[#allocation8 + $0xd4] sm:$0xf]
        %v1774 = vld [vmem:[#allocation8 + $0xd8] sm:$0xf]
        %v1775 = vld [vmem:[#allocation8 + $0xdc] sm:$0xf]
        %v1776 = vld [vmem:[#allocation8 + $0xe0] sm:$0xf]
        %v1777 = vld [vmem:[#allocation8 + $0xe4] sm:$0xf]
        %v1778 = vld [vmem:[#allocation8 + $0xe8] sm:$0xf]
        %v1779 = vld [vmem:[#allocation8 + $0xec] sm:$0xf]
        %v1780 = vld [vmem:[#allocation8 + $0xf0] sm:$0xf]
        %v1781 = vld [vmem:[#allocation8 + $0xf4] sm:$0xf]
        %v1782 = vld [vmem:[#allocation8 + $0xf8] sm:$0xf]
        %v1783 = vld [vmem:[#allocation8 + $0xfc] sm:$0xf]
        %v1784 = vld [vmem:[%s4] sm:$0x1]
        %v1786 = vlaneseq
        %v1787 = vshrl.u32 %v1786, 7
        %v1788 = vsub.s32 0, %v1787
        %v1789 = vrot.slane %v1784, %v1788
        %v1855 = vunpack.c.l.b16 %v1720
        %v1856 = vunpack.c.l.b16 %v1721
        %v1857 = vunpack.c.l.b16 %v1722
        %v1858 = vunpack.c.l.b16 %v1723
        %v1859 = vunpack.c.l.b16 %v1724
        %v1860 = vunpack.c.l.b16 %v1725
        %v1861 = vunpack.c.l.b16 %v1726
        %v1862 = vunpack.c.l.b16 %v1727
        %v1863 = vunpack.c.l.b16 %v1728
        %v1864 = vunpack.c.l.b16 %v1729
        %v1865 = vunpack.c.l.b16 %v1730
        %v1866 = vunpack.c.l.b16 %v1731
        %v1867 = vunpack.c.l.b16 %v1732
        %v1868 = vunpack.c.l.b16 %v1733
        %v1869 = vunpack.c.l.b16 %v1734
        %v1870 = vunpack.c.l.b16 %v1735
        %v1871 = vunpack.c.l.b16 %v1736
        %v1872 = vunpack.c.l.b16 %v1737
        %v1873 = vunpack.c.l.b16 %v1738
        %v1874 = vunpack.c.l.b16 %v1739
        %v1875 = vunpack.c.l.b16 %v1740
        %v1876 = vunpack.c.l.b16 %v1741
        %v1877 = vunpack.c.l.b16 %v1742
        %v1878 = vunpack.c.l.b16 %v1743
        %v1879 = vunpack.c.l.b16 %v1744
        %v1880 = vunpack.c.l.b16 %v1745
        %v1881 = vunpack.c.l.b16 %v1746
        %v1882 = vunpack.c.l.b16 %v1747
        %v1883 = vunpack.c.l.b16 %v1748
        %v1884 = vunpack.c.l.b16 %v1749
        %v1885 = vunpack.c.l.b16 %v1750
        %v1886 = vunpack.c.l.b16 %v1751
        %v1887 = vunpack.c.l.b16 %v1752
        %v1888 = vunpack.c.l.b16 %v1753
        %v1889 = vunpack.c.l.b16 %v1754
        %v1890 = vunpack.c.l.b16 %v1755
        %v1891 = vunpack.c.l.b16 %v1756
        %v1892 = vunpack.c.l.b16 %v1757
        %v1893 = vunpack.c.l.b16 %v1758
        %v1894 = vunpack.c.l.b16 %v1759
        %v1895 = vunpack.c.l.b16 %v1760
        %v1896 = vunpack.c.l.b16 %v1761
        %v1897 = vunpack.c.l.b16 %v1762
        %v1898 = vunpack.c.l.b16 %v1763
        %v1899 = vunpack.c.l.b16 %v1764
        %v1900 = vunpack.c.l.b16 %v1765
        %v1901 = vunpack.c.l.b16 %v1766
        %v1902 = vunpack.c.l.b16 %v1767
        %v1903 = vunpack.c.l.b16 %v1768
        %v1904 = vunpack.c.l.b16 %v1769
        %v1905 = vunpack.c.l.b16 %v1770
        %v1906 = vunpack.c.l.b16 %v1771
        %v1907 = vunpack.c.l.b16 %v1772
        %v1908 = vunpack.c.l.b16 %v1773
        %v1909 = vunpack.c.l.b16 %v1774
        %v1910 = vunpack.c.l.b16 %v1775
        %v1911 = vunpack.c.l.b16 %v1776
        %v1912 = vunpack.c.l.b16 %v1777
        %v1913 = vunpack.c.l.b16 %v1778
        %v1914 = vunpack.c.l.b16 %v1779
        %v1915 = vunpack.c.l.b16 %v1780
        %v1916 = vunpack.c.l.b16 %v1781
        %v1917 = vunpack.c.l.b16 %v1782
        %v1918 = vunpack.c.l.b16 %v1783
        %v1919 = vpack.c.b16 %v1856, %v1855
        %v1920 = vpack.c.b16 %v1858, %v1857
        %v1921 = vpack.c.b16 %v1860, %v1859
        %v1922 = vpack.c.b16 %v1862, %v1861
        %v1923 = vpack.c.b16 %v1864, %v1863
        %v1924 = vpack.c.b16 %v1866, %v1865
        %v1925 = vpack.c.b16 %v1868, %v1867
        %v1926 = vpack.c.b16 %v1870, %v1869
        %v1927 = vpack.c.b16 %v1872, %v1871
        %v1928 = vpack.c.b16 %v1874, %v1873
        %v1929 = vpack.c.b16 %v1876, %v1875
        %v1930 = vpack.c.b16 %v1878, %v1877
        %v1931 = vpack.c.b16 %v1880, %v1879
        %v1932 = vpack.c.b16 %v1882, %v1881
        %v1933 = vpack.c.b16 %v1884, %v1883
        %v1934 = vpack.c.b16 %v1886, %v1885
        %v1935 = vpack.c.b16 %v1888, %v1887
        %v1936 = vpack.c.b16 %v1890, %v1889
        %v1937 = vpack.c.b16 %v1892, %v1891
        %v1938 = vpack.c.b16 %v1894, %v1893
        %v1939 = vpack.c.b16 %v1896, %v1895
        %v1940 = vpack.c.b16 %v1898, %v1897
        %v1941 = vpack.c.b16 %v1900, %v1899
        %v1942 = vpack.c.b16 %v1902, %v1901
        %v1943 = vpack.c.b16 %v1904, %v1903
        %v1944 = vpack.c.b16 %v1906, %v1905
        %v1945 = vpack.c.b16 %v1908, %v1907
        %v1946 = vpack.c.b16 %v1910, %v1909
        %v1947 = vpack.c.b16 %v1912, %v1911
        %v1948 = vpack.c.b16 %v1914, %v1913
        %v1949 = vpack.c.b16 %v1916, %v1915
        %v1950 = vpack.c.b16 %v1918, %v1917
        %1983 = vmatprep.subr.bf16.mxu0 0
        %1984 = vmatpush1.bf16.msra.mxu0 %v1926
        %1985 = vmatprep.subr.bf16.mxu0 0
        %1986 = vmatpush1.bf16.msra.mxu0 %v1925
        %1987 = vmatprep.subr.bf16.mxu0 0
        %1988 = vmatpush1.bf16.msra.mxu0 %v1924
        %1989 = vmatprep.subr.bf16.mxu0 0
        %1990 = vmatpush1.bf16.msra.mxu0 %v1923
        %1991 = vmatprep.subr.bf16.mxu0 0
        %1992 = vmatpush1.bf16.msra.mxu0 %v1922
        %1993 = vmatprep.subr.bf16.mxu0 0
        %1994 = vmatpush1.bf16.msra.mxu0 %v1921
        %1995 = vmatprep.subr.bf16.mxu0 0
        %1996 = vmatpush1.bf16.msra.mxu0 %v1920
        %1997 = vmatprep.subr.bf16.mxu0 0
        %1998 = vmatpush1.bf16.msra.mxu0 %v1919
        %1999 = vmatprep.subr.bf16.mxu0 0
        %2000 = vmatpush2.bf16.msra.mxu0 %v1934
        %2001 = vmatprep.subr.bf16.mxu0 0
        %2002 = vmatpush2.bf16.msra.mxu0 %v1933
        %2003 = vmatprep.subr.bf16.mxu0 0
        %2004 = vmatpush2.bf16.msra.mxu0 %v1932
        %2005 = vmatprep.subr.bf16.mxu0 0
        %2006 = vmatpush2.bf16.msra.mxu0 %v1931
        %2007 = vmatprep.subr.bf16.mxu0 0
        %2008 = vmatpush2.bf16.msra.mxu0 %v1930
        %2009 = vmatprep.subr.bf16.mxu0 0
        %2010 = vmatpush2.bf16.msra.mxu0 %v1929
        %2011 = vmatprep.subr.bf16.mxu0 0
        %2012 = vmatpush2.bf16.msra.mxu0 %v1928
        %2013 = vmatprep.subr.bf16.mxu0 0
        %2014 = vmatpush2.bf16.msra.mxu0 %v1927
        %2015 = vmatprep.mubr.bf16.mxu0 %v1657
        %2016 = vmatmul.mubr.bf16.gmra.mxu0 %v1656
        %v2017 = vpop.f32.mrf.mxu0
        %v2018 = vadd.f32 %v1789, %v2017
        %v2019 = vpop.f32.mrf.mxu0
        %v2020 = vpop.f32.mrf.mxu0
        %v2021 = vadd.f32 %v1789, %v2020
        %v2022 = vpop.f32.mrf.mxu0
        %2023 = vmatprep.mubr.bf16.mxu0 %v1661
        %2024 = vmatmul.mubr.bf16.gmra.mxu0 %v1660
        %v2025 = vpop.f32.mrf.mxu0
        %v2026 = vadd.f32 %v1789, %v2025
        %v2027 = vpop.f32.mrf.mxu0
        %v2028 = vpop.f32.mrf.mxu0
        %v2029 = vadd.f32 %v1789, %v2028
        %v2030 = vpop.f32.mrf.mxu0
        %2031 = vmatprep.mubr.bf16.mxu0 %v1665
        %2032 = vmatmul.mubr.bf16.gmra.mxu0 %v1664
        %v2033 = vpop.f32.mrf.mxu0
        %v2034 = vadd.f32 %v1789, %v2033
        %v2035 = vpop.f32.mrf.mxu0
        %v2036 = vpop.f32.mrf.mxu0
        %v2037 = vadd.f32 %v1789, %v2036
        %v2038 = vpop.f32.mrf.mxu0
        %2039 = vmatprep.mubr.bf16.mxu0 %v1669
        %2040 = vmatmul.mubr.bf16.gmra.mxu0 %v1668
        %v2041 = vpop.f32.mrf.mxu0
        %v2042 = vadd.f32 %v1789, %v2041
        %v2043 = vpop.f32.mrf.mxu0
        %v2044 = vpop.f32.mrf.mxu0
        %v2045 = vadd.f32 %v1789, %v2044
        %v2046 = vpop.f32.mrf.mxu0
        %2047 = vmatprep.mubr.bf16.mxu0 %v1673
        %2048 = vmatmul.mubr.bf16.gmra.mxu0 %v1672
        %v2049 = vpop.f32.mrf.mxu0
        %v2050 = vadd.f32 %v1789, %v2049
        %v2051 = vpop.f32.mrf.mxu0
        %v2052 = vpop.f32.mrf.mxu0
        %v2053 = vadd.f32 %v1789, %v2052
        %v2054 = vpop.f32.mrf.mxu0
        %2055 = vmatprep.mubr.bf16.mxu0 %v1677
        %2056 = vmatmul.mubr.bf16.gmra.mxu0 %v1676
        %v2057 = vpop.f32.mrf.mxu0
        %v2058 = vadd.f32 %v1789, %v2057
        %v2059 = vpop.f32.mrf.mxu0
        %v2060 = vpop.f32.mrf.mxu0
        %v2061 = vadd.f32 %v1789, %v2060
        %v2062 = vpop.f32.mrf.mxu0
        %2063 = vmatprep.mubr.bf16.mxu0 %v1681
        %2064 = vmatmul.mubr.bf16.gmra.mxu0 %v1680
        %v2065 = vpop.f32.mrf.mxu0
        %v2066 = vadd.f32 %v1789, %v2065
        %v2067 = vpop.f32.mrf.mxu0
        %v2068 = vpop.f32.mrf.mxu0
        %v2069 = vadd.f32 %v1789, %v2068
        %v2070 = vpop.f32.mrf.mxu0
        %2071 = vmatprep.mubr.bf16.mxu0 %v1685
        %2072 = vmatmul.mubr.bf16.gmra.mxu0 %v1684
        %v2073 = vpop.f32.mrf.mxu0
        %v2074 = vadd.f32 %v1789, %v2073
        %v2075 = vpop.f32.mrf.mxu0
        %v2076 = vpop.f32.mrf.mxu0
        %v2077 = vadd.f32 %v1789, %v2076
        %v2078 = vpop.f32.mrf.mxu0
        %2079 = vmatprep.mubr.bf16.mxu0 %v1689
        %2080 = vmatmul.mubr.bf16.gmra.mxu0 %v1688
        %v2081 = vpop.f32.mrf.mxu0
        %v2082 = vadd.f32 %v1789, %v2081
        %v2083 = vpop.f32.mrf.mxu0
        %v2084 = vpop.f32.mrf.mxu0
        %v2085 = vadd.f32 %v1789, %v2084
        %v2086 = vpop.f32.mrf.mxu0
        %2087 = vmatprep.mubr.bf16.mxu0 %v1693
        %2088 = vmatmul.mubr.bf16.gmra.mxu0 %v1692
        %v2089 = vpop.f32.mrf.mxu0
        %v2090 = vadd.f32 %v1789, %v2089
        %v2091 = vpop.f32.mrf.mxu0
        %v2092 = vpop.f32.mrf.mxu0
        %v2093 = vadd.f32 %v1789, %v2092
        %v2094 = vpop.f32.mrf.mxu0
        %2095 = vmatprep.mubr.bf16.mxu0 %v1697
        %2096 = vmatmul.mubr.bf16.gmra.mxu0 %v1696
        %v2097 = vpop.f32.mrf.mxu0
        %v2098 = vadd.f32 %v1789, %v2097
        %v2099 = vpop.f32.mrf.mxu0
        %v2100 = vpop.f32.mrf.mxu0
        %v2101 = vadd.f32 %v1789, %v2100
        %v2102 = vpop.f32.mrf.mxu0
        %2103 = vmatprep.mubr.bf16.mxu0 %v1701
        %2104 = vmatmul.mubr.bf16.gmra.mxu0 %v1700
        %v2105 = vpop.f32.mrf.mxu0
        %v2106 = vadd.f32 %v1789, %v2105
        %v2107 = vpop.f32.mrf.mxu0
        %v2108 = vpop.f32.mrf.mxu0
        %v2109 = vadd.f32 %v1789, %v2108
        %v2110 = vpop.f32.mrf.mxu0
        %2111 = vmatprep.mubr.bf16.mxu0 %v1705
        %2112 = vmatmul.mubr.bf16.gmra.mxu0 %v1704
        %v2113 = vpop.f32.mrf.mxu0
        %v2114 = vadd.f32 %v1789, %v2113
        %v2115 = vpop.f32.mrf.mxu0
        %v2116 = vpop.f32.mrf.mxu0
        %v2117 = vadd.f32 %v1789, %v2116
        %v2118 = vpop.f32.mrf.mxu0
        %2119 = vmatprep.mubr.bf16.mxu0 %v1709
        %2120 = vmatmul.mubr.bf16.gmra.mxu0 %v1708
        %v2121 = vpop.f32.mrf.mxu0
        %v2122 = vadd.f32 %v1789, %v2121
        %v2123 = vpop.f32.mrf.mxu0
        %v2124 = vpop.f32.mrf.mxu0
        %v2125 = vadd.f32 %v1789, %v2124
        %v2126 = vpop.f32.mrf.mxu0
        %2127 = vmatprep.mubr.bf16.mxu0 %v1713
        %2128 = vmatmul.mubr.bf16.gmra.mxu0 %v1712
        %v2129 = vpop.f32.mrf.mxu0
        %v2130 = vadd.f32 %v1789, %v2129
        %v2131 = vpop.f32.mrf.mxu0
        %v2132 = vpop.f32.mrf.mxu0
        %v2133 = vadd.f32 %v1789, %v2132
        %v2134 = vpop.f32.mrf.mxu0
        %2135 = vmatprep.mubr.bf16.mxu0 %v1717
        %2136 = vmatmul.mubr.bf16.gmra.mxu0 %v1716
        %v2137 = vpop.f32.mrf.mxu0
        %v2138 = vadd.f32 %v1789, %v2137
        %v2139 = vpop.f32.mrf.mxu0
        %v2140 = vpop.f32.mrf.mxu0
        %v2141 = vadd.f32 %v1789, %v2140
        %v2142 = vpop.f32.mrf.mxu0
        %2143 = vdwg.mxu0
        %2144 = vmatprep.subr.bf16.mxu0 0
        %2145 = vmatpush1.bf16.msra.mxu0 %v1942
        %2146 = vmatprep.subr.bf16.mxu0 0
        %2147 = vmatpush1.bf16.msra.mxu0 %v1941
        %2148 = vmatprep.subr.bf16.mxu0 0
        %2149 = vmatpush1.bf16.msra.mxu0 %v1940
        %2150 = vmatprep.subr.bf16.mxu0 0
        %2151 = vmatpush1.bf16.msra.mxu0 %v1939
        %2152 = vmatprep.subr.bf16.mxu0 0
        %2153 = vmatpush1.bf16.msra.mxu0 %v1938
        %2154 = vmatprep.subr.bf16.mxu0 0
        %2155 = vmatpush1.bf16.msra.mxu0 %v1937
        %2156 = vmatprep.subr.bf16.mxu0 0
        %2157 = vmatpush1.bf16.msra.mxu0 %v1936
        %2158 = vmatprep.subr.bf16.mxu0 0
        %2159 = vmatpush1.bf16.msra.mxu0 %v1935
        %2160 = vmatprep.subr.bf16.mxu0 0
        %2161 = vmatpush2.bf16.msra.mxu0 %v1950
        %2162 = vmatprep.subr.bf16.mxu0 0
        %2163 = vmatpush2.bf16.msra.mxu0 %v1949
        %2164 = vmatprep.subr.bf16.mxu0 0
        %2165 = vmatpush2.bf16.msra.mxu0 %v1948
        %2166 = vmatprep.subr.bf16.mxu0 0
        %2167 = vmatpush2.bf16.msra.mxu0 %v1947
        %2168 = vmatprep.subr.bf16.mxu0 0
        %2169 = vmatpush2.bf16.msra.mxu0 %v1946
        %2170 = vmatprep.subr.bf16.mxu0 0
        %2171 = vmatpush2.bf16.msra.mxu0 %v1945
        %2172 = vmatprep.subr.bf16.mxu0 0
        %2173 = vmatpush2.bf16.msra.mxu0 %v1944
        %2174 = vmatprep.subr.bf16.mxu0 0
        %2175 = vmatpush2.bf16.msra.mxu0 %v1943
        %2176 = vmatprep.mubr.bf16.mxu0 %v1659
        %2177 = vmatmul.mubr.bf16.gmra.mxu0 %v1658
        %v2178 = vpop.f32.mrf.mxu0
        %v2179 = vadd.f32 %v2018, %v2178
        %v2180 = vpop.f32.mrf.mxu0
        %v2181 = vpop.f32.mrf.mxu0
        %v2182 = vadd.f32 %v2021, %v2181
        %v2183 = vpop.f32.mrf.mxu0
        %2184 = vmatprep.mubr.bf16.mxu0 %v1663
        %2185 = vmatmul.mubr.bf16.gmra.mxu0 %v1662
        %v2186 = vpop.f32.mrf.mxu0
        %v2187 = vadd.f32 %v2026, %v2186
        %v2188 = vpop.f32.mrf.mxu0
        %v2189 = vpop.f32.mrf.mxu0
        %v2190 = vadd.f32 %v2029, %v2189
        %v2191 = vpop.f32.mrf.mxu0
        %2192 = vmatprep.mubr.bf16.mxu0 %v1667
        %2193 = vmatmul.mubr.bf16.gmra.mxu0 %v1666
        %v2194 = vpop.f32.mrf.mxu0
        %v2195 = vadd.f32 %v2034, %v2194
        %v2196 = vpop.f32.mrf.mxu0
        %v2197 = vpop.f32.mrf.mxu0
        %v2198 = vadd.f32 %v2037, %v2197
        %v2199 = vpop.f32.mrf.mxu0
        %2200 = vmatprep.mubr.bf16.mxu0 %v1671
        %2201 = vmatmul.mubr.bf16.gmra.mxu0 %v1670
        %v2202 = vpop.f32.mrf.mxu0
        %v2203 = vadd.f32 %v2042, %v2202
        %v2204 = vpop.f32.mrf.mxu0
        %v2205 = vpop.f32.mrf.mxu0
        %v2206 = vadd.f32 %v2045, %v2205
        %v2207 = vpop.f32.mrf.mxu0
        %2208 = vmatprep.mubr.bf16.mxu0 %v1675
        %2209 = vmatmul.mubr.bf16.gmra.mxu0 %v1674
        %v2210 = vpop.f32.mrf.mxu0
        %v2211 = vadd.f32 %v2050, %v2210
        %v2212 = vpop.f32.mrf.mxu0
        %v2213 = vpop.f32.mrf.mxu0
        %v2214 = vadd.f32 %v2053, %v2213
        %v2215 = vpop.f32.mrf.mxu0
        %2216 = vmatprep.mubr.bf16.mxu0 %v1679
        %2217 = vmatmul.mubr.bf16.gmra.mxu0 %v1678
        %v2218 = vpop.f32.mrf.mxu0
        %v2219 = vadd.f32 %v2058, %v2218
        %v2220 = vpop.f32.mrf.mxu0
        %v2221 = vpop.f32.mrf.mxu0
        %v2222 = vadd.f32 %v2061, %v2221
        %v2223 = vpop.f32.mrf.mxu0
        %2224 = vmatprep.mubr.bf16.mxu0 %v1683
        %2225 = vmatmul.mubr.bf16.gmra.mxu0 %v1682
        %v2226 = vpop.f32.mrf.mxu0
        %v2227 = vadd.f32 %v2066, %v2226
        %v2228 = vpop.f32.mrf.mxu0
        %v2229 = vpop.f32.mrf.mxu0
        %v2230 = vadd.f32 %v2069, %v2229
        %v2231 = vpop.f32.mrf.mxu0
        %2232 = vmatprep.mubr.bf16.mxu0 %v1687
        %2233 = vmatmul.mubr.bf16.gmra.mxu0 %v1686
        %v2234 = vpop.f32.mrf.mxu0
        %v2235 = vadd.f32 %v2074, %v2234
        %v2236 = vpop.f32.mrf.mxu0
        %v2237 = vpop.f32.mrf.mxu0
        %v2238 = vadd.f32 %v2077, %v2237
        %v2239 = vpop.f32.mrf.mxu0
        %2240 = vmatprep.mubr.bf16.mxu0 %v1691
        %2241 = vmatmul.mubr.bf16.gmra.mxu0 %v1690
        %v2242 = vpop.f32.mrf.mxu0
        %v2243 = vadd.f32 %v2082, %v2242
        %v2244 = vpop.f32.mrf.mxu0
        %v2245 = vpop.f32.mrf.mxu0
        %v2246 = vadd.f32 %v2085, %v2245
        %v2247 = vpop.f32.mrf.mxu0
        %2248 = vmatprep.mubr.bf16.mxu0 %v1695
        %2249 = vmatmul.mubr.bf16.gmra.mxu0 %v1694
        %v2250 = vpop.f32.mrf.mxu0
        %v2251 = vadd.f32 %v2090, %v2250
        %v2252 = vpop.f32.mrf.mxu0
        %v2253 = vpop.f32.mrf.mxu0
        %v2254 = vadd.f32 %v2093, %v2253
        %v2255 = vpop.f32.mrf.mxu0
        %2256 = vmatprep.mubr.bf16.mxu0 %v1699
        %2257 = vmatmul.mubr.bf16.gmra.mxu0 %v1698
        %v2258 = vpop.f32.mrf.mxu0
        %v2259 = vadd.f32 %v2098, %v2258
        %v2260 = vpop.f32.mrf.mxu0
        %v2261 = vpop.f32.mrf.mxu0
        %v2262 = vadd.f32 %v2101, %v2261
        %v2263 = vpop.f32.mrf.mxu0
        %2264 = vmatprep.mubr.bf16.mxu0 %v1703
        %2265 = vmatmul.mubr.bf16.gmra.mxu0 %v1702
        %v2266 = vpop.f32.mrf.mxu0
        %v2267 = vadd.f32 %v2106, %v2266
        %v2268 = vpop.f32.mrf.mxu0
        %v2269 = vpop.f32.mrf.mxu0
        %v2270 = vadd.f32 %v2109, %v2269
        %v2271 = vpop.f32.mrf.mxu0
        %2272 = vmatprep.mubr.bf16.mxu0 %v1707
        %2273 = vmatmul.mubr.bf16.gmra.mxu0 %v1706
        %v2274 = vpop.f32.mrf.mxu0
        %v2275 = vadd.f32 %v2114, %v2274
        %v2276 = vpop.f32.mrf.mxu0
        %v2277 = vpop.f32.mrf.mxu0
        %v2278 = vadd.f32 %v2117, %v2277
        %v2279 = vpop.f32.mrf.mxu0
        %2280 = vmatprep.mubr.bf16.mxu0 %v1711
        %2281 = vmatmul.mubr.bf16.gmra.mxu0 %v1710
        %v2282 = vpop.f32.mrf.mxu0
        %v2283 = vadd.f32 %v2122, %v2282
        %v2284 = vpop.f32.mrf.mxu0
        %v2285 = vpop.f32.mrf.mxu0
        %v2286 = vadd.f32 %v2125, %v2285
        %v2287 = vpop.f32.mrf.mxu0
        %2288 = vmatprep.mubr.bf16.mxu0 %v1715
        %2289 = vmatmul.mubr.bf16.gmra.mxu0 %v1714
        %v2290 = vpop.f32.mrf.mxu0
        %v2291 = vadd.f32 %v2130, %v2290
        %v2292 = vpop.f32.mrf.mxu0
        %v2293 = vpop.f32.mrf.mxu0
        %v2294 = vadd.f32 %v2133, %v2293
        %v2295 = vpop.f32.mrf.mxu0
        %2296 = vmatprep.mubr.bf16.mxu0 %v1719
        %2297 = vmatmul.mubr.bf16.gmra.mxu0 %v1718
        %v2298 = vpop.f32.mrf.mxu0
        %v2299 = vadd.f32 %v2138, %v2298
        %v2300 = vpop.f32.mrf.mxu0
        %v2301 = vpop.f32.mrf.mxu0
        %v2302 = vadd.f32 %v2141, %v2301
        %v2303 = vpop.f32.mrf.mxu0
        %2304 = vdwg.mxu0
        %2305 = vst [vmem:[%s284] sm:$0xff] %v2179
        %2306 = vst [vmem:[%s284 + $0x8] sm:$0xff] %v2182
        %2307 = vst [vmem:[%s284 + $0x10] sm:$0xff] %v2187
        %2308 = vst [vmem:[%s284 + $0x18] sm:$0xff] %v2190
        %2309 = vst [vmem:[%s284 + $0x20] sm:$0xff] %v2195
        %2310 = vst [vmem:[%s284 + $0x28] sm:$0xff] %v2198
        %2311 = vst [vmem:[%s284 + $0x30] sm:$0xff] %v2203
        %2312 = vst [vmem:[%s284 + $0x38] sm:$0xff] %v2206
        %2313 = vst [vmem:[%s284 + $0x40] sm:$0xff] %v2211
        %2314 = vst [vmem:[%s284 + $0x48] sm:$0xff] %v2214
        %2315 = vst [vmem:[%s284 + $0x50] sm:$0xff] %v2219
        %2316 = vst [vmem:[%s284 + $0x58] sm:$0xff] %v2222
        %2317 = vst [vmem:[%s284 + $0x60] sm:$0xff] %v2227
        %2318 = vst [vmem:[%s284 + $0x68] sm:$0xff] %v2230
        %2319 = vst [vmem:[%s284 + $0x70] sm:$0xff] %v2235
        %2320 = vst [vmem:[%s284 + $0x78] sm:$0xff] %v2238
        %2321 = vst [vmem:[%s284 + $0x80] sm:$0xff] %v2243
        %2322 = vst [vmem:[%s284 + $0x88] sm:$0xff] %v2246
        %2323 = vst [vmem:[%s284 + $0x90] sm:$0xff] %v2251
        %2324 = vst [vmem:[%s284 + $0x98] sm:$0xff] %v2254
        %2325 = vst [vmem:[%s284 + $0xa0] sm:$0xff] %v2259
        %2326 = vst [vmem:[%s284 + $0xa8] sm:$0xff] %v2262
        %2327 = vst [vmem:[%s284 + $0xb0] sm:$0xff] %v2267
        %2328 = vst [vmem:[%s284 + $0xb8] sm:$0xff] %v2270
        %2329 = vst [vmem:[%s284 + $0xc0] sm:$0xff] %v2275
        %2330 = vst [vmem:[%s284 + $0xc8] sm:$0xff] %v2278
        %2331 = vst [vmem:[%s284 + $0xd0] sm:$0xff] %v2283
        %2332 = vst [vmem:[%s284 + $0xd8] sm:$0xff] %v2286
        %2333 = vst [vmem:[%s284 + $0xe0] sm:$0xff] %v2291
        %2334 = vst [vmem:[%s284 + $0xe8] sm:$0xff] %v2294
        %2335 = vst [vmem:[%s284 + $0xf0] sm:$0xff] %v2299
        %2336 = vst [vmem:[%s284 + $0xf8] sm:$0xff] %v2302
        %s2337 = sand.u32 %s142, 1
        %s2338 = scalar_lea.sflag [#allocation4], %s2337
        %s2339 = sand.u32 %s142, 1
        %s2340 = smul.addr %s2339, 256
        %s2341 = scalar_lea.vmem [#allocation10], %s2340
        // Predicated region
        $region57: #{tpu_custom_call.1} parent=39 // pred_check
          %p2342 = pneg %p152
        $region58: #{tpu_custom_call.1} parent=39 // pred_check_branch
          %2344 = sbr.rel (%p2342) target = $region60
        $region59: #{tpu_custom_call.1} parent=39 // pred_region
          %s2345 = smul.u32 32, %s24
          %s2347 = ssub.s32 4096, 4096
          %2348 = vsyncadd %s2338, %s2347
          %s2349 = smul.addr %s2345, 128
          %s2350 = scalar_lea.hbm %s5, %s2349
          %s2351 = sshll.u32 %s2341, 4
          %s2352 = int_to_ptr.vmem [resolvable:$true] %s2351
          %2357 = dma.vmem_to_hbm [thread:$0]  %s2352, 4096, %s2350, %s2338, 128, 128, 8
        $region60: #{tpu_custom_call.1} parent=39 // pred_fallthru
          _
      $region40: #{tpu_custom_call.1} parent=5 // pred_fallthru
        _
      %p2358 = scmp.le.s32.totalorder 2, %s19
      // Predicated region
      $region61: #{tpu_custom_call.1} parent=5 // pred_check
        %p2359 = pneg %p2358
      $region62: #{tpu_custom_call.1} parent=5 // pred_check_branch
        %2361 = sbr.rel (%p2359) target = $region64
      $region63: #{tpu_custom_call.1} parent=5 // pred_region
        %s2362 = ssub.s32 %s19, 2
        // Predicated region
        $region65: #{tpu_custom_call.1} parent=63 // pred_check
          %p2363 = pneg %p158
        $region66: #{tpu_custom_call.1} parent=63 // pred_check_branch
          %2365 = sbr.rel (%p2363) target = $region68
        $region67: #{tpu_custom_call.1} parent=63 // pred_region
          %s2366 = sand.u32 %s143, 1
          %s2367 = scalar_lea.sflag [#allocation4], %s2366
          %s2368 = sand.u32 %s143, 1
          %s2369 = smul.addr %s2368, 256
          %s2370 = scalar_lea.vmem [#allocation10], %s2369
          %2371 = dma.done %s2367, 4096
        $region68: #{tpu_custom_call.1} parent=63 // pred_fallthru
          _
      $region64: #{tpu_custom_call.1} parent=5 // pred_fallthru
        _
    $region6: #{tpu_custom_call.1} parent=1 // loop_footer
      %s23 = sadd.s32 1, %s19
    $region7: #{tpu_custom_call.1} parent=1 // loop_footer_branch
      %18 = sbr.rel target = $region3
    $region8: #{tpu_custom_call.1} parent=1 // loop_exit
      _
    %2372 = vsyncpa [#allocation3], 1
    %s2373 = scalar_lea.sflag [#allocation3], 1
    %2374 = vsyncpa %s2373, 1
    %2375 = vsyncpa [#allocation6], 1
    %2376 = vsyncpa [#allocation9], 1
    %2377 = vsyncpa [#allocation4], 1
    %s2378 = scalar_lea.sflag [#allocation4], 1
    %2379 = vsyncpa %s2378, 1

// kernel: tpu_custom_call.1
$region0: #{tpu_custom_call.1}
  #allocation0 [shape = 'u32[]', space=smem, size = 0x4, offset = 0x4, fixed_abs, tag = 'smem constant byte address 0x4 - core index']
  #allocation1 [shape = 'u32[144,128]{1,0:T(1,128)}', space=vmem, size = 0x12000, scoped, tag = 'internal scratch']
  %s0 = inlined_call_operand.hbm [shape: bf16[512,128], index: 0, kind: input, shape index: {}]
  %s1 = inlined_call_operand.hbm [shape: bf16[128,512], index: 1, kind: input, shape index: {}]
  %s2 = inlined_call_operand.hbm [shape: f32[1,512], index: 2, kind: input, shape index: {}]
  %s3 = inlined_call_operand.hbm [shape: bf16[512,128], index: 3, kind: input, shape index: {}]
  %s4 = inlined_call_operand.vmem [shape: f32[1,128], index: 4, kind: input, shape index: {}]
  %s5 = inlined_call_operand.hbm [shape: f32[512,128], index: 5, kind: output, shape index: {}]
  %s6 = sld [smem:[#allocation0]]
  $region69: #{tpu_custom_call.1} parent=0
    _
  %s8 = ssub.s32 1, %s6
  %s9 = scalar_select 0, %s8, %s6
  $region1: #{tpu_custom_call.1} parent=0
    #allocation2 [shape = 'u8[131072]{0}', space=vmem, size = 0x20000, scoped, tag = 'input window, operand 0']
    #allocation3 [shape = 's32[2]{0}', space=sflag, size = 0x8, scoped, tag = 'scoped memory for tpu_custom_call.1']
    #allocation4 [shape = 's32[2]{0}', space=sflag, size = 0x8, scoped, tag = 'scoped memory for tpu_custom_call.1']
    #allocation5 [shape = 'u8[131072]{0}', space=vmem, size = 0x20000, scoped, tag = 'input window, operand 1, single buffered']
    #allocation6 [shape = 's32[1]{0}', space=sflag, size = 0x4, scoped, tag = 'scoped memory for tpu_custom_call.1']
    #allocation7 [shape = 'u8[2048]{0}', space=vmem, size = 0x800, scoped, tag = 'input window, operand 2, single buffered']
    #allocation8 [shape = 'u8[131072]{0}', space=vmem, size = 0x20000, scoped, tag = 'input window, operand 3, single buffered']
    #allocation9 [shape = 's32[1]{0}', space=sflag, size = 0x4, scoped, tag = 'scoped memory for tpu_custom_call.1']
    #allocation10 [shape = 'u8[262144]{0}', space=vmem, size = 0x40000, scoped, tag = 'output window, operand 0']
    %10 = vsyncpa [#allocation3], 0
    %s11 = scalar_lea.sflag [#allocation3], 1
    %12 = vsyncpa %s11, 0
    %13 = vsyncpa [#allocation6], 0
    %14 = vsyncpa [#allocation9], 0
    %15 = vsyncpa [#allocation4], 0
    %s16 = scalar_lea.sflag [#allocation4], 1
    %17 = vsyncpa %s16, 0
    loop: start=0, step=1, limit=4
    $region2: #{tpu_custom_call.1} parent=1 // loop_pre_header
      _
    $region3: #{tpu_custom_call.1} parent=1 // loop_header
      %s19 = sphi 0, %s23
      %p20 = scmp.ge.s32.totalorder %s19, 4
      %s29 = sphi 0, %s31
      %s32 = sphi 0, %s29
      %s33 = sphi 0, %s32
      %s49 = sphi 0, %s33
      %s53 = sphi 0, %s53
      %s55 = sphi 0, %s53
      %s56 = sphi 0, %s55
      %s70 = sphi 0, %s56
      %s74 = sphi 0, %s74
      %s76 = sphi 0, %s74
      %s77 = sphi 0, %s76
      %s91 = sphi 0, %s77
      %s95 = sphi 0, %s95
      %s97 = sphi 0, %s95
      %s98 = sphi 0, %s97
      %s112 = sphi 0, %s98
      %s116 = sphi 0, %s116
      %s118 = sphi 0, %s116
      %s119 = sphi 0, %s118
      %s133 = sphi 0, %s119
      %s139 = sphi 0, %s141
      %s142 = sphi 0, %s139
      %s143 = sphi 0, %s142
      %s159 = sphi 0, %s143
    $region4: #{tpu_custom_call.1} parent=1 // loop_header_branch
      %22 = sbr.rel (%p20) target = $region8
    $region5: #{tpu_custom_call.1} parent=1 // loop_body
      %s24 = ssub.s32 %s19, 1
      %s25 = ssub.s32 %s19, 2
      %s26 = sadd.s32 %s19, 1
      %s27 = ssub.s32 %s19, %s26
      %p28 = scmp.eq.s32.totalorder %s27, 0
      %s30 = sadd.s32 %s29, 1
      %s31 = scalar_select %p28, %s29, %s30
      %p34 = pneg %p28
      %p35 = scmp.eq.s32.totalorder %s19, 1
      %p36 = por %p34, %p35
      %p37 = scmp.ne.s32.totalorder %s29, %s32
      %p38 = scmp.eq.s32.totalorder %s19, 0
      %p39 = por %p37, %p38
      %p40 = scmp.ne.s32.totalorder %s29, %s32
      %p41 = scmp.eq.s32.totalorder %s24, 1
      %p42 = por %p40, %p41
      %p43 = scmp.ne.s32.totalorder %s32, %s33
      %p44 = scmp.eq.s32.totalorder %s24, 0
      %p45 = por %p43, %p44
      %p46 = scmp.ne.s32.totalorder %s32, %s33
      %p47 = scmp.eq.s32.totalorder %s25, 1
      %p48 = por %p46, %p47
      %p50 = scmp.ne.s32.totalorder %s33, %s49
      %p51 = scmp.eq.s32.totalorder %s25, 0
      %p52 = por %p50, %p51
      %s54 = sadd.s32 %s53, 1
      %p57 = scmp.eq.s32.totalorder %s19, 1
      %p58 = scmp.ne.s32.totalorder %s53, %s55
      %p59 = scmp.eq.s32.totalorder %s19, 0
      %p60 = por %p58, %p59
      %p61 = scmp.ne.s32.totalorder %s53, %s55
      %p62 = scmp.eq.s32.totalorder %s24, 1
      %p63 = por %p61, %p62
      %p64 = scmp.ne.s32.totalorder %s55, %s56
      %p65 = scmp.eq.s32.totalorder %s24, 0
      %p66 = por %p64, %p65
      %p67 = scmp.ne.s32.totalorder %s55, %s56
      %p68 = scmp.eq.s32.totalorder %s25, 1
      %p69 = por %p67, %p68
      %p71 = scmp.ne.s32.totalorder %s56, %s70
      %p72 = scmp.eq.s32.totalorder %s25, 0
      %p73 = por %p71, %p72
      %s75 = sadd.s32 %s74, 1
      %p78 = scmp.eq.s32.totalorder %s19, 1
      %p79 = scmp.ne.s32.totalorder %s74, %s76
      %p80 = scmp.eq.s32.totalorder %s19, 0
      %p81 = por %p79, %p80
      %p82 = scmp.ne.s32.totalorder %s74, %s76
      %p83 = scmp.eq.s32.totalorder %s24, 1
      %p84 = por %p82, %p83
      %p85 = scmp.ne.s32.totalorder %s76, %s77
      %p86 = scmp.eq.s32.totalorder %s24, 0
      %p87 = por %p85, %p86
      %p88 = scmp.ne.s32.totalorder %s76, %s77
      %p89 = scmp.eq.s32.totalorder %s25, 1
      %p90 = por %p88, %p89
      %p92 = scmp.ne.s32.totalorder %s77, %s91
      %p93 = scmp.eq.s32.totalorder %s25, 0
      %p94 = por %p92, %p93
      %s96 = sadd.s32 %s95, 1
      %p99 = scmp.eq.s32.totalorder %s19, 1
      %p100 = scmp.ne.s32.totalorder %s95, %s97
      %p101 = scmp.eq.s32.totalorder %s19, 0
      %p102 = por %p100, %p101
      %p103 = scmp.ne.s32.totalorder %s95, %s97
      %p104 = scmp.eq.s32.totalorder %s24, 1
      %p105 = por %p103, %p104
      %p106 = scmp.ne.s32.totalorder %s97, %s98
      %p107 = scmp.eq.s32.totalorder %s24, 0
      %p108 = por %p106, %p107
      %p109 = scmp.ne.s32.totalorder %s97, %s98
      %p110 = scmp.eq.s32.totalorder %s25, 1
      %p111 = por %p109, %p110
      %p113 = scmp.ne.s32.totalorder %s98, %s112
      %p114 = scmp.eq.s32.totalorder %s25, 0
      %p115 = por %p113, %p114
      %s117 = sadd.s32 %s116, 1
      %p120 = scmp.eq.s32.totalorder %s19, 1
      %p121 = scmp.ne.s32.totalorder %s116, %s118
      %p122 = scmp.eq.s32.totalorder %s19, 0
      %p123 = por %p121, %p122
      %p124 = scmp.ne.s32.totalorder %s116, %s118
      %p125 = scmp.eq.s32.totalorder %s24, 1
      %p126 = por %p124, %p125
      %p127 = scmp.ne.s32.totalorder %s118, %s119
      %p128 = scmp.eq.s32.totalorder %s24, 0
      %p129 = por %p127, %p128
      %p130 = scmp.ne.s32.totalorder %s118, %s119
      %p131 = scmp.eq.s32.totalorder %s25, 1
      %p132 = por %p130, %p131
      %p134 = scmp.ne.s32.totalorder %s119, %s133
      %p135 = scmp.eq.s32.totalorder %s25, 0
      %p136 = por %p134, %p135
      %s137 = ssub.s32 %s19, %s26
      %p138 = scmp.eq.s32.totalorder %s137, 0
      %s140 = sadd.s32 %s139, 1
      %s141 = scalar_select %p138, %s139, %s140
      %p144 = pneg %p138
      %p145 = scmp.eq.s32.totalorder %s19, 1
      %p146 = por %p144, %p145
      %p147 = scmp.ne.s32.totalorder %s139, %s142
      %p148 = scmp.eq.s32.totalorder %s19, 0
      %p149 = por %p147, %p148
      %p150 = scmp.ne.s32.totalorder %s139, %s142
      %p151 = scmp.eq.s32.totalorder %s24, 1
      %p152 = por %p150, %p151
      %p153 = scmp.ne.s32.totalorder %s142, %s143
      %p154 = scmp.eq.s32.totalorder %s24, 0
      %p155 = por %p153, %p154
      %p156 = scmp.ne.s32.totalorder %s142, %s143
      %p157 = scmp.eq.s32.totalorder %s25, 1
      %p158 = por %p156, %p157
      %p160 = scmp.ne.s32.totalorder %s143, %s159
      %p161 = scmp.eq.s32.totalorder %s25, 0
      %p162 = por %p160, %p161
      %p163 = scmp.le.s32.totalorder 1, %s19
      %p164 = scmp.lt.s32.totalorder %s19, 3
      %p165 = pnand %p163, %p164
      %p166 = pneg %p165
      // Predicated region
      $region9: #{tpu_custom_call.1} parent=5 // pred_check
        _
      $region10: #{tpu_custom_call.1} parent=5 // pred_check_branch
        %168 = sbr.rel (%p165) target = $region12
      $region11: #{tpu_custom_call.1} parent=5 // pred_region
        %s169 = ssub.s32 %s19, 1
        // Predicated region
        $region13: #{tpu_custom_call.1} parent=11 // pred_check
          %p170 = pneg %p66
        $region14: #{tpu_custom_call.1} parent=11 // pred_check_branch
          %172 = sbr.rel (%p170) target = $region16
        $region15: #{tpu_custom_call.1} parent=11 // pred_region
          %s174 = ssub.s32 4096, 4096
          %175 = vsyncadd [#allocation6], %s174
          %s176 = sshll.u32 [#allocation5], 4
          %s177 = int_to_ptr.vmem [resolvable:$true] %s176
          %182 = dma.hbm_to_vmem [thread:$0]  %s1, 4096, %s177, [#allocation6], 256, 256, 16
        $region16: #{tpu_custom_call.1} parent=11 // pred_fallthru
          _
        // Predicated region
        $region17: #{tpu_custom_call.1} parent=11 // pred_check
          %p183 = pneg %p87
        $region18: #{tpu_custom_call.1} parent=11 // pred_check_branch
          %185 = sbr.rel (%p183) target = $region20
        $region19: #{tpu_custom_call.1} parent=11 // pred_region
          %s187 = ssub.s32 64, 64
          %188 = vsyncadd [#allocation6], %s187
          %s190 = sshll.u32 [#allocation7], 4
          %s191 = int_to_ptr.vmem [resolvable:$true] %s190
          %193 = dma.hbm_to_vmem [thread:$0]  %s2, 64, %s191, [#allocation6]
        $region20: #{tpu_custom_call.1} parent=11 // pred_fallthru
          _
        // Predicated region
        $region21: #{tpu_custom_call.1} parent=11 // pred_check
          %p194 = pneg %p108
        $region22: #{tpu_custom_call.1} parent=11 // pred_check_branch
          %196 = sbr.rel (%p194) target = $region24
        $region23: #{tpu_custom_call.1} parent=11 // pred_region
          %s198 = ssub.s32 4096, 4096
          %199 = vsyncadd [#allocation9], %s198
          %s200 = sshll.u32 [#allocation8], 4
          %s201 = int_to_ptr.vmem [resolvable:$true] %s200
          %206 = dma.hbm_to_vmem [thread:$0]  %s3, 4096, %s201, [#allocation9], 64, 64, 4
        $region24: #{tpu_custom_call.1} parent=11 // pred_fallthru
          _
        // Predicated region
        $region25: #{tpu_custom_call.1} parent=11 // pred_check
          %p207 = pneg %p129
        $region26: #{tpu_custom_call.1} parent=11 // pred_check_branch
          %209 = sbr.rel (%p207) target = $region28
        $region27: #{tpu_custom_call.1} parent=11 // pred_region
          _
        $region28: #{tpu_custom_call.1} parent=11 // pred_fallthru
          _
      $region12: #{tpu_custom_call.1} parent=5 // pred_fallthru
        _
      %p210 = scmp.lt.s32.totalorder %s19, 2
      // Predicated region
      $region29: #{tpu_custom_call.1} parent=5 // pred_check
        %p211 = pneg %p210
      $region30: #{tpu_custom_call.1} parent=5 // pred_check_branch
        %213 = sbr.rel (%p211) target = $region32
      $region31: #{tpu_custom_call.1} parent=5 // pred_region
        // Predicated region
        $region33: #{tpu_custom_call.1} parent=31 // pred_check
          %p214 = pneg %p39
        $region34: #{tpu_custom_call.1} parent=31 // pred_check_branch
          %216 = sbr.rel (%p214) target = $region36
        $region35: #{tpu_custom_call.1} parent=31 // pred_region
          %s217 = sand.u32 %s29, 1
          %s218 = scalar_lea.sflag [#allocation3], %s217
          %s219 = sand.u32 %s29, 1
          %s220 = smul.addr %s219, 128
          %s221 = scalar_lea.vmem [#allocation2], %s220
          %s222 = smul.u32 32, %s19
          %s224 = ssub.s32 2048, 2048
          %225 = vsyncadd %s218, %s224
          %s226 = smul.addr %s222, 64
          %s227 = scalar_lea.hbm %s0, %s226
          %s228 = sshll.u32 %s221, 4
          %s229 = int_to_ptr.vmem [resolvable:$true] %s228
          %234 = dma.hbm_to_vmem [thread:$0]  %s227, 2048, %s229, %s218, 64, 64, 4
        $region36: #{tpu_custom_call.1} parent=31 // pred_fallthru
          _
      $region32: #{tpu_custom_call.1} parent=5 // pred_fallthru
        _
      %p235 = scmp.le.s32.totalorder 1, %s19
      %p236 = scmp.lt.s32.totalorder %s19, 3
      %p237 = pnand %p235, %p236
      %p238 = pneg %p237
      // Predicated region
      $region37: #{tpu_custom_call.1} parent=5 // pred_check
        _
      $region38: #{tpu_custom_call.1} parent=5 // pred_check_branch
        %240 = sbr.rel (%p237) target = $region40
      $region39: #{tpu_custom_call.1} parent=5 // pred_region
        %s241 = ssub.s32 %s19, 1
        %s242 = sand.u32 %s32, 1
        %s243 = scalar_lea.sflag [#allocation3], %s242
        %s244 = sand.u32 %s32, 1
        %s245 = smul.addr %s244, 128
        %s246 = scalar_lea.vmem [#allocation2], %s245
        // Predicated region
        $region41: #{tpu_custom_call.1} parent=39 // pred_check
          %p247 = pneg %p45
        $region42: #{tpu_custom_call.1} parent=39 // pred_check_branch
          %249 = sbr.rel (%p247) target = $region44
        $region43: #{tpu_custom_call.1} parent=39 // pred_region
          %250 = dma.done %s243, 2048
        $region44: #{tpu_custom_call.1} parent=39 // pred_fallthru
          _
        // Predicated region
        $region45: #{tpu_custom_call.1} parent=39 // pred_check
          %p251 = pneg %p66
        $region46: #{tpu_custom_call.1} parent=39 // pred_check_branch
          %253 = sbr.rel (%p251) target = $region48
        $region47: #{tpu_custom_call.1} parent=39 // pred_region
          %254 = dma.done [#allocation6], 4096
        $region48: #{tpu_custom_call.1} parent=39 // pred_fallthru
          _
        // Predicated region
        $region49: #{tpu_custom_call.1} parent=39 // pred_check
          %p255 = pneg %p87
        $region50: #{tpu_custom_call.1} parent=39 // pred_check_branch
          %257 = sbr.rel (%p255) target = $region52
        $region51: #{tpu_custom_call.1} parent=39 // pred_region
          %258 = dma.done [#allocation6], 64
        $region52: #{tpu_custom_call.1} parent=39 // pred_fallthru
          _
        // Predicated region
        $region53: #{tpu_custom_call.1} parent=39 // pred_check
          %p259 = pneg %p108
        $region54: #{tpu_custom_call.1} parent=39 // pred_check_branch
          %261 = sbr.rel (%p259) target = $region56
        $region55: #{tpu_custom_call.1} parent=39 // pred_region
          %262 = dma.done [#allocation9], 4096
        $region56: #{tpu_custom_call.1} parent=39 // pred_fallthru
          _
        %s263 = sand.u32 %s32, 1
        %s264 = scalar_lea.sflag [#allocation3], %s263
        %s265 = sand.u32 %s32, 1
        %s266 = smul.addr %s265, 128
        %s267 = scalar_lea.vmem [#allocation2], %s266
        %p268 = pneg %p45
        %p269 = pneg %p42
        %p270 = pneg %p66
        %p271 = pneg %p63
        %p272 = pneg %p87
        %p273 = pneg %p84
        %p274 = pneg %p108
        %p275 = pneg %p105
        %p276 = pneg %p129
        %p277 = pneg %p126
        %p278 = pneg %p155
        %p279 = pneg %p152
        %s280 = sand.u32 %s142, 1
        %s281 = scalar_lea.sflag [#allocation4], %s280
        %s282 = sand.u32 %s142, 1
        %s283 = smul.addr %s282, 256
        %s284 = scalar_lea.vmem [#allocation10], %s283
        %s285 = smul.u32 32, %s24
        %s286 = smul.u32 32, %s24
        %v288 = vld [vmem:[%s246] sm:$0xf]
        %v289 = vld [vmem:[%s246 + $0x4] sm:$0xf]
        %v290 = vld [vmem:[%s246 + $0x8] sm:$0xf]
        %v291 = vld [vmem:[%s246 + $0xc] sm:$0xf]
        %v292 = vld [vmem:[%s246 + $0x10] sm:$0xf]
        %v293 = vld [vmem:[%s246 + $0x14] sm:$0xf]
        %v294 = vld [vmem:[%s246 + $0x18] sm:$0xf]
        %v295 = vld [vmem:[%s246 + $0x1c] sm:$0xf]
        %v296 = vld [vmem:[%s246 + $0x20] sm:$0xf]
        %v297 = vld [vmem:[%s246 + $0x24] sm:$0xf]
        %v298 = vld [vmem:[%s246 + $0x28] sm:$0xf]
        %v299 = vld [vmem:[%s246 + $0x2c] sm:$0xf]
        %v300 = vld [vmem:[%s246 + $0x30] sm:$0xf]
        %v301 = vld [vmem:[%s246 + $0x34] sm:$0xf]
        %v302 = vld [vmem:[%s246 + $0x38] sm:$0xf]
        %v303 = vld [vmem:[%s246 + $0x3c] sm:$0xf]
        %v304 = vld [vmem:[%s246 + $0x40] sm:$0xf]
        %v305 = vld [vmem:[%s246 + $0x44] sm:$0xf]
        %v306 = vld [vmem:[%s246 + $0x48] sm:$0xf]
        %v307 = vld [vmem:[%s246 + $0x4c] sm:$0xf]
        %v308 = vld [vmem:[%s246 + $0x50] sm:$0xf]
        %v309 = vld [vmem:[%s246 + $0x54] sm:$0xf]
        %v310 = vld [vmem:[%s246 + $0x58] sm:$0xf]
        %v311 = vld [vmem:[%s246 + $0x5c] sm:$0xf]
        %v312 = vld [vmem:[%s246 + $0x60] sm:$0xf]
        %v313 = vld [vmem:[%s246 + $0x64] sm:$0xf]
        %v314 = vld [vmem:[%s246 + $0x68] sm:$0xf]
        %v315 = vld [vmem:[%s246 + $0x6c] sm:$0xf]
        %v316 = vld [vmem:[%s246 + $0x70] sm:$0xf]
        %v317 = vld [vmem:[%s246 + $0x74] sm:$0xf]
        %v318 = vld [vmem:[%s246 + $0x78] sm:$0xf]
        %v319 = vld [vmem:[%s246 + $0x7c] sm:$0xf]
        %v320 = vld [vmem:[#allocation5] sm:$0xff]
        %v321 = vld [vmem:[#allocation5 + $0x8] sm:$0xff]
        %v322 = vld [vmem:[#allocation5 + $0x10] sm:$0xff]
        %v323 = vld [vmem:[#allocation5 + $0x18] sm:$0xff]
        %v324 = vld [vmem:[#allocation5 + $0x20] sm:$0xff]
        %v325 = vld [vmem:[#allocation5 + $0x28] sm:$0xff]
        %v326 = vld [vmem:[#allocation5 + $0x30] sm:$0xff]
        %v327 = vld [vmem:[#allocation5 + $0x38] sm:$0xff]
        %v328 = vld [vmem:[#allocation5 + $0x40] sm:$0xff]
        %v329 = vld [vmem:[#allocation5 + $0x48] sm:$0xff]
        %v330 = vld [vmem:[#allocation5 + $0x50] sm:$0xff]
        %v331 = vld [vmem:[#allocation5 + $0x58] sm:$0xff]
        %v332 = vld [vmem:[#allocation5 + $0x60] sm:$0xff]
        %v333 = vld [vmem:[#allocation5 + $0x68] sm:$0xff]
        %v334 = vld [vmem:[#allocation5 + $0x70] sm:$0xff]
        %v335 = vld [vmem:[#allocation5 + $0x78] sm:$0xff]
        %v336 = vld [vmem:[#allocation5 + $0x80] sm:$0xff]
        %v337 = vld [vmem:[#allocation5 + $0x88] sm:$0xff]
        %v338 = vld [vmem:[#allocation5 + $0x90] sm:$0xff]
        %v339 = vld [vmem:[#allocation5 + $0x98] sm:$0xff]
        %v340 = vld [vmem:[#allocation5 + $0xa0] sm:$0xff]
        %v341 = vld [vmem:[#allocation5 + $0xa8] sm:$0xff]
        %v342 = vld [vmem:[#allocation5 + $0xb0] sm:$0xff]
        %v343 = vld [vmem:[#allocation5 + $0xb8] sm:$0xff]
        %v344 = vld [vmem:[#allocation5 + $0xc0] sm:$0xff]
        %v345 = vld [vmem:[#allocation5 + $0xc8] sm:$0xff]
        %v346 = vld [vmem:[#allocation5 + $0xd0] sm:$0xff]
        %v347 = vld [vmem:[#allocation5 + $0xd8] sm:$0xff]
        %v348 = vld [vmem:[#allocation5 + $0xe0] sm:$0xff]
        %v349 = vld [vmem:[#allocation5 + $0xe8] sm:$0xff]
        %v350 = vld [vmem:[#allocation5 + $0xf0] sm:$0xff]
        %v351 = vld [vmem:[#allocation5 + $0xf8] sm:$0xff]
        %v352 = vld [vmem:[#allocation7] sm:$0xf]
        %v354 = vlaneseq
        %v355 = vshrl.u32 %v354, 7
        %v356 = vsub.s32 0, %v355
        %v357 = vrot.slane %v352, %v356
        %v358 = vlaneseq
        %v359 = vshrl.u32 %v358, 7
        %v360 = vsub.s32 1, %v359
        %v361 = vrot.slane %v352, %v360
        %v362 = vlaneseq
        %v363 = vshrl.u32 %v362, 7
        %v364 = vsub.s32 2, %v363
        %v365 = vrot.slane %v352, %v364
        %v366 = vlaneseq
        %v367 = vshrl.u32 %v366, 7
        %v368 = vsub.s32 3, %v367
        %v369 = vrot.slane %v352, %v368
        %v406 = vunpack.c.l.b16 %v288
        %v407 = vunpack.c.l.b16 %v289
        %v408 = vunpack.c.l.b16 %v290
        %v409 = vunpack.c.l.b16 %v291
        %v410 = vunpack.c.l.b16 %v292
        %v411 = vunpack.c.l.b16 %v293
        %v412 = vunpack.c.l.b16 %v294
        %v413 = vunpack.c.l.b16 %v295
        %v414 = vunpack.c.l.b16 %v296
        %v415 = vunpack.c.l.b16 %v297
        %v416 = vunpack.c.l.b16 %v298
        %v417 = vunpack.c.l.b16 %v299
        %v418 = vunpack.c.l.b16 %v300
        %v419 = vunpack.c.l.b16 %v301
        %v420 = vunpack.c.l.b16 %v302
        %v421 = vunpack.c.l.b16 %v303
        %v422 = vunpack.c.l.b16 %v304
        %v423 = vunpack.c.l.b16 %v305
        %v424 = vunpack.c.l.b16 %v306
        %v425 = vunpack.c.l.b16 %v307
        %v426 = vunpack.c.l.b16 %v308
        %v427 = vunpack.c.l.b16 %v309
        %v428 = vunpack.c.l.b16 %v310
        %v429 = vunpack.c.l.b16 %v311
        %v430 = vunpack.c.l.b16 %v312
        %v431 = vunpack.c.l.b16 %v313
        %v432 = vunpack.c.l.b16 %v314
        %v433 = vunpack.c.l.b16 %v315
        %v434 = vunpack.c.l.b16 %v316
        %v435 = vunpack.c.l.b16 %v317
        %v436 = vunpack.c.l.b16 %v318
        %v437 = vunpack.c.l.b16 %v319
        %v438 = vpack.c.b16 %v407, %v406
        %v439 = vpack.c.b16 %v409, %v408
        %v440 = vpack.c.b16 %v411, %v410
        %v441 = vpack.c.b16 %v413, %v412
        %v442 = vpack.c.b16 %v415, %v414
        %v443 = vpack.c.b16 %v417, %v416
        %v444 = vpack.c.b16 %v419, %v418
        %v445 = vpack.c.b16 %v421, %v420
        %v446 = vpack.c.b16 %v423, %v422
        %v447 = vpack.c.b16 %v425, %v424
        %v448 = vpack.c.b16 %v427, %v426
        %v449 = vpack.c.b16 %v429, %v428
        %v450 = vpack.c.b16 %v431, %v430
        %v451 = vpack.c.b16 %v433, %v432
        %v452 = vpack.c.b16 %v435, %v434
        %v453 = vpack.c.b16 %v437, %v436
        %v502 = vunpack.c.l.b16 %v320
        %v503 = vunpack.c.h.b16 %v320
        %v504 = vunpack.c.l.b16 %v321
        %v505 = vunpack.c.h.b16 %v321
        %v506 = vunpack.c.l.b16 %v322
        %v507 = vunpack.c.h.b16 %v322
        %v508 = vunpack.c.l.b16 %v323
        %v509 = vunpack.c.h.b16 %v323
        %v510 = vunpack.c.l.b16 %v324
        %v511 = vunpack.c.h.b16 %v324
        %v512 = vunpack.c.l.b16 %v325
        %v513 = vunpack.c.h.b16 %v325
        %v514 = vunpack.c.l.b16 %v326
        %v515 = vunpack.c.h.b16 %v326
        %v516 = vunpack.c.l.b16 %v327
        %v517 = vunpack.c.h.b16 %v327
        %v518 = vunpack.c.l.b16 %v328
        %v519 = vunpack.c.h.b16 %v328
        %v520 = vunpack.c.l.b16 %v329
        %v521 = vunpack.c.h.b16 %v329
        %v522 = vunpack.c.l.b16 %v330
        %v523 = vunpack.c.h.b16 %v330
        %v524 = vunpack.c.l.b16 %v331
        %v525 = vunpack.c.h.b16 %v331
        %v526 = vunpack.c.l.b16 %v332
        %v527 = vunpack.c.h.b16 %v332
        %v528 = vunpack.c.l.b16 %v333
        %v529 = vunpack.c.h.b16 %v333
        %v530 = vunpack.c.l.b16 %v334
        %v531 = vunpack.c.h.b16 %v334
        %v532 = vunpack.c.l.b16 %v335
        %v533 = vunpack.c.h.b16 %v335
        %v534 = vunpack.c.l.b16 %v336
        %v535 = vunpack.c.h.b16 %v336
        %v536 = vunpack.c.l.b16 %v337
        %v537 = vunpack.c.h.b16 %v337
        %v538 = vunpack.c.l.b16 %v338
        %v539 = vunpack.c.h.b16 %v338
        %v540 = vunpack.c.l.b16 %v339
        %v541 = vunpack.c.h.b16 %v339
        %v542 = vunpack.c.l.b16 %v340
        %v543 = vunpack.c.h.b16 %v340
        %v544 = vunpack.c.l.b16 %v341
        %v545 = vunpack.c.h.b16 %v341
        %v546 = vunpack.c.l.b16 %v342
        %v547 = vunpack.c.h.b16 %v342
        %v548 = vunpack.c.l.b16 %v343
        %v549 = vunpack.c.h.b16 %v343
        %v550 = vunpack.c.l.b16 %v344
        %v551 = vunpack.c.h.b16 %v344
        %v552 = vunpack.c.l.b16 %v345
        %v553 = vunpack.c.h.b16 %v345
        %v554 = vunpack.c.l.b16 %v346
        %v555 = vunpack.c.h.b16 %v346
        %v556 = vunpack.c.l.b16 %v347
        %v557 = vunpack.c.h.b16 %v347
        %v558 = vunpack.c.l.b16 %v348
        %v559 = vunpack.c.h.b16 %v348
        %v560 = vunpack.c.l.b16 %v349
        %v561 = vunpack.c.h.b16 %v349
        %v562 = vunpack.c.l.b16 %v350
        %v563 = vunpack.c.h.b16 %v350
        %v564 = vunpack.c.l.b16 %v351
        %v565 = vunpack.c.h.b16 %v351
        %v566 = vpack.c.b16 %v506, %v502
        %v567 = vpack.c.b16 %v507, %v503
        %v568 = vpack.c.b16 %v508, %v504
        %v569 = vpack.c.b16 %v509, %v505
        %v570 = vpack.c.b16 %v514, %v510
        %v571 = vpack.c.b16 %v515, %v511
        %v572 = vpack.c.b16 %v516, %v512
        %v573 = vpack.c.b16 %v517, %v513
        %v574 = vpack.c.b16 %v522, %v518
        %v575 = vpack.c.b16 %v523, %v519
        %v576 = vpack.c.b16 %v524, %v520
        %v577 = vpack.c.b16 %v525, %v521
        %v578 = vpack.c.b16 %v530, %v526
        %v579 = vpack.c.b16 %v531, %v527
        %v580 = vpack.c.b16 %v532, %v528
        %v581 = vpack.c.b16 %v533, %v529
        %v582 = vpack.c.b16 %v538, %v534
        %v583 = vpack.c.b16 %v539, %v535
        %v584 = vpack.c.b16 %v540, %v536
        %v585 = vpack.c.b16 %v541, %v537
        %v586 = vpack.c.b16 %v546, %v542
        %v587 = vpack.c.b16 %v547, %v543
        %v588 = vpack.c.b16 %v548, %v544
        %v589 = vpack.c.b16 %v549, %v545
        %v590 = vpack.c.b16 %v554, %v550
        %v591 = vpack.c.b16 %v555, %v551
        %v592 = vpack.c.b16 %v556, %v552
        %v593 = vpack.c.b16 %v557, %v553
        %v594 = vpack.c.b16 %v562, %v558
        %v595 = vpack.c.b16 %v563, %v559
        %v596 = vpack.c.b16 %v564, %v560
        %v597 = vpack.c.b16 %v565, %v561
        %630 = vmatprep.subr.bf16.mxu0 %v595
        %631 = vmatpush1.bf16.msra.mxu0 %v594
        %632 = vmatprep.subr.bf16.mxu0 %v591
        %633 = vmatpush1.bf16.msra.mxu0 %v590
        %634 = vmatprep.subr.bf16.mxu0 %v587
        %635 = vmatpush1.bf16.msra.mxu0 %v586
        %636 = vmatprep.subr.bf16.mxu0 %v583
        %637 = vmatpush1.bf16.msra.mxu0 %v582
        %638 = vmatprep.subr.bf16.mxu0 %v579
        %639 = vmatpush1.bf16.msra.mxu0 %v578
        %640 = vmatprep.subr.bf16.mxu0 %v575
        %641 = vmatpush1.bf16.msra.mxu0 %v574
        %642 = vmatprep.subr.bf16.mxu0 %v571
        %643 = vmatpush1.bf16.msra.mxu0 %v570
        %644 = vmatprep.subr.bf16.mxu0 %v567
        %645 = vmatpush1.bf16.msra.mxu0 %v566
        %646 = vmatprep.subr.bf16.mxu0 0
        %647 = vmatpush2.bf16.msra.mxu0 0
        %648 = vmatprep.subr.bf16.mxu0 0
        %649 = vmatpush2.bf16.msra.mxu0 0
        %650 = vmatprep.subr.bf16.mxu0 0
        %651 = vmatpush2.bf16.msra.mxu0 0
        %652 = vmatprep.subr.bf16.mxu0 0
        %653 = vmatpush2.bf16.msra.mxu0 0
        %654 = vmatprep.subr.bf16.mxu0 0
        %655 = vmatpush2.bf16.msra.mxu0 0
        %656 = vmatprep.subr.bf16.mxu0 0
        %657 = vmatpush2.bf16.msra.mxu0 0
        %658 = vmatprep.subr.bf16.mxu0 0
        %659 = vmatpush2.bf16.msra.mxu0 0
        %660 = vmatprep.subr.bf16.mxu0 0
        %661 = vmatpush2.bf16.msra.mxu0 0
        %662 = vmatprep.mubr.bf16.mxu0 0
        %663 = vmatmul.mubr.bf16.gmra.mxu0 %v438
        %v664 = vpop.f32.mrf.mxu0
        %v665 = vadd.f32 %v357, %v664
        %v666 = vpop.f32.mrf.mxu0
        %v667 = vadd.f32 %v361, %v666
        %v668 = vpop.f32.mrf.mxu0
        %v669 = vadd.f32 %v357, %v668
        %v670 = vpop.f32.mrf.mxu0
        %v671 = vadd.f32 %v361, %v670
        %672 = vmatprep.mubr.bf16.mxu0 0
        %673 = vmatmul.mubr.bf16.gmra.mxu0 %v439
        %v674 = vpop.f32.mrf.mxu0
        %v675 = vadd.f32 %v357, %v674
        %v676 = vpop.f32.mrf.mxu0
        %v677 = vadd.f32 %v361, %v676
        %v678 = vpop.f32.mrf.mxu0
        %v679 = vadd.f32 %v357, %v678
        %v680 = vpop.f32.mrf.mxu0
        %v681 = vadd.f32 %v361, %v680
        %682 = vmatprep.mubr.bf16.mxu0 0
        %683 = vmatmul.mubr.bf16.gmra.mxu0 %v440
        %v684 = vpop.f32.mrf.mxu0
        %v685 = vadd.f32 %v357, %v684
        %v686 = vpop.f32.mrf.mxu0
        %v687 = vadd.f32 %v361, %v686
        %v688 = vpop.f32.mrf.mxu0
        %v689 = vadd.f32 %v357, %v688
        %v690 = vpop.f32.mrf.mxu0
        %v691 = vadd.f32 %v361, %v690
        %692 = vmatprep.mubr.bf16.mxu0 0
        %693 = vmatmul.mubr.bf16.gmra.mxu0 %v441
        %v694 = vpop.f32.mrf.mxu0
        %v695 = vadd.f32 %v357, %v694
        %v696 = vpop.f32.mrf.mxu0
        %v697 = vadd.f32 %v361, %v696
        %v698 = vpop.f32.mrf.mxu0
        %v699 = vadd.f32 %v357, %v698
        %v700 = vpop.f32.mrf.mxu0
        %v701 = vadd.f32 %v361, %v700
        %702 = vmatprep.mubr.bf16.mxu0 0
        %703 = vmatmul.mubr.bf16.gmra.mxu0 %v442
        %v704 = vpop.f32.mrf.mxu0
        %v705 = vadd.f32 %v357, %v704
        %v706 = vpop.f32.mrf.mxu0
        %v707 = vadd.f32 %v361, %v706
        %v708 = vpop.f32.mrf.mxu0
        %v709 = vadd.f32 %v357, %v708
        %v710 = vpop.f32.mrf.mxu0
        %v711 = vadd.f32 %v361, %v710
        %712 = vmatprep.mubr.bf16.mxu0 0
        %713 = vmatmul.mubr.bf16.gmra.mxu0 %v443
        %v714 = vpop.f32.mrf.mxu0
        %v715 = vadd.f32 %v357, %v714
        %v716 = vpop.f32.mrf.mxu0
        %v717 = vadd.f32 %v361, %v716
        %v718 = vpop.f32.mrf.mxu0
        %v719 = vadd.f32 %v357, %v718
        %v720 = vpop.f32.mrf.mxu0
        %v721 = vadd.f32 %v361, %v720
        %722 = vmatprep.mubr.bf16.mxu0 0
        %723 = vmatmul.mubr.bf16.gmra.mxu0 %v444
        %v724 = vpop.f32.mrf.mxu0
        %v725 = vadd.f32 %v357, %v724
        %v726 = vpop.f32.mrf.mxu0
        %v727 = vadd.f32 %v361, %v726
        %v728 = vpop.f32.mrf.mxu0
        %v729 = vadd.f32 %v357, %v728
        %v730 = vpop.f32.mrf.mxu0
        %v731 = vadd.f32 %v361, %v730
        %732 = vmatprep.mubr.bf16.mxu0 0
        %733 = vmatmul.mubr.bf16.gmra.mxu0 %v445
        %v734 = vpop.f32.mrf.mxu0
        %v735 = vadd.f32 %v357, %v734
        %v736 = vpop.f32.mrf.mxu0
        %v737 = vadd.f32 %v361, %v736
        %v738 = vpop.f32.mrf.mxu0
        %v739 = vadd.f32 %v357, %v738
        %v740 = vpop.f32.mrf.mxu0
        %v741 = vadd.f32 %v361, %v740
        %742 = vmatprep.mubr.bf16.mxu0 0
        %743 = vmatmul.mubr.bf16.gmra.mxu0 %v446
        %v744 = vpop.f32.mrf.mxu0
        %v745 = vadd.f32 %v357, %v744
        %v746 = vpop.f32.mrf.mxu0
        %v747 = vadd.f32 %v361, %v746
        %v748 = vpop.f32.mrf.mxu0
        %v749 = vadd.f32 %v357, %v748
        %v750 = vpop.f32.mrf.mxu0
        %v751 = vadd.f32 %v361, %v750
        %752 = vmatprep.mubr.bf16.mxu0 0
        %753 = vmatmul.mubr.bf16.gmra.mxu0 %v447
        %v754 = vpop.f32.mrf.mxu0
        %v755 = vadd.f32 %v357, %v754
        %v756 = vpop.f32.mrf.mxu0
        %v757 = vadd.f32 %v361, %v756
        %v758 = vpop.f32.mrf.mxu0
        %v759 = vadd.f32 %v357, %v758
        %v760 = vpop.f32.mrf.mxu0
        %v761 = vadd.f32 %v361, %v760
        %762 = vmatprep.mubr.bf16.mxu0 0
        %763 = vmatmul.mubr.bf16.gmra.mxu0 %v448
        %v764 = vpop.f32.mrf.mxu0
        %v765 = vadd.f32 %v357, %v764
        %v766 = vpop.f32.mrf.mxu0
        %v767 = vadd.f32 %v361, %v766
        %v768 = vpop.f32.mrf.mxu0
        %v769 = vadd.f32 %v357, %v768
        %v770 = vpop.f32.mrf.mxu0
        %v771 = vadd.f32 %v361, %v770
        %772 = vmatprep.mubr.bf16.mxu0 0
        %773 = vmatmul.mubr.bf16.gmra.mxu0 %v449
        %v774 = vpop.f32.mrf.mxu0
        %v775 = vadd.f32 %v357, %v774
        %v776 = vpop.f32.mrf.mxu0
        %v777 = vadd.f32 %v361, %v776
        %v778 = vpop.f32.mrf.mxu0
        %v779 = vadd.f32 %v357, %v778
        %v780 = vpop.f32.mrf.mxu0
        %v781 = vadd.f32 %v361, %v780
        %782 = vmatprep.mubr.bf16.mxu0 0
        %783 = vmatmul.mubr.bf16.gmra.mxu0 %v450
        %v784 = vpop.f32.mrf.mxu0
        %v785 = vadd.f32 %v357, %v784
        %v786 = vpop.f32.mrf.mxu0
        %v787 = vadd.f32 %v361, %v786
        %v788 = vpop.f32.mrf.mxu0
        %v789 = vadd.f32 %v357, %v788
        %v790 = vpop.f32.mrf.mxu0
        %v791 = vadd.f32 %v361, %v790
        %792 = vmatprep.mubr.bf16.mxu0 0
        %793 = vmatmul.mubr.bf16.gmra.mxu0 %v451
        %v794 = vpop.f32.mrf.mxu0
        %v795 = vadd.f32 %v357, %v794
        %v796 = vpop.f32.mrf.mxu0
        %v797 = vadd.f32 %v361, %v796
        %v798 = vpop.f32.mrf.mxu0
        %v799 = vadd.f32 %v357, %v798
        %v800 = vpop.f32.mrf.mxu0
        %v801 = vadd.f32 %v361, %v800
        %802 = vmatprep.mubr.bf16.mxu0 0
        %803 = vmatmul.mubr.bf16.gmra.mxu0 %v452
        %v804 = vpop.f32.mrf.mxu0
        %v805 = vadd.f32 %v357, %v804
        %v806 = vpop.f32.mrf.mxu0
        %v807 = vadd.f32 %v361, %v806
        %v808 = vpop.f32.mrf.mxu0
        %v809 = vadd.f32 %v357, %v808
        %v810 = vpop.f32.mrf.mxu0
        %v811 = vadd.f32 %v361, %v810
        %812 = vmatprep.mubr.bf16.mxu0 0
        %813 = vmatmul.mubr.bf16.gmra.mxu0 %v453
        %v814 = vpop.f32.mrf.mxu0
        %v815 = vadd.f32 %v357, %v814
        %v816 = vpop.f32.mrf.mxu0
        %v817 = vadd.f32 %v361, %v816
        %v818 = vpop.f32.mrf.mxu0
        %v819 = vadd.f32 %v357, %v818
        %v820 = vpop.f32.mrf.mxu0
        %v821 = vadd.f32 %v361, %v820
        %822 = vdwg.mxu0
        %823 = vmatprep.subr.bf16.mxu0 %v597
        %824 = vmatpush1.bf16.msra.mxu0 %v596
        %825 = vmatprep.subr.bf16.mxu0 %v593
        %826 = vmatpush1.bf16.msra.mxu0 %v592
        %827 = vmatprep.subr.bf16.mxu0 %v589
        %828 = vmatpush1.bf16.msra.mxu0 %v588
        %829 = vmatprep.subr.bf16.mxu0 %v585
        %830 = vmatpush1.bf16.msra.mxu0 %v584
        %831 = vmatprep.subr.bf16.mxu0 %v581
        %832 = vmatpush1.bf16.msra.mxu0 %v580
        %833 = vmatprep.subr.bf16.mxu0 %v577
        %834 = vmatpush1.bf16.msra.mxu0 %v576
        %835 = vmatprep.subr.bf16.mxu0 %v573
        %836 = vmatpush1.bf16.msra.mxu0 %v572
        %837 = vmatprep.subr.bf16.mxu0 %v569
        %838 = vmatpush1.bf16.msra.mxu0 %v568
        %839 = vmatprep.subr.bf16.mxu0 0
        %840 = vmatpush2.bf16.msra.mxu0 0
        %841 = vmatprep.subr.bf16.mxu0 0
        %842 = vmatpush2.bf16.msra.mxu0 0
        %843 = vmatprep.subr.bf16.mxu0 0
        %844 = vmatpush2.bf16.msra.mxu0 0
        %845 = vmatprep.subr.bf16.mxu0 0
        %846 = vmatpush2.bf16.msra.mxu0 0
        %847 = vmatprep.subr.bf16.mxu0 0
        %848 = vmatpush2.bf16.msra.mxu0 0
        %849 = vmatprep.subr.bf16.mxu0 0
        %850 = vmatpush2.bf16.msra.mxu0 0
        %851 = vmatprep.subr.bf16.mxu0 0
        %852 = vmatpush2.bf16.msra.mxu0 0
        %853 = vmatprep.subr.bf16.mxu0 0
        %854 = vmatpush2.bf16.msra.mxu0 0
        %855 = vmatprep.mubr.bf16.mxu0 0
        %856 = vmatmul.mubr.bf16.gmra.mxu0 %v438
        %v857 = vpop.f32.mrf.mxu0
        %v858 = vadd.f32 %v365, %v857
        %v859 = vpop.f32.mrf.mxu0
        %v860 = vadd.f32 %v369, %v859
        %v861 = vpop.f32.mrf.mxu0
        %v862 = vadd.f32 %v365, %v861
        %v863 = vpop.f32.mrf.mxu0
        %v864 = vadd.f32 %v369, %v863
        %865 = vmatprep.mubr.bf16.mxu0 0
        %866 = vmatmul.mubr.bf16.gmra.mxu0 %v439
        %v867 = vpop.f32.mrf.mxu0
        %v868 = vadd.f32 %v365, %v867
        %v869 = vpop.f32.mrf.mxu0
        %v870 = vadd.f32 %v369, %v869
        %v871 = vpop.f32.mrf.mxu0
        %v872 = vadd.f32 %v365, %v871
        %v873 = vpop.f32.mrf.mxu0
        %v874 = vadd.f32 %v369, %v873
        %875 = vmatprep.mubr.bf16.mxu0 0
        %876 = vmatmul.mubr.bf16.gmra.mxu0 %v440
        %v877 = vpop.f32.mrf.mxu0
        %v878 = vadd.f32 %v365, %v877
        %v879 = vpop.f32.mrf.mxu0
        %v880 = vadd.f32 %v369, %v879
        %v881 = vpop.f32.mrf.mxu0
        %v882 = vadd.f32 %v365, %v881
        %v883 = vpop.f32.mrf.mxu0
        %v884 = vadd.f32 %v369, %v883
        %885 = vmatprep.mubr.bf16.mxu0 0
        %886 = vmatmul.mubr.bf16.gmra.mxu0 %v441
        %v887 = vpop.f32.mrf.mxu0
        %v888 = vadd.f32 %v365, %v887
        %v889 = vpop.f32.mrf.mxu0
        %v890 = vadd.f32 %v369, %v889
        %v891 = vpop.f32.mrf.mxu0
        %v892 = vadd.f32 %v365, %v891
        %v893 = vpop.f32.mrf.mxu0
        %v894 = vadd.f32 %v369, %v893
        %895 = vmatprep.mubr.bf16.mxu0 0
        %896 = vmatmul.mubr.bf16.gmra.mxu0 %v442
        %v897 = vpop.f32.mrf.mxu0
        %v898 = vadd.f32 %v365, %v897
        %v899 = vpop.f32.mrf.mxu0
        %v900 = vadd.f32 %v369, %v899
        %v901 = vpop.f32.mrf.mxu0
        %v902 = vadd.f32 %v365, %v901
        %v903 = vpop.f32.mrf.mxu0
        %v904 = vadd.f32 %v369, %v903
        %905 = vmatprep.mubr.bf16.mxu0 0
        %906 = vmatmul.mubr.bf16.gmra.mxu0 %v443
        %v907 = vpop.f32.mrf.mxu0
        %v908 = vadd.f32 %v365, %v907
        %v909 = vpop.f32.mrf.mxu0
        %v910 = vadd.f32 %v369, %v909
        %v911 = vpop.f32.mrf.mxu0
        %v912 = vadd.f32 %v365, %v911
        %v913 = vpop.f32.mrf.mxu0
        %v914 = vadd.f32 %v369, %v913
        %915 = vmatprep.mubr.bf16.mxu0 0
        %916 = vmatmul.mubr.bf16.gmra.mxu0 %v444
        %v917 = vpop.f32.mrf.mxu0
        %v918 = vadd.f32 %v365, %v917
        %v919 = vpop.f32.mrf.mxu0
        %v920 = vadd.f32 %v369, %v919
        %v921 = vpop.f32.mrf.mxu0
        %v922 = vadd.f32 %v365, %v921
        %v923 = vpop.f32.mrf.mxu0
        %v924 = vadd.f32 %v369, %v923
        %925 = vmatprep.mubr.bf16.mxu0 0
        %926 = vmatmul.mubr.bf16.gmra.mxu0 %v445
        %v927 = vpop.f32.mrf.mxu0
        %v928 = vadd.f32 %v365, %v927
        %v929 = vpop.f32.mrf.mxu0
        %v930 = vadd.f32 %v369, %v929
        %v931 = vpop.f32.mrf.mxu0
        %v932 = vadd.f32 %v365, %v931
        %v933 = vpop.f32.mrf.mxu0
        %v934 = vadd.f32 %v369, %v933
        %935 = vmatprep.mubr.bf16.mxu0 0
        %936 = vmatmul.mubr.bf16.gmra.mxu0 %v446
        %v937 = vpop.f32.mrf.mxu0
        %v938 = vadd.f32 %v365, %v937
        %v939 = vpop.f32.mrf.mxu0
        %v940 = vadd.f32 %v369, %v939
        %v941 = vpop.f32.mrf.mxu0
        %v942 = vadd.f32 %v365, %v941
        %v943 = vpop.f32.mrf.mxu0
        %v944 = vadd.f32 %v369, %v943
        %945 = vmatprep.mubr.bf16.mxu0 0
        %946 = vmatmul.mubr.bf16.gmra.mxu0 %v447
        %v947 = vpop.f32.mrf.mxu0
        %v948 = vadd.f32 %v365, %v947
        %v949 = vpop.f32.mrf.mxu0
        %v950 = vadd.f32 %v369, %v949
        %v951 = vpop.f32.mrf.mxu0
        %v952 = vadd.f32 %v365, %v951
        %v953 = vpop.f32.mrf.mxu0
        %v954 = vadd.f32 %v369, %v953
        %955 = vmatprep.mubr.bf16.mxu0 0
        %956 = vmatmul.mubr.bf16.gmra.mxu0 %v448
        %v957 = vpop.f32.mrf.mxu0
        %v958 = vadd.f32 %v365, %v957
        %v959 = vpop.f32.mrf.mxu0
        %v960 = vadd.f32 %v369, %v959
        %v961 = vpop.f32.mrf.mxu0
        %v962 = vadd.f32 %v365, %v961
        %v963 = vpop.f32.mrf.mxu0
        %v964 = vadd.f32 %v369, %v963
        %965 = vmatprep.mubr.bf16.mxu0 0
        %966 = vmatmul.mubr.bf16.gmra.mxu0 %v449
        %v967 = vpop.f32.mrf.mxu0
        %v968 = vadd.f32 %v365, %v967
        %v969 = vpop.f32.mrf.mxu0
        %v970 = vadd.f32 %v369, %v969
        %v971 = vpop.f32.mrf.mxu0
        %v972 = vadd.f32 %v365, %v971
        %v973 = vpop.f32.mrf.mxu0
        %v974 = vadd.f32 %v369, %v973
        %975 = vmatprep.mubr.bf16.mxu0 0
        %976 = vmatmul.mubr.bf16.gmra.mxu0 %v450
        %v977 = vpop.f32.mrf.mxu0
        %v978 = vadd.f32 %v365, %v977
        %v979 = vpop.f32.mrf.mxu0
        %v980 = vadd.f32 %v369, %v979
        %v981 = vpop.f32.mrf.mxu0
        %v982 = vadd.f32 %v365, %v981
        %v983 = vpop.f32.mrf.mxu0
        %v984 = vadd.f32 %v369, %v983
        %985 = vmatprep.mubr.bf16.mxu0 0
        %986 = vmatmul.mubr.bf16.gmra.mxu0 %v451
        %v987 = vpop.f32.mrf.mxu0
        %v988 = vadd.f32 %v365, %v987
        %v989 = vpop.f32.mrf.mxu0
        %v990 = vadd.f32 %v369, %v989
        %v991 = vpop.f32.mrf.mxu0
        %v992 = vadd.f32 %v365, %v991
        %v993 = vpop.f32.mrf.mxu0
        %v994 = vadd.f32 %v369, %v993
        %995 = vmatprep.mubr.bf16.mxu0 0
        %996 = vmatmul.mubr.bf16.gmra.mxu0 %v452
        %v997 = vpop.f32.mrf.mxu0
        %v998 = vadd.f32 %v365, %v997
        %v999 = vpop.f32.mrf.mxu0
        %v1000 = vadd.f32 %v369, %v999
        %v1001 = vpop.f32.mrf.mxu0
        %v1002 = vadd.f32 %v365, %v1001
        %v1003 = vpop.f32.mrf.mxu0
        %v1004 = vadd.f32 %v369, %v1003
        %1005 = vmatprep.mubr.bf16.mxu0 0
        %1006 = vmatmul.mubr.bf16.gmra.mxu0 %v453
        %v1007 = vpop.f32.mrf.mxu0
        %v1008 = vadd.f32 %v365, %v1007
        %v1009 = vpop.f32.mrf.mxu0
        %v1010 = vadd.f32 %v369, %v1009
        %v1011 = vpop.f32.mrf.mxu0
        %v1012 = vadd.f32 %v365, %v1011
        %v1013 = vpop.f32.mrf.mxu0
        %v1014 = vadd.f32 %v369, %v1013
        %1015 = vdwg.mxu0
        %v1016 = vmul.f32 %v665, 0.5
        %v1017 = vmul.f32 %v667, 0.5
        %v1018 = vmul.f32 %v858, 0.5
        %v1019 = vmul.f32 %v860, 0.5
        %v1020 = vmul.f32 %v669, 0.5
        %v1021 = vmul.f32 %v671, 0.5
        %v1022 = vmul.f32 %v862, 0.5
        %v1023 = vmul.f32 %v864, 0.5
        %v1024 = vmul.f32 %v675, 0.5
        %v1025 = vmul.f32 %v677, 0.5
        %v1026 = vmul.f32 %v868, 0.5
        %v1027 = vmul.f32 %v870, 0.5
        %v1028 = vmul.f32 %v679, 0.5
        %v1029 = vmul.f32 %v681, 0.5
        %v1030 = vmul.f32 %v872, 0.5
        %v1031 = vmul.f32 %v874, 0.5
        %v1032 = vmul.f32 %v685, 0.5
        %v1033 = vmul.f32 %v687, 0.5
        %v1034 = vmul.f32 %v878, 0.5
        %v1035 = vmul.f32 %v880, 0.5
        %v1036 = vmul.f32 %v689, 0.5
        %v1037 = vmul.f32 %v691, 0.5
        %v1038 = vmul.f32 %v882, 0.5
        %v1039 = vmul.f32 %v884, 0.5
        %v1040 = vmul.f32 %v695, 0.5
        %v1041 = vmul.f32 %v697, 0.5
        %v1042 = vmul.f32 %v888, 0.5
        %v1043 = vmul.f32 %v890, 0.5
        %v1044 = vmul.f32 %v699, 0.5
        %v1045 = vmul.f32 %v701, 0.5
        %v1046 = vmul.f32 %v892, 0.5
        %v1047 = vmul.f32 %v894, 0.5
        %v1048 = vmul.f32 %v705, 0.5
        %v1049 = vmul.f32 %v707, 0.5
        %v1050 = vmul.f32 %v898, 0.5
        %v1051 = vmul.f32 %v900, 0.5
        %v1052 = vmul.f32 %v709, 0.5
        %v1053 = vmul.f32 %v711, 0.5
        %v1054 = vmul.f32 %v902, 0.5
        %v1055 = vmul.f32 %v904, 0.5
        %v1056 = vmul.f32 %v715, 0.5
        %v1057 = vmul.f32 %v717, 0.5
        %v1058 = vmul.f32 %v908, 0.5
        %v1059 = vmul.f32 %v910, 0.5
        %v1060 = vmul.f32 %v719, 0.5
        %v1061 = vmul.f32 %v721, 0.5
        %v1062 = vmul.f32 %v912, 0.5
        %v1063 = vmul.f32 %v914, 0.5
        %v1064 = vmul.f32 %v725, 0.5
        %v1065 = vmul.f32 %v727, 0.5
        %v1066 = vmul.f32 %v918, 0.5
        %v1067 = vmul.f32 %v920, 0.5
        %v1068 = vmul.f32 %v729, 0.5
        %v1069 = vmul.f32 %v731, 0.5
        %v1070 = vmul.f32 %v922, 0.5
        %v1071 = vmul.f32 %v924, 0.5
        %v1072 = vmul.f32 %v735, 0.5
        %v1073 = vmul.f32 %v737, 0.5
        %v1074 = vmul.f32 %v928, 0.5
        %v1075 = vmul.f32 %v930, 0.5
        %v1076 = vmul.f32 %v739, 0.5
        %v1077 = vmul.f32 %v741, 0.5
        %v1078 = vmul.f32 %v932, 0.5
        %v1079 = vmul.f32 %v934, 0.5
        %v1080 = vmul.f32 %v745, 0.5
        %v1081 = vmul.f32 %v747, 0.5
        %v1082 = vmul.f32 %v938, 0.5
        %v1083 = vmul.f32 %v940, 0.5
        %v1084 = vmul.f32 %v749, 0.5
        %v1085 = vmul.f32 %v751, 0.5
        %v1086 = vmul.f32 %v942, 0.5
        %v1087 = vmul.f32 %v944, 0.5
        %v1088 = vmul.f32 %v755, 0.5
        %v1089 = vmul.f32 %v757, 0.5
        %v1090 = vmul.f32 %v948, 0.5
        %v1091 = vmul.f32 %v950, 0.5
        %v1092 = vmul.f32 %v759, 0.5
        %v1093 = vmul.f32 %v761, 0.5
        %v1094 = vmul.f32 %v952, 0.5
        %v1095 = vmul.f32 %v954, 0.5
        %v1096 = vmul.f32 %v765, 0.5
        %v1097 = vmul.f32 %v767, 0.5
        %v1098 = vmul.f32 %v958, 0.5
        %v1099 = vmul.f32 %v960, 0.5
        %v1100 = vmul.f32 %v769, 0.5
        %v1101 = vmul.f32 %v771, 0.5
        %v1102 = vmul.f32 %v962, 0.5
        %v1103 = vmul.f32 %v964, 0.5
        %v1104 = vmul.f32 %v775, 0.5
        %v1105 = vmul.f32 %v777, 0.5
        %v1106 = vmul.f32 %v968, 0.5
        %v1107 = vmul.f32 %v970, 0.5
        %v1108 = vmul.f32 %v779, 0.5
        %v1109 = vmul.f32 %v781, 0.5
        %v1110 = vmul.f32 %v972, 0.5
        %v1111 = vmul.f32 %v974, 0.5
        %v1112 = vmul.f32 %v785, 0.5
        %v1113 = vmul.f32 %v787, 0.5
        %v1114 = vmul.f32 %v978, 0.5
        %v1115 = vmul.f32 %v980, 0.5
        %v1116 = vmul.f32 %v789, 0.5
        %v1117 = vmul.f32 %v791, 0.5
        %v1118 = vmul.f32 %v982, 0.5
        %v1119 = vmul.f32 %v984, 0.5
        %v1120 = vmul.f32 %v795, 0.5
        %v1121 = vmul.f32 %v797, 0.5
        %v1122 = vmul.f32 %v988, 0.5
        %v1123 = vmul.f32 %v990, 0.5
        %v1124 = vmul.f32 %v799, 0.5
        %v1125 = vmul.f32 %v801, 0.5
        %v1126 = vmul.f32 %v992, 0.5
        %v1127 = vmul.f32 %v994, 0.5
        %v1128 = vmul.f32 %v805, 0.5
        %v1129 = vmul.f32 %v807, 0.5
        %v1130 = vmul.f32 %v998, 0.5
        %v1131 = vmul.f32 %v1000, 0.5
        %v1132 = vmul.f32 %v809, 0.5
        %v1133 = vmul.f32 %v811, 0.5
        %v1134 = vmul.f32 %v1002, 0.5
        %v1135 = vmul.f32 %v1004, 0.5
        %v1136 = vmul.f32 %v815, 0.5
        %v1137 = vmul.f32 %v817, 0.5
        %v1138 = vmul.f32 %v1008, 0.5
        %v1139 = vmul.f32 %v1010, 0.5
        %v1140 = vmul.f32 %v819, 0.5
        %v1141 = vmul.f32 %v821, 0.5
        %v1142 = vmul.f32 %v1012, 0.5
        %v1143 = vmul.f32 %v1014, 0.5
        %v1144 = vmul.f32 %v665, 0.70710677
        %v1145 = vmul.f32 %v667, 0.70710677
        %v1146 = vmul.f32 %v858, 0.70710677
        %v1147 = vmul.f32 %v860, 0.70710677
        %v1148 = vmul.f32 %v669, 0.70710677
        %v1149 = vmul.f32 %v671, 0.70710677
        %v1150 = vmul.f32 %v862, 0.70710677
        %v1151 = vmul.f32 %v864, 0.70710677
        %v1152 = vmul.f32 %v675, 0.70710677
        %v1153 = vmul.f32 %v677, 0.70710677
        %v1154 = vmul.f32 %v868, 0.70710677
        %v1155 = vmul.f32 %v870, 0.70710677
        %v1156 = vmul.f32 %v679, 0.70710677
        %v1157 = vmul.f32 %v681, 0.70710677
        %v1158 = vmul.f32 %v872, 0.70710677
        %v1159 = vmul.f32 %v874, 0.70710677
        %v1160 = vmul.f32 %v685, 0.70710677
        %v1161 = vmul.f32 %v687, 0.70710677
        %v1162 = vmul.f32 %v878, 0.70710677
        %v1163 = vmul.f32 %v880, 0.70710677
        %v1164 = vmul.f32 %v689, 0.70710677
        %v1165 = vmul.f32 %v691, 0.70710677
        %v1166 = vmul.f32 %v882, 0.70710677
        %v1167 = vmul.f32 %v884, 0.70710677
        %v1168 = vmul.f32 %v695, 0.70710677
        %v1169 = vmul.f32 %v697, 0.70710677
        %v1170 = vmul.f32 %v888, 0.70710677
        %v1171 = vmul.f32 %v890, 0.70710677
        %v1172 = vmul.f32 %v699, 0.70710677
        %v1173 = vmul.f32 %v701, 0.70710677
        %v1174 = vmul.f32 %v892, 0.70710677
        %v1175 = vmul.f32 %v894, 0.70710677
        %v1176 = vmul.f32 %v705, 0.70710677
        %v1177 = vmul.f32 %v707, 0.70710677
        %v1178 = vmul.f32 %v898, 0.70710677
        %v1179 = vmul.f32 %v900, 0.70710677
        %v1180 = vmul.f32 %v709, 0.70710677
        %v1181 = vmul.f32 %v711, 0.70710677
        %v1182 = vmul.f32 %v902, 0.70710677
        %v1183 = vmul.f32 %v904, 0.70710677
        %v1184 = vmul.f32 %v715, 0.70710677
        %v1185 = vmul.f32 %v717, 0.70710677
        %v1186 = vmul.f32 %v908, 0.70710677
        %v1187 = vmul.f32 %v910, 0.70710677
        %v1188 = vmul.f32 %v719, 0.70710677
        %v1189 = vmul.f32 %v721, 0.70710677
        %v1190 = vmul.f32 %v912, 0.70710677
        %v1191 = vmul.f32 %v914, 0.70710677
        %v1192 = vmul.f32 %v725, 0.70710677
        %v1193 = vmul.f32 %v727, 0.70710677
        %v1194 = vmul.f32 %v918, 0.70710677
        %v1195 = vmul.f32 %v920, 0.70710677
        %v1196 = vmul.f32 %v729, 0.70710677
        %v1197 = vmul.f32 %v731, 0.70710677
        %v1198 = vmul.f32 %v922, 0.70710677
        %v1199 = vmul.f32 %v924, 0.70710677
        %v1200 = vmul.f32 %v735, 0.70710677
        %v1201 = vmul.f32 %v737, 0.70710677
        %v1202 = vmul.f32 %v928, 0.70710677
        %v1203 = vmul.f32 %v930, 0.70710677
        %v1204 = vmul.f32 %v739, 0.70710677
        %v1205 = vmul.f32 %v741, 0.70710677
        %v1206 = vmul.f32 %v932, 0.70710677
        %v1207 = vmul.f32 %v934, 0.70710677
        %v1208 = vmul.f32 %v745, 0.70710677
        %v1209 = vmul.f32 %v747, 0.70710677
        %v1210 = vmul.f32 %v938, 0.70710677
        %v1211 = vmul.f32 %v940, 0.70710677
        %v1212 = vmul.f32 %v749, 0.70710677
        %v1213 = vmul.f32 %v751, 0.70710677
        %v1214 = vmul.f32 %v942, 0.70710677
        %v1215 = vmul.f32 %v944, 0.70710677
        %v1216 = vmul.f32 %v755, 0.70710677
        %v1217 = vmul.f32 %v757, 0.70710677
        %v1218 = vmul.f32 %v948, 0.70710677
        %v1219 = vmul.f32 %v950, 0.70710677
        %v1220 = vmul.f32 %v759, 0.70710677
        %v1221 = vmul.f32 %v761, 0.70710677
        %v1222 = vmul.f32 %v952, 0.70710677
        %v1223 = vmul.f32 %v954, 0.70710677
        %v1224 = vmul.f32 %v765, 0.70710677
        %v1225 = vmul.f32 %v767, 0.70710677
        %v1226 = vmul.f32 %v958, 0.70710677
        %v1227 = vmul.f32 %v960, 0.70710677
        %v1228 = vmul.f32 %v769, 0.70710677
        %v1229 = vmul.f32 %v771, 0.70710677
        %v1230 = vmul.f32 %v962, 0.70710677
        %v1231 = vmul.f32 %v964, 0.70710677
        %v1232 = vmul.f32 %v775, 0.70710677
        %v1233 = vmul.f32 %v777, 0.70710677
        %v1234 = vmul.f32 %v968, 0.70710677
        %v1235 = vmul.f32 %v970, 0.70710677
        %v1236 = vmul.f32 %v779, 0.70710677
        %v1237 = vmul.f32 %v781, 0.70710677
        %v1238 = vmul.f32 %v972, 0.70710677
        %v1239 = vmul.f32 %v974, 0.70710677
        %v1240 = vmul.f32 %v785, 0.70710677
        %v1241 = vmul.f32 %v787, 0.70710677
        %v1242 = vmul.f32 %v978, 0.70710677
        %v1243 = vmul.f32 %v980, 0.70710677
        %v1244 = vmul.f32 %v789, 0.70710677
        %v1245 = vmul.f32 %v791, 0.70710677
        %v1246 = vmul.f32 %v982, 0.70710677
        %v1247 = vmul.f32 %v984, 0.70710677
        %v1248 = vmul.f32 %v795, 0.70710677
        %v1249 = vmul.f32 %v797, 0.70710677
        %v1250 = vmul.f32 %v988, 0.70710677
        %v1251 = vmul.f32 %v990, 0.70710677
        %v1252 = vmul.f32 %v799, 0.70710677
        %v1253 = vmul.f32 %v801, 0.70710677
        %v1254 = vmul.f32 %v992, 0.70710677
        %v1255 = vmul.f32 %v994, 0.70710677
        %v1256 = vmul.f32 %v805, 0.70710677
        %v1257 = vmul.f32 %v807, 0.70710677
        %v1258 = vmul.f32 %v998, 0.70710677
        %v1259 = vmul.f32 %v1000, 0.70710677
        %v1260 = vmul.f32 %v809, 0.70710677
        %v1261 = vmul.f32 %v811, 0.70710677
        %v1262 = vmul.f32 %v1002, 0.70710677
        %v1263 = vmul.f32 %v1004, 0.70710677
        %v1264 = vmul.f32 %v815, 0.70710677
        %v1265 = vmul.f32 %v817, 0.70710677
        %v1266 = vmul.f32 %v1008, 0.70710677
        %v1267 = vmul.f32 %v1010, 0.70710677
        %v1268 = vmul.f32 %v819, 0.70710677
        %v1269 = vmul.f32 %v821, 0.70710677
        %v1270 = vmul.f32 %v1012, 0.70710677
        %v1271 = vmul.f32 %v1014, 0.70710677
        %v1272 = verf.f32.pop %v1144
        %v1273 = verf.f32.pop %v1145
        %v1274 = verf.f32.pop %v1146
        %v1275 = verf.f32.pop %v1147
        %v1276 = verf.f32.pop %v1148
        %v1277 = verf.f32.pop %v1149
        %v1278 = verf.f32.pop %v1150
        %v1279 = verf.f32.pop %v1151
        %v1280 = verf.f32.pop %v1152
        %v1281 = verf.f32.pop %v1153
        %v1282 = verf.f32.pop %v1154
        %v1283 = verf.f32.pop %v1155
        %v1284 = verf.f32.pop %v1156
        %v1285 = verf.f32.pop %v1157
        %v1286 = verf.f32.pop %v1158
        %v1287 = verf.f32.pop %v1159
        %v1288 = verf.f32.pop %v1160
        %v1289 = verf.f32.pop %v1161
        %v1290 = verf.f32.pop %v1162
        %v1291 = verf.f32.pop %v1163
        %v1292 = verf.f32.pop %v1164
        %v1293 = verf.f32.pop %v1165
        %v1294 = verf.f32.pop %v1166
        %v1295 = verf.f32.pop %v1167
        %v1296 = verf.f32.pop %v1168
        %v1297 = verf.f32.pop %v1169
        %v1298 = verf.f32.pop %v1170
        %v1299 = verf.f32.pop %v1171
        %v1300 = verf.f32.pop %v1172
        %v1301 = verf.f32.pop %v1173
        %v1302 = verf.f32.pop %v1174
        %v1303 = verf.f32.pop %v1175
        %v1304 = verf.f32.pop %v1176
        %v1305 = verf.f32.pop %v1177
        %v1306 = verf.f32.pop %v1178
        %v1307 = verf.f32.pop %v1179
        %v1308 = verf.f32.pop %v1180
        %v1309 = verf.f32.pop %v1181
        %v1310 = verf.f32.pop %v1182
        %v1311 = verf.f32.pop %v1183
        %v1312 = verf.f32.pop %v1184
        %v1313 = verf.f32.pop %v1185
        %v1314 = verf.f32.pop %v1186
        %v1315 = verf.f32.pop %v1187
        %v1316 = verf.f32.pop %v1188
        %v1317 = verf.f32.pop %v1189
        %v1318 = verf.f32.pop %v1190
        %v1319 = verf.f32.pop %v1191
        %v1320 = verf.f32.pop %v1192
        %v1321 = verf.f32.pop %v1193
        %v1322 = verf.f32.pop %v1194
        %v1323 = verf.f32.pop %v1195
        %v1324 = verf.f32.pop %v1196
        %v1325 = verf.f32.pop %v1197
        %v1326 = verf.f32.pop %v1198
        %v1327 = verf.f32.pop %v1199
        %v1328 = verf.f32.pop %v1200
        %v1329 = verf.f32.pop %v1201
        %v1330 = verf.f32.pop %v1202
        %v1331 = verf.f32.pop %v1203
        %v1332 = verf.f32.pop %v1204
        %v1333 = verf.f32.pop %v1205
        %v1334 = verf.f32.pop %v1206
        %v1335 = verf.f32.pop %v1207
        %v1336 = verf.f32.pop %v1208
        %v1337 = verf.f32.pop %v1209
        %v1338 = verf.f32.pop %v1210
        %v1339 = verf.f32.pop %v1211
        %v1340 = verf.f32.pop %v1212
        %v1341 = verf.f32.pop %v1213
        %v1342 = verf.f32.pop %v1214
        %v1343 = verf.f32.pop %v1215
        %v1344 = verf.f32.pop %v1216
        %v1345 = verf.f32.pop %v1217
        %v1346 = verf.f32.pop %v1218
        %v1347 = verf.f32.pop %v1219
        %v1348 = verf.f32.pop %v1220
        %v1349 = verf.f32.pop %v1221
        %v1350 = verf.f32.pop %v1222
        %v1351 = verf.f32.pop %v1223
        %v1352 = verf.f32.pop %v1224
        %v1353 = verf.f32.pop %v1225
        %v1354 = verf.f32.pop %v1226
        %v1355 = verf.f32.pop %v1227
        %v1356 = verf.f32.pop %v1228
        %v1357 = verf.f32.pop %v1229
        %v1358 = verf.f32.pop %v1230
        %v1359 = verf.f32.pop %v1231
        %v1360 = verf.f32.pop %v1232
        %v1361 = verf.f32.pop %v1233
        %v1362 = verf.f32.pop %v1234
        %v1363 = verf.f32.pop %v1235
        %v1364 = verf.f32.pop %v1236
        %v1365 = verf.f32.pop %v1237
        %v1366 = verf.f32.pop %v1238
        %v1367 = verf.f32.pop %v1239
        %v1368 = verf.f32.pop %v1240
        %v1369 = verf.f32.pop %v1241
        %v1370 = verf.f32.pop %v1242
        %v1371 = verf.f32.pop %v1243
        %v1372 = verf.f32.pop %v1244
        %v1373 = verf.f32.pop %v1245
        %v1374 = verf.f32.pop %v1246
        %v1375 = verf.f32.pop %v1247
        %v1376 = verf.f32.pop %v1248
        %v1377 = verf.f32.pop %v1249
        %v1378 = verf.f32.pop %v1250
        %v1379 = verf.f32.pop %v1251
        %v1380 = verf.f32.pop %v1252
        %v1381 = verf.f32.pop %v1253
        %v1382 = verf.f32.pop %v1254
        %v1383 = verf.f32.pop %v1255
        %v1384 = verf.f32.pop %v1256
        %v1385 = verf.f32.pop %v1257
        %v1386 = verf.f32.pop %v1258
        %v1387 = verf.f32.pop %v1259
        %v1388 = verf.f32.pop %v1260
        %v1389 = verf.f32.pop %v1261
        %v1390 = verf.f32.pop %v1262
        %v1391 = verf.f32.pop %v1263
        %v1392 = verf.f32.pop %v1264
        %v1393 = verf.f32.pop %v1265
        %v1394 = verf.f32.pop %v1266
        %v1395 = verf.f32.pop %v1267
        %v1396 = verf.f32.pop %v1268
        %v1397 = verf.f32.pop %v1269
        %v1398 = verf.f32.pop %v1270
        %v1399 = verf.f32.pop %v1271
        %v1400 = vadd.f32 %v1272, 1.0
        %v1401 = vadd.f32 %v1273, 1.0
        %v1402 = vadd.f32 %v1274, 1.0
        %v1403 = vadd.f32 %v1275, 1.0
        %v1404 = vadd.f32 %v1276, 1.0
        %v1405 = vadd.f32 %v1277, 1.0
        %v1406 = vadd.f32 %v1278, 1.0
        %v1407 = vadd.f32 %v1279, 1.0
        %v1408 = vadd.f32 %v1280, 1.0
        %v1409 = vadd.f32 %v1281, 1.0
        %v1410 = vadd.f32 %v1282, 1.0
        %v1411 = vadd.f32 %v1283, 1.0
        %v1412 = vadd.f32 %v1284, 1.0
        %v1413 = vadd.f32 %v1285, 1.0
        %v1414 = vadd.f32 %v1286, 1.0
        %v1415 = vadd.f32 %v1287, 1.0
        %v1416 = vadd.f32 %v1288, 1.0
        %v1417 = vadd.f32 %v1289, 1.0
        %v1418 = vadd.f32 %v1290, 1.0
        %v1419 = vadd.f32 %v1291, 1.0
        %v1420 = vadd.f32 %v1292, 1.0
        %v1421 = vadd.f32 %v1293, 1.0
        %v1422 = vadd.f32 %v1294, 1.0
        %v1423 = vadd.f32 %v1295, 1.0
        %v1424 = vadd.f32 %v1296, 1.0
        %v1425 = vadd.f32 %v1297, 1.0
        %v1426 = vadd.f32 %v1298, 1.0
        %v1427 = vadd.f32 %v1299, 1.0
        %v1428 = vadd.f32 %v1300, 1.0
        %v1429 = vadd.f32 %v1301, 1.0
        %v1430 = vadd.f32 %v1302, 1.0
        %v1431 = vadd.f32 %v1303, 1.0
        %v1432 = vadd.f32 %v1304, 1.0
        %v1433 = vadd.f32 %v1305, 1.0
        %v1434 = vadd.f32 %v1306, 1.0
        %v1435 = vadd.f32 %v1307, 1.0
        %v1436 = vadd.f32 %v1308, 1.0
        %v1437 = vadd.f32 %v1309, 1.0
        %v1438 = vadd.f32 %v1310, 1.0
        %v1439 = vadd.f32 %v1311, 1.0
        %v1440 = vadd.f32 %v1312, 1.0
        %v1441 = vadd.f32 %v1313, 1.0
        %v1442 = vadd.f32 %v1314, 1.0
        %v1443 = vadd.f32 %v1315, 1.0
        %v1444 = vadd.f32 %v1316, 1.0
        %v1445 = vadd.f32 %v1317, 1.0
        %v1446 = vadd.f32 %v1318, 1.0
        %v1447 = vadd.f32 %v1319, 1.0
        %v1448 = vadd.f32 %v1320, 1.0
        %v1449 = vadd.f32 %v1321, 1.0
        %v1450 = vadd.f32 %v1322, 1.0
        %v1451 = vadd.f32 %v1323, 1.0
        %v1452 = vadd.f32 %v1324, 1.0
        %v1453 = vadd.f32 %v1325, 1.0
        %v1454 = vadd.f32 %v1326, 1.0
        %v1455 = vadd.f32 %v1327, 1.0
        %v1456 = vadd.f32 %v1328, 1.0
        %v1457 = vadd.f32 %v1329, 1.0
        %v1458 = vadd.f32 %v1330, 1.0
        %v1459 = vadd.f32 %v1331, 1.0
        %v1460 = vadd.f32 %v1332, 1.0
        %v1461 = vadd.f32 %v1333, 1.0
        %v1462 = vadd.f32 %v1334, 1.0
        %v1463 = vadd.f32 %v1335, 1.0
        %v1464 = vadd.f32 %v1336, 1.0
        %v1465 = vadd.f32 %v1337, 1.0
        %v1466 = vadd.f32 %v1338, 1.0
        %v1467 = vadd.f32 %v1339, 1.0
        %v1468 = vadd.f32 %v1340, 1.0
        %v1469 = vadd.f32 %v1341, 1.0
        %v1470 = vadd.f32 %v1342, 1.0
        %v1471 = vadd.f32 %v1343, 1.0
        %v1472 = vadd.f32 %v1344, 1.0
        %v1473 = vadd.f32 %v1345, 1.0
        %v1474 = vadd.f32 %v1346, 1.0
        %v1475 = vadd.f32 %v1347, 1.0
        %v1476 = vadd.f32 %v1348, 1.0
        %v1477 = vadd.f32 %v1349, 1.0
        %v1478 = vadd.f32 %v1350, 1.0
        %v1479 = vadd.f32 %v1351, 1.0
        %v1480 = vadd.f32 %v1352, 1.0
        %v1481 = vadd.f32 %v1353, 1.0
        %v1482 = vadd.f32 %v1354, 1.0
        %v1483 = vadd.f32 %v1355, 1.0
        %v1484 = vadd.f32 %v1356, 1.0
        %v1485 = vadd.f32 %v1357, 1.0
        %v1486 = vadd.f32 %v1358, 1.0
        %v1487 = vadd.f32 %v1359, 1.0
        %v1488 = vadd.f32 %v1360, 1.0
        %v1489 = vadd.f32 %v1361, 1.0
        %v1490 = vadd.f32 %v1362, 1.0
        %v1491 = vadd.f32 %v1363, 1.0
        %v1492 = vadd.f32 %v1364, 1.0
        %v1493 = vadd.f32 %v1365, 1.0
        %v1494 = vadd.f32 %v1366, 1.0
        %v1495 = vadd.f32 %v1367, 1.0
        %v1496 = vadd.f32 %v1368, 1.0
        %v1497 = vadd.f32 %v1369, 1.0
        %v1498 = vadd.f32 %v1370, 1.0
        %v1499 = vadd.f32 %v1371, 1.0
        %v1500 = vadd.f32 %v1372, 1.0
        %v1501 = vadd.f32 %v1373, 1.0
        %v1502 = vadd.f32 %v1374, 1.0
        %v1503 = vadd.f32 %v1375, 1.0
        %v1504 = vadd.f32 %v1376, 1.0
        %v1505 = vadd.f32 %v1377, 1.0
        %v1506 = vadd.f32 %v1378, 1.0
        %v1507 = vadd.f32 %v1379, 1.0
        %v1508 = vadd.f32 %v1380, 1.0
        %v1509 = vadd.f32 %v1381, 1.0
        %v1510 = vadd.f32 %v1382, 1.0
        %v1511 = vadd.f32 %v1383, 1.0
        %v1512 = vadd.f32 %v1384, 1.0
        %v1513 = vadd.f32 %v1385, 1.0
        %v1514 = vadd.f32 %v1386, 1.0
        %v1515 = vadd.f32 %v1387, 1.0
        %v1516 = vadd.f32 %v1388, 1.0
        %v1517 = vadd.f32 %v1389, 1.0
        %v1518 = vadd.f32 %v1390, 1.0
        %v1519 = vadd.f32 %v1391, 1.0
        %v1520 = vadd.f32 %v1392, 1.0
        %v1521 = vadd.f32 %v1393, 1.0
        %v1522 = vadd.f32 %v1394, 1.0
        %v1523 = vadd.f32 %v1395, 1.0
        %v1524 = vadd.f32 %v1396, 1.0
        %v1525 = vadd.f32 %v1397, 1.0
        %v1526 = vadd.f32 %v1398, 1.0
        %v1527 = vadd.f32 %v1399, 1.0
        %v1528 = vmul.f32 %v1016, %v1400
        %v1529 = vmul.f32 %v1017, %v1401
        %v1530 = vmul.f32 %v1018, %v1402
        %v1531 = vmul.f32 %v1019, %v1403
        %v1532 = vmul.f32 %v1020, %v1404
        %v1533 = vmul.f32 %v1021, %v1405
        %v1534 = vmul.f32 %v1022, %v1406
        %v1535 = vmul.f32 %v1023, %v1407
        %v1536 = vmul.f32 %v1024, %v1408
        %v1537 = vmul.f32 %v1025, %v1409
        %v1538 = vmul.f32 %v1026, %v1410
        %v1539 = vmul.f32 %v1027, %v1411
        %v1540 = vmul.f32 %v1028, %v1412
        %v1541 = vmul.f32 %v1029, %v1413
        %v1542 = vmul.f32 %v1030, %v1414
        %v1543 = vmul.f32 %v1031, %v1415
        %v1544 = vmul.f32 %v1032, %v1416
        %v1545 = vmul.f32 %v1033, %v1417
        %v1546 = vmul.f32 %v1034, %v1418
        %v1547 = vmul.f32 %v1035, %v1419
        %v1548 = vmul.f32 %v1036, %v1420
        %v1549 = vmul.f32 %v1037, %v1421
        %v1550 = vmul.f32 %v1038, %v1422
        %v1551 = vmul.f32 %v1039, %v1423
        %v1552 = vmul.f32 %v1040, %v1424
        %v1553 = vmul.f32 %v1041, %v1425
        %v1554 = vmul.f32 %v1042, %v1426
        %v1555 = vmul.f32 %v1043, %v1427
        %v1556 = vmul.f32 %v1044, %v1428
        %v1557 = vmul.f32 %v1045, %v1429
        %v1558 = vmul.f32 %v1046, %v1430
        %v1559 = vmul.f32 %v1047, %v1431
        %v1560 = vmul.f32 %v1048, %v1432
        %v1561 = vmul.f32 %v1049, %v1433
        %v1562 = vmul.f32 %v1050, %v1434
        %v1563 = vmul.f32 %v1051, %v1435
        %v1564 = vmul.f32 %v1052, %v1436
        %v1565 = vmul.f32 %v1053, %v1437
        %v1566 = vmul.f32 %v1054, %v1438
        %v1567 = vmul.f32 %v1055, %v1439
        %v1568 = vmul.f32 %v1056, %v1440
        %v1569 = vmul.f32 %v1057, %v1441
        %v1570 = vmul.f32 %v1058, %v1442
        %v1571 = vmul.f32 %v1059, %v1443
        %v1572 = vmul.f32 %v1060, %v1444
        %v1573 = vmul.f32 %v1061, %v1445
        %v1574 = vmul.f32 %v1062, %v1446
        %v1575 = vmul.f32 %v1063, %v1447
        %v1576 = vmul.f32 %v1064, %v1448
        %v1577 = vmul.f32 %v1065, %v1449
        %v1578 = vmul.f32 %v1066, %v1450
        %v1579 = vmul.f32 %v1067, %v1451
        %v1580 = vmul.f32 %v1068, %v1452
        %v1581 = vmul.f32 %v1069, %v1453
        %v1582 = vmul.f32 %v1070, %v1454
        %v1583 = vmul.f32 %v1071, %v1455
        %v1584 = vmul.f32 %v1072, %v1456
        %v1585 = vmul.f32 %v1073, %v1457
        %v1586 = vmul.f32 %v1074, %v1458
        %v1587 = vmul.f32 %v1075, %v1459
        %v1588 = vmul.f32 %v1076, %v1460
        %v1589 = vmul.f32 %v1077, %v1461
        %v1590 = vmul.f32 %v1078, %v1462
        %v1591 = vmul.f32 %v1079, %v1463
        %v1592 = vmul.f32 %v1080, %v1464
        %v1593 = vmul.f32 %v1081, %v1465
        %v1594 = vmul.f32 %v1082, %v1466
        %v1595 = vmul.f32 %v1083, %v1467
        %v1596 = vmul.f32 %v1084, %v1468
        %v1597 = vmul.f32 %v1085, %v1469
        %v1598 = vmul.f32 %v1086, %v1470
        %v1599 = vmul.f32 %v1087, %v1471
        %v1600 = vmul.f32 %v1088, %v1472
        %v1601 = vmul.f32 %v1089, %v1473
        %v1602 = vmul.f32 %v1090, %v1474
        %v1603 = vmul.f32 %v1091, %v1475
        %v1604 = vmul.f32 %v1092, %v1476
        %v1605 = vmul.f32 %v1093, %v1477
        %v1606 = vmul.f32 %v1094, %v1478
        %v1607 = vmul.f32 %v1095, %v1479
        %v1608 = vmul.f32 %v1096, %v1480
        %v1609 = vmul.f32 %v1097, %v1481
        %v1610 = vmul.f32 %v1098, %v1482
        %v1611 = vmul.f32 %v1099, %v1483
        %v1612 = vmul.f32 %v1100, %v1484
        %v1613 = vmul.f32 %v1101, %v1485
        %v1614 = vmul.f32 %v1102, %v1486
        %v1615 = vmul.f32 %v1103, %v1487
        %v1616 = vmul.f32 %v1104, %v1488
        %v1617 = vmul.f32 %v1105, %v1489
        %v1618 = vmul.f32 %v1106, %v1490
        %v1619 = vmul.f32 %v1107, %v1491
        %v1620 = vmul.f32 %v1108, %v1492
        %v1621 = vmul.f32 %v1109, %v1493
        %v1622 = vmul.f32 %v1110, %v1494
        %v1623 = vmul.f32 %v1111, %v1495
        %v1624 = vmul.f32 %v1112, %v1496
        %v1625 = vmul.f32 %v1113, %v1497
        %v1626 = vmul.f32 %v1114, %v1498
        %v1627 = vmul.f32 %v1115, %v1499
        %v1628 = vmul.f32 %v1116, %v1500
        %v1629 = vmul.f32 %v1117, %v1501
        %v1630 = vmul.f32 %v1118, %v1502
        %v1631 = vmul.f32 %v1119, %v1503
        %v1632 = vmul.f32 %v1120, %v1504
        %v1633 = vmul.f32 %v1121, %v1505
        %v1634 = vmul.f32 %v1122, %v1506
        %v1635 = vmul.f32 %v1123, %v1507
        %v1636 = vmul.f32 %v1124, %v1508
        %v1637 = vmul.f32 %v1125, %v1509
        %v1638 = vmul.f32 %v1126, %v1510
        %v1639 = vmul.f32 %v1127, %v1511
        %v1640 = vmul.f32 %v1128, %v1512
        %v1641 = vmul.f32 %v1129, %v1513
        %v1642 = vmul.f32 %v1130, %v1514
        %v1643 = vmul.f32 %v1131, %v1515
        %v1644 = vmul.f32 %v1132, %v1516
        %v1645 = vmul.f32 %v1133, %v1517
        %v1646 = vmul.f32 %v1134, %v1518
        %v1647 = vmul.f32 %v1135, %v1519
        %v1648 = vmul.f32 %v1136, %v1520
        %v1649 = vmul.f32 %v1137, %v1521
        %v1650 = vmul.f32 %v1138, %v1522
        %v1651 = vmul.f32 %v1139, %v1523
        %v1652 = vmul.f32 %v1140, %v1524
        %v1653 = vmul.f32 %v1141, %v1525
        %v1654 = vmul.f32 %v1142, %v1526
        %v1655 = vmul.f32 %v1143, %v1527
        %v1656 = vpack.c.bf16 %v1532, %v1528
        %v1657 = vpack.c.bf16 %v1533, %v1529
        %v1658 = vpack.c.bf16 %v1534, %v1530
        %v1659 = vpack.c.bf16 %v1535, %v1531
        %v1660 = vpack.c.bf16 %v1540, %v1536
        %v1661 = vpack.c.bf16 %v1541, %v1537
        %v1662 = vpack.c.bf16 %v1542, %v1538
        %v1663 = vpack.c.bf16 %v1543, %v1539
        %v1664 = vpack.c.bf16 %v1548, %v1544
        %v1665 = vpack.c.bf16 %v1549, %v1545
        %v1666 = vpack.c.bf16 %v1550, %v1546
        %v1667 = vpack.c.bf16 %v1551, %v1547
        %v1668 = vpack.c.bf16 %v1556, %v1552
        %v1669 = vpack.c.bf16 %v1557, %v1553
        %v1670 = vpack.c.bf16 %v1558, %v1554
        %v1671 = vpack.c.bf16 %v1559, %v1555
        %v1672 = vpack.c.bf16 %v1564, %v1560
        %v1673 = vpack.c.bf16 %v1565, %v1561
        %v1674 = vpack.c.bf16 %v1566, %v1562
        %v1675 = vpack.c.bf16 %v1567, %v1563
        %v1676 = vpack.c.bf16 %v1572, %v1568
        %v1677 = vpack.c.bf16 %v1573, %v1569
        %v1678 = vpack.c.bf16 %v1574, %v1570
        %v1679 = vpack.c.bf16 %v1575, %v1571
        %v1680 = vpack.c.bf16 %v1580, %v1576
        %v1681 = vpack.c.bf16 %v1581, %v1577
        %v1682 = vpack.c.bf16 %v1582, %v1578
        %v1683 = vpack.c.bf16 %v1583, %v1579
        %v1684 = vpack.c.bf16 %v1588, %v1584
        %v1685 = vpack.c.bf16 %v1589, %v1585
        %v1686 = vpack.c.bf16 %v1590, %v1586
        %v1687 = vpack.c.bf16 %v1591, %v1587
        %v1688 = vpack.c.bf16 %v1596, %v1592
        %v1689 = vpack.c.bf16 %v1597, %v1593
        %v1690 = vpack.c.bf16 %v1598, %v1594
        %v1691 = vpack.c.bf16 %v1599, %v1595
        %v1692 = vpack.c.bf16 %v1604, %v1600
        %v1693 = vpack.c.bf16 %v1605, %v1601
        %v1694 = vpack.c.bf16 %v1606, %v1602
        %v1695 = vpack.c.bf16 %v1607, %v1603
        %v1696 = vpack.c.bf16 %v1612, %v1608
        %v1697 = vpack.c.bf16 %v1613, %v1609
        %v1698 = vpack.c.bf16 %v1614, %v1610
        %v1699 = vpack.c.bf16 %v1615, %v1611
        %v1700 = vpack.c.bf16 %v1620, %v1616
        %v1701 = vpack.c.bf16 %v1621, %v1617
        %v1702 = vpack.c.bf16 %v1622, %v1618
        %v1703 = vpack.c.bf16 %v1623, %v1619
        %v1704 = vpack.c.bf16 %v1628, %v1624
        %v1705 = vpack.c.bf16 %v1629, %v1625
        %v1706 = vpack.c.bf16 %v1630, %v1626
        %v1707 = vpack.c.bf16 %v1631, %v1627
        %v1708 = vpack.c.bf16 %v1636, %v1632
        %v1709 = vpack.c.bf16 %v1637, %v1633
        %v1710 = vpack.c.bf16 %v1638, %v1634
        %v1711 = vpack.c.bf16 %v1639, %v1635
        %v1712 = vpack.c.bf16 %v1644, %v1640
        %v1713 = vpack.c.bf16 %v1645, %v1641
        %v1714 = vpack.c.bf16 %v1646, %v1642
        %v1715 = vpack.c.bf16 %v1647, %v1643
        %v1716 = vpack.c.bf16 %v1652, %v1648
        %v1717 = vpack.c.bf16 %v1653, %v1649
        %v1718 = vpack.c.bf16 %v1654, %v1650
        %v1719 = vpack.c.bf16 %v1655, %v1651
        %v1720 = vld [vmem:[#allocation8] sm:$0xf]
        %v1721 = vld [vmem:[#allocation8 + $0x4] sm:$0xf]
        %v1722 = vld [vmem:[#allocation8 + $0x8] sm:$0xf]
        %v1723 = vld [vmem:[#allocation8 + $0xc] sm:$0xf]
        %v1724 = vld [vmem:[#allocation8 + $0x10] sm:$0xf]
        %v1725 = vld [vmem:[#allocation8 + $0x14] sm:$0xf]
        %v1726 = vld [vmem:[#allocation8 + $0x18] sm:$0xf]
        %v1727 = vld [vmem:[#allocation8 + $0x1c] sm:$0xf]
        %v1728 = vld [vmem:[#allocation8 + $0x20] sm:$0xf]
        %v1729 = vld [vmem:[#allocation8 + $0x24] sm:$0xf]
        %v1730 = vld [vmem:[#allocation8 + $0x28] sm:$0xf]
        %v1731 = vld [vmem:[#allocation8 + $0x2c] sm:$0xf]
        %v1732 = vld [vmem:[#allocation8 + $0x30] sm:$0xf]
        %v1733 = vld [vmem:[#allocation8 + $0x34] sm:$0xf]
        %v1734 = vld [vmem:[#allocation8 + $0x38] sm:$0xf]
        %v1735 = vld [vmem:[#allocation8 + $0x3c] sm:$0xf]
        %v1736 = vld [vmem:[#allocation8 + $0x40] sm:$0xf]
        %v1737 = vld [vmem:[#allocation8 + $0x44] sm:$0xf]
        %v1738 = vld [vmem:[#allocation8 + $0x48] sm:$0xf]
        %v1739 = vld [vmem:[#allocation8 + $0x4c] sm:$0xf]
        %v1740 = vld [vmem:[#allocation8 + $0x50] sm:$0xf]
        %v1741 = vld [vmem:[#allocation8 + $0x54] sm:$0xf]
        %v1742 = vld [vmem:[#allocation8 + $0x58] sm:$0xf]
        %v1743 = vld [vmem:[#allocation8 + $0x5c] sm:$0xf]
        %v1744 = vld [vmem:[#allocation8 + $0x60] sm:$0xf]
        %v1745 = vld [vmem:[#allocation8 + $0x64] sm:$0xf]
        %v1746 = vld [vmem:[#allocation8 + $0x68] sm:$0xf]
        %v1747 = vld [vmem:[#allocation8 + $0x6c] sm:$0xf]
        %v1748 = vld [vmem:[#allocation8 + $0x70] sm:$0xf]
        %v1749 = vld [vmem:[#allocation8 + $0x74] sm:$0xf]
        %v1750 = vld [vmem:[#allocation8 + $0x78] sm:$0xf]
        %v1751 = vld [vmem:[#allocation8 + $0x7c] sm:$0xf]
        %v1752 = vld [vmem:[#allocation8 + $0x80] sm:$0xf]
        %v1753 = vld [vmem:[#allocation8 + $0x84] sm:$0xf]
        %v1754 = vld [vmem:[#allocation8 + $0x88] sm:$0xf]
        %v1755 = vld [vmem:[#allocation8 + $0x8c] sm:$0xf]
        %v1756 = vld [vmem:[#allocation8 + $0x90] sm:$0xf]
        %v1757 = vld [vmem:[#allocation8 + $0x94] sm:$0xf]
        %v1758 = vld [vmem:[#allocation8 + $0x98] sm:$0xf]
        %v1759 = vld [vmem:[#allocation8 + $0x9c] sm:$0xf]
        %v1760 = vld [vmem:[#allocation8 + $0xa0] sm:$0xf]
        %v1761 = vld [vmem:[#allocation8 + $0xa4] sm:$0xf]
        %v1762 = vld [vmem:[#allocation8 + $0xa8] sm:$0xf]
        %v1763 = vld [vmem:[#allocation8 + $0xac] sm:$0xf]
        %v1764 = vld [vmem:[#allocation8 + $0xb0] sm:$0xf]
        %v1765 = vld [vmem:[#allocation8 + $0xb4] sm:$0xf]
        %v1766 = vld [vmem:[#allocation8 + $0xb8] sm:$0xf]
        %v1767 = vld [vmem:[#allocation8 + $0xbc] sm:$0xf]
        %v1768 = vld [vmem:[#allocation8 + $0xc0] sm:$0xf]
        %v1769 = vld [vmem:[#allocation8 + $0xc4] sm:$0xf]
        %v1770 = vld [vmem:[#allocation8 + $0xc8] sm:$0xf]
        %v1771 = vld [vmem:[#allocation8 + $0xcc] sm:$0xf]
        %v1772 = vld [vmem:[#allocation8 + $0xd0] sm:$0xf]
        %v1773 = vld [vmem:[#allocation8 + $0xd4] sm:$0xf]
        %v1774 = vld [vmem:[#allocation8 + $0xd8] sm:$0xf]
        %v1775 = vld [vmem:[#allocation8 + $0xdc] sm:$0xf]
        %v1776 = vld [vmem:[#allocation8 + $0xe0] sm:$0xf]
        %v1777 = vld [vmem:[#allocation8 + $0xe4] sm:$0xf]
        %v1778 = vld [vmem:[#allocation8 + $0xe8] sm:$0xf]
        %v1779 = vld [vmem:[#allocation8 + $0xec] sm:$0xf]
        %v1780 = vld [vmem:[#allocation8 + $0xf0] sm:$0xf]
        %v1781 = vld [vmem:[#allocation8 + $0xf4] sm:$0xf]
        %v1782 = vld [vmem:[#allocation8 + $0xf8] sm:$0xf]
        %v1783 = vld [vmem:[#allocation8 + $0xfc] sm:$0xf]
        %v1784 = vld [vmem:[%s4] sm:$0x1]
        %v1786 = vlaneseq
        %v1787 = vshrl.u32 %v1786, 7
        %v1788 = vsub.s32 0, %v1787
        %v1789 = vrot.slane %v1784, %v1788
        %v1855 = vunpack.c.l.b16 %v1720
        %v1856 = vunpack.c.l.b16 %v1721
        %v1857 = vunpack.c.l.b16 %v1722
        %v1858 = vunpack.c.l.b16 %v1723
        %v1859 = vunpack.c.l.b16 %v1724
        %v1860 = vunpack.c.l.b16 %v1725
        %v1861 = vunpack.c.l.b16 %v1726
        %v1862 = vunpack.c.l.b16 %v1727
        %v1863 = vunpack.c.l.b16 %v1728
        %v1864 = vunpack.c.l.b16 %v1729
        %v1865 = vunpack.c.l.b16 %v1730
        %v1866 = vunpack.c.l.b16 %v1731
        %v1867 = vunpack.c.l.b16 %v1732
        %v1868 = vunpack.c.l.b16 %v1733
        %v1869 = vunpack.c.l.b16 %v1734
        %v1870 = vunpack.c.l.b16 %v1735
        %v1871 = vunpack.c.l.b16 %v1736
        %v1872 = vunpack.c.l.b16 %v1737
        %v1873 = vunpack.c.l.b16 %v1738
        %v1874 = vunpack.c.l.b16 %v1739
        %v1875 = vunpack.c.l.b16 %v1740
        %v1876 = vunpack.c.l.b16 %v1741
        %v1877 = vunpack.c.l.b16 %v1742
        %v1878 = vunpack.c.l.b16 %v1743
        %v1879 = vunpack.c.l.b16 %v1744
        %v1880 = vunpack.c.l.b16 %v1745
        %v1881 = vunpack.c.l.b16 %v1746
        %v1882 = vunpack.c.l.b16 %v1747
        %v1883 = vunpack.c.l.b16 %v1748
        %v1884 = vunpack.c.l.b16 %v1749
        %v1885 = vunpack.c.l.b16 %v1750
        %v1886 = vunpack.c.l.b16 %v1751
        %v1887 = vunpack.c.l.b16 %v1752
        %v1888 = vunpack.c.l.b16 %v1753
        %v1889 = vunpack.c.l.b16 %v1754
        %v1890 = vunpack.c.l.b16 %v1755
        %v1891 = vunpack.c.l.b16 %v1756
        %v1892 = vunpack.c.l.b16 %v1757
        %v1893 = vunpack.c.l.b16 %v1758
        %v1894 = vunpack.c.l.b16 %v1759
        %v1895 = vunpack.c.l.b16 %v1760
        %v1896 = vunpack.c.l.b16 %v1761
        %v1897 = vunpack.c.l.b16 %v1762
        %v1898 = vunpack.c.l.b16 %v1763
        %v1899 = vunpack.c.l.b16 %v1764
        %v1900 = vunpack.c.l.b16 %v1765
        %v1901 = vunpack.c.l.b16 %v1766
        %v1902 = vunpack.c.l.b16 %v1767
        %v1903 = vunpack.c.l.b16 %v1768
        %v1904 = vunpack.c.l.b16 %v1769
        %v1905 = vunpack.c.l.b16 %v1770
        %v1906 = vunpack.c.l.b16 %v1771
        %v1907 = vunpack.c.l.b16 %v1772
        %v1908 = vunpack.c.l.b16 %v1773
        %v1909 = vunpack.c.l.b16 %v1774
        %v1910 = vunpack.c.l.b16 %v1775
        %v1911 = vunpack.c.l.b16 %v1776
        %v1912 = vunpack.c.l.b16 %v1777
        %v1913 = vunpack.c.l.b16 %v1778
        %v1914 = vunpack.c.l.b16 %v1779
        %v1915 = vunpack.c.l.b16 %v1780
        %v1916 = vunpack.c.l.b16 %v1781
        %v1917 = vunpack.c.l.b16 %v1782
        %v1918 = vunpack.c.l.b16 %v1783
        %v1919 = vpack.c.b16 %v1856, %v1855
        %v1920 = vpack.c.b16 %v1858, %v1857
        %v1921 = vpack.c.b16 %v1860, %v1859
        %v1922 = vpack.c.b16 %v1862, %v1861
        %v1923 = vpack.c.b16 %v1864, %v1863
        %v1924 = vpack.c.b16 %v1866, %v1865
        %v1925 = vpack.c.b16 %v1868, %v1867
        %v1926 = vpack.c.b16 %v1870, %v1869
        %v1927 = vpack.c.b16 %v1872, %v1871
        %v1928 = vpack.c.b16 %v1874, %v1873
        %v1929 = vpack.c.b16 %v1876, %v1875
        %v1930 = vpack.c.b16 %v1878, %v1877
        %v1931 = vpack.c.b16 %v1880, %v1879
        %v1932 = vpack.c.b16 %v1882, %v1881
        %v1933 = vpack.c.b16 %v1884, %v1883
        %v1934 = vpack.c.b16 %v1886, %v1885
        %v1935 = vpack.c.b16 %v1888, %v1887
        %v1936 = vpack.c.b16 %v1890, %v1889
        %v1937 = vpack.c.b16 %v1892, %v1891
        %v1938 = vpack.c.b16 %v1894, %v1893
        %v1939 = vpack.c.b16 %v1896, %v1895
        %v1940 = vpack.c.b16 %v1898, %v1897
        %v1941 = vpack.c.b16 %v1900, %v1899
        %v1942 = vpack.c.b16 %v1902, %v1901
        %v1943 = vpack.c.b16 %v1904, %v1903
        %v1944 = vpack.c.b16 %v1906, %v1905
        %v1945 = vpack.c.b16 %v1908, %v1907
        %v1946 = vpack.c.b16 %v1910, %v1909
        %v1947 = vpack.c.b16 %v1912, %v1911
        %v1948 = vpack.c.b16 %v1914, %v1913
        %v1949 = vpack.c.b16 %v1916, %v1915
        %v1950 = vpack.c.b16 %v1918, %v1917
        %1983 = vmatprep.subr.bf16.mxu0 0
        %1984 = vmatpush1.bf16.msra.mxu0 %v1926
        %1985 = vmatprep.subr.bf16.mxu0 0
        %1986 = vmatpush1.bf16.msra.mxu0 %v1925
        %1987 = vmatprep.subr.bf16.mxu0 0
        %1988 = vmatpush1.bf16.msra.mxu0 %v1924
        %1989 = vmatprep.subr.bf16.mxu0 0
        %1990 = vmatpush1.bf16.msra.mxu0 %v1923
        %1991 = vmatprep.subr.bf16.mxu0 0
        %1992 = vmatpush1.bf16.msra.mxu0 %v1922
        %1993 = vmatprep.subr.bf16.mxu0 0
        %1994 = vmatpush1.bf16.msra.mxu0 %v1921
        %1995 = vmatprep.subr.bf16.mxu0 0
        %1996 = vmatpush1.bf16.msra.mxu0 %v1920
        %1997 = vmatprep.subr.bf16.mxu0 0
        %1998 = vmatpush1.bf16.msra.mxu0 %v1919
        %1999 = vmatprep.subr.bf16.mxu0 0
        %2000 = vmatpush2.bf16.msra.mxu0 %v1934
        %2001 = vmatprep.subr.bf16.mxu0 0
        %2002 = vmatpush2.bf16.msra.mxu0 %v1933
        %2003 = vmatprep.subr.bf16.mxu0 0
        %2004 = vmatpush2.bf16.msra.mxu0 %v1932
        %2005 = vmatprep.subr.bf16.mxu0 0
        %2006 = vmatpush2.bf16.msra.mxu0 %v1931
        %2007 = vmatprep.subr.bf16.mxu0 0
        %2008 = vmatpush2.bf16.msra.mxu0 %v1930
        %2009 = vmatprep.subr.bf16.mxu0 0
        %2010 = vmatpush2.bf16.msra.mxu0 %v1929
        %2011 = vmatprep.subr.bf16.mxu0 0
        %2012 = vmatpush2.bf16.msra.mxu0 %v1928
        %2013 = vmatprep.subr.bf16.mxu0 0
        %2014 = vmatpush2.bf16.msra.mxu0 %v1927
        %2015 = vmatprep.mubr.bf16.mxu0 %v1657
        %2016 = vmatmul.mubr.bf16.gmra.mxu0 %v1656
        %v2017 = vpop.f32.mrf.mxu0
        %v2018 = vadd.f32 %v1789, %v2017
        %v2019 = vpop.f32.mrf.mxu0
        %v2020 = vpop.f32.mrf.mxu0
        %v2021 = vadd.f32 %v1789, %v2020
        %v2022 = vpop.f32.mrf.mxu0
        %2023 = vmatprep.mubr.bf16.mxu0 %v1661
        %2024 = vmatmul.mubr.bf16.gmra.mxu0 %v1660
        %v2025 = vpop.f32.mrf.mxu0
        %v2026 = vadd.f32 %v1789, %v2025
        %v2027 = vpop.f32.mrf.mxu0
        %v2028 = vpop.f32.mrf.mxu0
        %v2029 = vadd.f32 %v1789, %v2028
        %v2030 = vpop.f32.mrf.mxu0
        %2031 = vmatprep.mubr.bf16.mxu0 %v1665
        %2032 = vmatmul.mubr.bf16.gmra.mxu0 %v1664
        %v2033 = vpop.f32.mrf.mxu0
        %v2034 = vadd.f32 %v1789, %v2033
        %v2035 = vpop.f32.mrf.mxu0
        %v2036 = vpop.f32.mrf.mxu0
        %v2037 = vadd.f32 %v1789, %v2036
        %v2038 = vpop.f32.mrf.mxu0
        %2039 = vmatprep.mubr.bf16.mxu0 %v1669
        %2040 = vmatmul.mubr.bf16.gmra.mxu0 %v1668
        %v2041 = vpop.f32.mrf.mxu0
        %v2042 = vadd.f32 %v1789, %v2041
        %v2043 = vpop.f32.mrf.mxu0
        %v2044 = vpop.f32.mrf.mxu0
        %v2045 = vadd.f32 %v1789, %v2044
        %v2046 = vpop.f32.mrf.mxu0
        %2047 = vmatprep.mubr.bf16.mxu0 %v1673
        %2048 = vmatmul.mubr.bf16.gmra.mxu0 %v1672
        %v2049 = vpop.f32.mrf.mxu0
        %v2050 = vadd.f32 %v1789, %v2049
        %v2051 = vpop.f32.mrf.mxu0
        %v2052 = vpop.f32.mrf.mxu0
        %v2053 = vadd.f32 %v1789, %v2052
        %v2054 = vpop.f32.mrf.mxu0
        %2055 = vmatprep.mubr.bf16.mxu0 %v1677
        %2056 = vmatmul.mubr.bf16.gmra.mxu0 %v1676
        %v2057 = vpop.f32.mrf.mxu0
        %v2058 = vadd.f32 %v1789, %v2057
        %v2059 = vpop.f32.mrf.mxu0
        %v2060 = vpop.f32.mrf.mxu0
        %v2061 = vadd.f32 %v1789, %v2060
        %v2062 = vpop.f32.mrf.mxu0
        %2063 = vmatprep.mubr.bf16.mxu0 %v1681
        %2064 = vmatmul.mubr.bf16.gmra.mxu0 %v1680
        %v2065 = vpop.f32.mrf.mxu0
        %v2066 = vadd.f32 %v1789, %v2065
        %v2067 = vpop.f32.mrf.mxu0
        %v2068 = vpop.f32.mrf.mxu0
        %v2069 = vadd.f32 %v1789, %v2068
        %v2070 = vpop.f32.mrf.mxu0
        %2071 = vmatprep.mubr.bf16.mxu0 %v1685
        %2072 = vmatmul.mubr.bf16.gmra.mxu0 %v1684
        %v2073 = vpop.f32.mrf.mxu0
        %v2074 = vadd.f32 %v1789, %v2073
        %v2075 = vpop.f32.mrf.mxu0
        %v2076 = vpop.f32.mrf.mxu0
        %v2077 = vadd.f32 %v1789, %v2076
        %v2078 = vpop.f32.mrf.mxu0
        %2079 = vmatprep.mubr.bf16.mxu0 %v1689
        %2080 = vmatmul.mubr.bf16.gmra.mxu0 %v1688
        %v2081 = vpop.f32.mrf.mxu0
        %v2082 = vadd.f32 %v1789, %v2081
        %v2083 = vpop.f32.mrf.mxu0
        %v2084 = vpop.f32.mrf.mxu0
        %v2085 = vadd.f32 %v1789, %v2084
        %v2086 = vpop.f32.mrf.mxu0
        %2087 = vmatprep.mubr.bf16.mxu0 %v1693
        %2088 = vmatmul.mubr.bf16.gmra.mxu0 %v1692
        %v2089 = vpop.f32.mrf.mxu0
        %v2090 = vadd.f32 %v1789, %v2089
        %v2091 = vpop.f32.mrf.mxu0
        %v2092 = vpop.f32.mrf.mxu0
        %v2093 = vadd.f32 %v1789, %v2092
        %v2094 = vpop.f32.mrf.mxu0
        %2095 = vmatprep.mubr.bf16.mxu0 %v1697
        %2096 = vmatmul.mubr.bf16.gmra.mxu0 %v1696
        %v2097 = vpop.f32.mrf.mxu0
        %v2098 = vadd.f32 %v1789, %v2097
        %v2099 = vpop.f32.mrf.mxu0
        %v2100 = vpop.f32.mrf.mxu0
        %v2101 = vadd.f32 %v1789, %v2100
        %v2102 = vpop.f32.mrf.mxu0
        %2103 = vmatprep.mubr.bf16.mxu0 %v1701
        %2104 = vmatmul.mubr.bf16.gmra.mxu0 %v1700
        %v2105 = vpop.f32.mrf.mxu0
        %v2106 = vadd.f32 %v1789, %v2105
        %v2107 = vpop.f32.mrf.mxu0
        %v2108 = vpop.f32.mrf.mxu0
        %v2109 = vadd.f32 %v1789, %v2108
        %v2110 = vpop.f32.mrf.mxu0
        %2111 = vmatprep.mubr.bf16.mxu0 %v1705
        %2112 = vmatmul.mubr.bf16.gmra.mxu0 %v1704
        %v2113 = vpop.f32.mrf.mxu0
        %v2114 = vadd.f32 %v1789, %v2113
        %v2115 = vpop.f32.mrf.mxu0
        %v2116 = vpop.f32.mrf.mxu0
        %v2117 = vadd.f32 %v1789, %v2116
        %v2118 = vpop.f32.mrf.mxu0
        %2119 = vmatprep.mubr.bf16.mxu0 %v1709
        %2120 = vmatmul.mubr.bf16.gmra.mxu0 %v1708
        %v2121 = vpop.f32.mrf.mxu0
        %v2122 = vadd.f32 %v1789, %v2121
        %v2123 = vpop.f32.mrf.mxu0
        %v2124 = vpop.f32.mrf.mxu0
        %v2125 = vadd.f32 %v1789, %v2124
        %v2126 = vpop.f32.mrf.mxu0
        %2127 = vmatprep.mubr.bf16.mxu0 %v1713
        %2128 = vmatmul.mubr.bf16.gmra.mxu0 %v1712
        %v2129 = vpop.f32.mrf.mxu0
        %v2130 = vadd.f32 %v1789, %v2129
        %v2131 = vpop.f32.mrf.mxu0
        %v2132 = vpop.f32.mrf.mxu0
        %v2133 = vadd.f32 %v1789, %v2132
        %v2134 = vpop.f32.mrf.mxu0
        %2135 = vmatprep.mubr.bf16.mxu0 %v1717
        %2136 = vmatmul.mubr.bf16.gmra.mxu0 %v1716
        %v2137 = vpop.f32.mrf.mxu0
        %v2138 = vadd.f32 %v1789, %v2137
        %v2139 = vpop.f32.mrf.mxu0
        %v2140 = vpop.f32.mrf.mxu0
        %v2141 = vadd.f32 %v1789, %v2140
        %v2142 = vpop.f32.mrf.mxu0
        %2143 = vdwg.mxu0
        %2144 = vmatprep.subr.bf16.mxu0 0
        %2145 = vmatpush1.bf16.msra.mxu0 %v1942
        %2146 = vmatprep.subr.bf16.mxu0 0
        %2147 = vmatpush1.bf16.msra.mxu0 %v1941
        %2148 = vmatprep.subr.bf16.mxu0 0
        %2149 = vmatpush1.bf16.msra.mxu0 %v1940
        %2150 = vmatprep.subr.bf16.mxu0 0
        %2151 = vmatpush1.bf16.msra.mxu0 %v1939
        %2152 = vmatprep.subr.bf16.mxu0 0
        %2153 = vmatpush1.bf16.msra.mxu0 %v1938
        %2154 = vmatprep.subr.bf16.mxu0 0
        %2155 = vmatpush1.bf16.msra.mxu0 %v1937
        %2156 = vmatprep.subr.bf16.mxu0 0
        %2157 = vmatpush1.bf16.msra.mxu0 %v1936
        %2158 = vmatprep.subr.bf16.mxu0 0
        %2159 = vmatpush1.bf16.msra.mxu0 %v1935
        %2160 = vmatprep.subr.bf16.mxu0 0
        %2161 = vmatpush2.bf16.msra.mxu0 %v1950
        %2162 = vmatprep.subr.bf16.mxu0 0
        %2163 = vmatpush2.bf16.msra.mxu0 %v1949
        %2164 = vmatprep.subr.bf16.mxu0 0
        %2165 = vmatpush2.bf16.msra.mxu0 %v1948
        %2166 = vmatprep.subr.bf16.mxu0 0
        %2167 = vmatpush2.bf16.msra.mxu0 %v1947
        %2168 = vmatprep.subr.bf16.mxu0 0
        %2169 = vmatpush2.bf16.msra.mxu0 %v1946
        %2170 = vmatprep.subr.bf16.mxu0 0
        %2171 = vmatpush2.bf16.msra.mxu0 %v1945
        %2172 = vmatprep.subr.bf16.mxu0 0
        %2173 = vmatpush2.bf16.msra.mxu0 %v1944
        %2174 = vmatprep.subr.bf16.mxu0 0
        %2175 = vmatpush2.bf16.msra.mxu0 %v1943
        %2176 = vmatprep.mubr.bf16.mxu0 %v1659
        %2177 = vmatmul.mubr.bf16.gmra.mxu0 %v1658
        %v2178 = vpop.f32.mrf.mxu0
        %v2179 = vadd.f32 %v2018, %v2178
        %v2180 = vpop.f32.mrf.mxu0
        %v2181 = vpop.f32.mrf.mxu0
        %v2182 = vadd.f32 %v2021, %v2181
        %v2183 = vpop.f32.mrf.mxu0
        %2184 = vmatprep.mubr.bf16.mxu0 %v1663
        %2185 = vmatmul.mubr.bf16.gmra.mxu0 %v1662
        %v2186 = vpop.f32.mrf.mxu0
        %v2187 = vadd.f32 %v2026, %v2186
        %v2188 = vpop.f32.mrf.mxu0
        %v2189 = vpop.f32.mrf.mxu0
        %v2190 = vadd.f32 %v2029, %v2189
        %v2191 = vpop.f32.mrf.mxu0
        %2192 = vmatprep.mubr.bf16.mxu0 %v1667
        %2193 = vmatmul.mubr.bf16.gmra.mxu0 %v1666
        %v2194 = vpop.f32.mrf.mxu0
        %v2195 = vadd.f32 %v2034, %v2194
        %v2196 = vpop.f32.mrf.mxu0
        %v2197 = vpop.f32.mrf.mxu0
        %v2198 = vadd.f32 %v2037, %v2197
        %v2199 = vpop.f32.mrf.mxu0
        %2200 = vmatprep.mubr.bf16.mxu0 %v1671
        %2201 = vmatmul.mubr.bf16.gmra.mxu0 %v1670
        %v2202 = vpop.f32.mrf.mxu0
        %v2203 = vadd.f32 %v2042, %v2202
        %v2204 = vpop.f32.mrf.mxu0
        %v2205 = vpop.f32.mrf.mxu0
        %v2206 = vadd.f32 %v2045, %v2205
        %v2207 = vpop.f32.mrf.mxu0
        %2208 = vmatprep.mubr.bf16.mxu0 %v1675
        %2209 = vmatmul.mubr.bf16.gmra.mxu0 %v1674
        %v2210 = vpop.f32.mrf.mxu0
        %v2211 = vadd.f32 %v2050, %v2210
        %v2212 = vpop.f32.mrf.mxu0
        %v2213 = vpop.f32.mrf.mxu0
        %v2214 = vadd.f32 %v2053, %v2213
        %v2215 = vpop.f32.mrf.mxu0
        %2216 = vmatprep.mubr.bf16.mxu0 %v1679
        %2217 = vmatmul.mubr.bf16.gmra.mxu0 %v1678
        %v2218 = vpop.f32.mrf.mxu0
        %v2219 = vadd.f32 %v2058, %v2218
        %v2220 = vpop.f32.mrf.mxu0
        %v2221 = vpop.f32.mrf.mxu0
        %v2222 = vadd.f32 %v2061, %v2221
        %v2223 = vpop.f32.mrf.mxu0
        %2224 = vmatprep.mubr.bf16.mxu0 %v1683
        %2225 = vmatmul.mubr.bf16.gmra.mxu0 %v1682
        %v2226 = vpop.f32.mrf.mxu0
        %v2227 = vadd.f32 %v2066, %v2226
        %v2228 = vpop.f32.mrf.mxu0
        %v2229 = vpop.f32.mrf.mxu0
        %v2230 = vadd.f32 %v2069, %v2229
        %v2231 = vpop.f32.mrf.mxu0
        %2232 = vmatprep.mubr.bf16.mxu0 %v1687
        %2233 = vmatmul.mubr.bf16.gmra.mxu0 %v1686
        %v2234 = vpop.f32.mrf.mxu0
        %v2235 = vadd.f32 %v2074, %v2234
        %v2236 = vpop.f32.mrf.mxu0
        %v2237 = vpop.f32.mrf.mxu0
        %v2238 = vadd.f32 %v2077, %v2237
        %v2239 = vpop.f32.mrf.mxu0
        %2240 = vmatprep.mubr.bf16.mxu0 %v1691
        %2241 = vmatmul.mubr.bf16.gmra.mxu0 %v1690
        %v2242 = vpop.f32.mrf.mxu0
        %v2243 = vadd.f32 %v2082, %v2242
        %v2244 = vpop.f32.mrf.mxu0
        %v2245 = vpop.f32.mrf.mxu0
        %v2246 = vadd.f32 %v2085, %v2245
        %v2247 = vpop.f32.mrf.mxu0
        %2248 = vmatprep.mubr.bf16.mxu0 %v1695
        %2249 = vmatmul.mubr.bf16.gmra.mxu0 %v1694
        %v2250 = vpop.f32.mrf.mxu0
        %v2251 = vadd.f32 %v2090, %v2250
        %v2252 = vpop.f32.mrf.mxu0
        %v2253 = vpop.f32.mrf.mxu0
        %v2254 = vadd.f32 %v2093, %v2253
        %v2255 = vpop.f32.mrf.mxu0
        %2256 = vmatprep.mubr.bf16.mxu0 %v1699
        %2257 = vmatmul.mubr.bf16.gmra.mxu0 %v1698
        %v2258 = vpop.f32.mrf.mxu0
        %v2259 = vadd.f32 %v2098, %v2258
        %v2260 = vpop.f32.mrf.mxu0
        %v2261 = vpop.f32.mrf.mxu0
        %v2262 = vadd.f32 %v2101, %v2261
        %v2263 = vpop.f32.mrf.mxu0
        %2264 = vmatprep.mubr.bf16.mxu0 %v1703
        %2265 = vmatmul.mubr.bf16.gmra.mxu0 %v1702
        %v2266 = vpop.f32.mrf.mxu0
        %v2267 = vadd.f32 %v2106, %v2266
        %v2268 = vpop.f32.mrf.mxu0
        %v2269 = vpop.f32.mrf.mxu0
        %v2270 = vadd.f32 %v2109, %v2269
        %v2271 = vpop.f32.mrf.mxu0
        %2272 = vmatprep.mubr.bf16.mxu0 %v1707
        %2273 = vmatmul.mubr.bf16.gmra.mxu0 %v1706
        %v2274 = vpop.f32.mrf.mxu0
        %v2275 = vadd.f32 %v2114, %v2274
        %v2276 = vpop.f32.mrf.mxu0
        %v2277 = vpop.f32.mrf.mxu0
        %v2278 = vadd.f32 %v2117, %v2277
        %v2279 = vpop.f32.mrf.mxu0
        %2280 = vmatprep.mubr.bf16.mxu0 %v1711
        %2281 = vmatmul.mubr.bf16.gmra.mxu0 %v1710
        %v2282 = vpop.f32.mrf.mxu0
        %v2283 = vadd.f32 %v2122, %v2282
        %v2284 = vpop.f32.mrf.mxu0
        %v2285 = vpop.f32.mrf.mxu0
        %v2286 = vadd.f32 %v2125, %v2285
        %v2287 = vpop.f32.mrf.mxu0
        %2288 = vmatprep.mubr.bf16.mxu0 %v1715
        %2289 = vmatmul.mubr.bf16.gmra.mxu0 %v1714
        %v2290 = vpop.f32.mrf.mxu0
        %v2291 = vadd.f32 %v2130, %v2290
        %v2292 = vpop.f32.mrf.mxu0
        %v2293 = vpop.f32.mrf.mxu0
        %v2294 = vadd.f32 %v2133, %v2293
        %v2295 = vpop.f32.mrf.mxu0
        %2296 = vmatprep.mubr.bf16.mxu0 %v1719
        %2297 = vmatmul.mubr.bf16.gmra.mxu0 %v1718
        %v2298 = vpop.f32.mrf.mxu0
        %v2299 = vadd.f32 %v2138, %v2298
        %v2300 = vpop.f32.mrf.mxu0
        %v2301 = vpop.f32.mrf.mxu0
        %v2302 = vadd.f32 %v2141, %v2301
        %v2303 = vpop.f32.mrf.mxu0
        %2304 = vdwg.mxu0
        %2305 = vst [vmem:[%s284] sm:$0xff] %v2179
        %2306 = vst [vmem:[%s284 + $0x8] sm:$0xff] %v2182
        %2307 = vst [vmem:[%s284 + $0x10] sm:$0xff] %v2187
        %2308 = vst [vmem:[%s284 + $0x18] sm:$0xff] %v2190
        %2309 = vst [vmem:[%s284 + $0x20] sm:$0xff] %v2195
        %2310 = vst [vmem:[%s284 + $0x28] sm:$0xff] %v2198
        %2311 = vst [vmem:[%s284 + $0x30] sm:$0xff] %v2203
        %2312 = vst [vmem:[%s284 + $0x38] sm:$0xff] %v2206
        %2313 = vst [vmem:[%s284 + $0x40] sm:$0xff] %v2211
        %2314 = vst [vmem:[%s284 + $0x48] sm:$0xff] %v2214
        %2315 = vst [vmem:[%s284 + $0x50] sm:$0xff] %v2219
        %2316 = vst [vmem:[%s284 + $0x58] sm:$0xff] %v2222
        %2317 = vst [vmem:[%s284 + $0x60] sm:$0xff] %v2227
        %2318 = vst [vmem:[%s284 + $0x68] sm:$0xff] %v2230
        %2319 = vst [vmem:[%s284 + $0x70] sm:$0xff] %v2235
        %2320 = vst [vmem:[%s284 + $0x78] sm:$0xff] %v2238
        %2321 = vst [vmem:[%s284 + $0x80] sm:$0xff] %v2243
        %2322 = vst [vmem:[%s284 + $0x88] sm:$0xff] %v2246
        %2323 = vst [vmem:[%s284 + $0x90] sm:$0xff] %v2251
        %2324 = vst [vmem:[%s284 + $0x98] sm:$0xff] %v2254
        %2325 = vst [vmem:[%s284 + $0xa0] sm:$0xff] %v2259
        %2326 = vst [vmem:[%s284 + $0xa8] sm:$0xff] %v2262
        %2327 = vst [vmem:[%s284 + $0xb0] sm:$0xff] %v2267
        %2328 = vst [vmem:[%s284 + $0xb8] sm:$0xff] %v2270
        %2329 = vst [vmem:[%s284 + $0xc0] sm:$0xff] %v2275
        %2330 = vst [vmem:[%s284 + $0xc8] sm:$0xff] %v2278
        %2331 = vst [vmem:[%s284 + $0xd0] sm:$0xff] %v2283
        %2332 = vst [vmem:[%s284 + $0xd8] sm:$0xff] %v2286
        %2333 = vst [vmem:[%s284 + $0xe0] sm:$0xff] %v2291
        %2334 = vst [vmem:[%s284 + $0xe8] sm:$0xff] %v2294
        %2335 = vst [vmem:[%s284 + $0xf0] sm:$0xff] %v2299
        %2336 = vst [vmem:[%s284 + $0xf8] sm:$0xff] %v2302
        %s2337 = sand.u32 %s142, 1
        %s2338 = scalar_lea.sflag [#allocation4], %s2337
        %s2339 = sand.u32 %s142, 1
        %s2340 = smul.addr %s2339, 256
        %s2341 = scalar_lea.vmem [#allocation10], %s2340
        // Predicated region
        $region57: #{tpu_custom_call.1} parent=39 // pred_check
          %p2342 = pneg %p152
        $region58: #{tpu_custom_call.1} parent=39 // pred_check_branch
          %2344 = sbr.rel (%p2342) target = $region60
        $region59: #{tpu_custom_call.1} parent=39 // pred_region
          %s2345 = smul.u32 32, %s24
          %s2347 = ssub.s32 4096, 4096
          %2348 = vsyncadd %s2338, %s2347
          %s2349 = smul.addr %s2345, 128
          %s2350 = scalar_lea.hbm %s5, %s2349
          %s2351 = sshll.u32 %s2341, 4
          %s2352 = int_to_ptr.vmem [resolvable:$true] %s2351
          %2357 = dma.vmem_to_hbm [thread:$0]  %s2352, 4096, %s2350, %s2338, 128, 128, 8
        $region60: #{tpu_custom_call.1} parent=39 // pred_fallthru
          _
      $region40: #{tpu_custom_call.1} parent=5 // pred_fallthru
        _
      %p2358 = scmp.le.s32.totalorder 2, %s19
      // Predicated region
      $region61: #{tpu_custom_call.1} parent=5 // pred_check
        %p2359 = pneg %p2358
      $region62: #{tpu_custom_call.1} parent=5 // pred_check_branch
        %2361 = sbr.rel (%p2359) target = $region64
      $region63: #{tpu_custom_call.1} parent=5 // pred_region
        %s2362 = ssub.s32 %s19, 2
        // Predicated region
        $region65: #{tpu_custom_call.1} parent=63 // pred_check
          %p2363 = pneg %p158
        $region66: #{tpu_custom_call.1} parent=63 // pred_check_branch
          %2365 = sbr.rel (%p2363) target = $region68
        $region67: #{tpu_custom_call.1} parent=63 // pred_region
          %s2366 = sand.u32 %s143, 1
          %s2367 = scalar_lea.sflag [#allocation4], %s2366
          %s2368 = sand.u32 %s143, 1
          %s2369 = smul.addr %s2368, 256
          %s2370 = scalar_lea.vmem [#allocation10], %s2369
          %2371 = dma.done %s2367, 4096
        $region68: #{tpu_custom_call.1} parent=63 // pred_fallthru
          _
      $region64: #{tpu_custom_call.1} parent=5 // pred_fallthru
        _
    $region6: #{tpu_custom_call.1} parent=1 // loop_footer
      %s23 = sadd.s32 1, %s19
    $region7: #{tpu_custom_call.1} parent=1 // loop_footer_branch
      %18 = sbr.rel target = $region3
    $region8: #{tpu_custom_call.1} parent=1 // loop_exit
      _
    %2372 = vsyncpa [#allocation3], 1
    %s2373 = scalar_lea.sflag [#allocation3], 1
    %2374 = vsyncpa %s2373, 1
    %2375 = vsyncpa [#allocation6], 1
    %2376 = vsyncpa [#allocation9], 1
    %2377 = vsyncpa [#allocation4], 1
    %s2378 = scalar_lea.sflag [#allocation4], 1
    %2379 = vsyncpa %s2378, 1

</llo_original>
